<compile_context>
chip_gen: v5e
topology: v5e:2x2
jax: 0.10.0
libtpu: 0.0.40
codegen_flags: <defaults>
</compile_context>

<pallas_src>
import jax
import jax.numpy as jnp
from jax.experimental import pallas as pl
from jax.experimental.pallas import tpu as pltpu


_KERNEL_SIZE = 5


# --------------------------- in-kernel building blocks ---------------------------

def _conv_rows_tanh(a2, t_ref, b_ref):
    """Valid conv (stride 1) + bias + tanh over a batched 2-D activation slab.

    a2    : (R_in, W*IC) f32 — B_TILE samples stacked along rows; sample b occupies
            rows [b*rows_per_sample, (b+1)*rows_per_sample).
    t_ref : (K, W*IC, OW*OC) bf16 Toeplitz-packed conv weights (one slab per kh).
    b_ref : (1, OW*OC)  f32 bias tiled over ow.
    Returns (R_in - K + 1, OW*OC) f32.  Output rows whose K-row window crosses a
    sample boundary are junk; the following row-pool / row-select matmul drops them.
    """
    K = t_ref.shape[0]
    R = a2.shape[0] - K + 1
    a_bf = a2.astype(jnp.bfloat16)          # single f32->bf16 cast per conv
    # Bias-initialized accumulator; plain linear acc chain (MRB accumulation on v7x).
    acc = b_ref[...] + jnp.dot(a_bf[0:R, :], t_ref[0],
                               preferred_element_type=jnp.float32)
    for kh in range(1, K):
        acc = acc + jnp.dot(a_bf[kh:kh + R, :], t_ref[kh],
                            preferred_element_type=jnp.float32)
    return jnp.tanh(acc)


def _rowcol_pool(y, p_ref, q_ref):
    """2x2 / stride-2 avg pool (plus junk-row drop) as two bf16 matmuls: P @ y @ Q."""
    t = jnp.dot(p_ref[...], y.astype(jnp.bfloat16),
                preferred_element_type=jnp.float32)
    return jnp.dot(t.astype(jnp.bfloat16), q_ref[...],
                   preferred_element_type=jnp.float32)


def _fc_tanh(a, w_ref, b_ref):
    z = jnp.dot(a.astype(jnp.bfloat16), w_ref[...],
                preferred_element_type=jnp.float32)
    return jnp.tanh(z + b_ref[...])


def _lenet_kernel(x_ref, t1, bc1, p1, q1, t3, bc3, p3, q3, t5, bc5, s5,
                  wf1, bf1, wf2, bf2, o_ref):
    a = x_ref[...]                           # (B*32, 96) f32 — B_TILE samples
    y = _conv_rows_tanh(a, t1, bc1)          # (B*32-4, 168)
    y = _rowcol_pool(y, p1, q1)              # (B*14, 84)
    y = _conv_rows_tanh(y, t3, bc3)          # (B*14-4, 160)
    y = _rowcol_pool(y, p3, q3)              # (B*5, 80)
    y = _conv_rows_tanh(y, t5, bc5)          # (B*5-4, 120)
    feat = jnp.dot(s5[...], y.astype(jnp.bfloat16),      # (B, 120) valid-row select
                   preferred_element_type=jnp.float32)
    h = _fc_tanh(feat, wf1, bf1)             # (B, 64)
    # TODO(synk): Dropout(p=0.5) is identity in eval mode; training-mode mask not implemented.
    o_ref[...] = _fc_tanh(h, wf2, bf2)       # (B, classes)


# ------------------------------ pallas_call wrapper -------------------------------

_PACK_ORDER = ("t1", "bc1", "p1", "q1", "t3", "bc3", "p3", "q3",
               "t5", "bc5", "s5", "wf1", "bf1", "wf2", "bf2")


def _full_spec(arr):
    nd = arr.ndim

    def idx_map(b):
        return (0,) * nd

    return pl.BlockSpec(arr.shape, idx_map)


def god_model_forward(x_nchw, packed):
    """Forward pass of GodModelSelf (eval mode), fused into one batched Pallas kernel."""
    N, C, H, W = x_nchw.shape
    classes = packed["bf2"].shape[-1]
    b_tile = packed["s5"].shape[0]           # batch tile baked into the pool/select mats

    # Layout plumbing in the wrapper: NCHW -> NHWC -> (N, H, W*C) -> (N*H, W*C).
    x3 = jnp.transpose(x_nchw, (0, 2, 3, 1)).astype(jnp.float32).reshape(N, H, W * C)
    pad = (-N) % b_tile
    if pad:
        x3 = jnp.concatenate([x3, jnp.zeros((pad, H, W * C), jnp.float32)], axis=0)
    n_total = N + pad
    n_steps = n_total // b_tile
    x2d = x3.reshape(n_total * H, W * C)

    weights = [packed[k] for k in _PACK_ORDER]
    in_specs = [pl.BlockSpec((b_tile * H, W * C), lambda b: (b, 0))]
    in_specs += [_full_spec(wgt) for wgt in weights]

    out = pl.pallas_call(
        _lenet_kernel,
        out_shape=jax.ShapeDtypeStruct((n_steps, b_tile, classes), jnp.float32),
        grid=(n_steps,),
        in_specs=in_specs,
        out_specs=pl.BlockSpec((None, b_tile, classes), lambda b: (b, 0, 0)),
        compiler_params=pltpu.CompilerParams(
            dimension_semantics=("parallel",)),   # v7x: the two TCs split the grid steps
    )(x2d, *weights)
    return out.reshape(n_total, classes)[:N]


# ------------------------- one-time weight pre-packing ----------------------------

def _conv_to_toeplitz(w_pt, b, width, dtype=jnp.bfloat16):
    """Pack a PyTorch conv weight (OC, IC, K, K) into per-kh Toeplitz matmul slabs.

    T[kh] has shape (width*IC, OW*OC) so that, over a 2-D activation (rows, width*IC),
        out[r, ow*OC + oc] = sum_kh  a[r + kh, :] @ T[kh]
    reproduces the valid, stride-1 convolution for rows that stay within one sample.
    """
    OC, IC, K, _ = w_pt.shape
    OW = width - K + 1
    w_k = jnp.transpose(w_pt, (2, 3, 1, 0)).astype(jnp.float32)        # (Kh, Kw, IC, OC)
    wi = jnp.arange(width)[:, None, None]
    ow = jnp.arange(OW)[None, :, None]
    kw = jnp.arange(K)[None, None, :]
    sel = (wi == ow + kw).astype(jnp.float32)                           # (width, OW, Kw)
    T = jnp.einsum("wok,hkcd->hwcod", sel, w_k)                         # (Kh, width, IC, OW, OC)
    T = T.reshape(K, width * IC, OW * OC).astype(dtype)
    brow = jnp.tile(b.reshape(1, OC).astype(jnp.float32), (1, OW))      # (1, OW*OC)
    return T, brow


def _row_pool_select(b_tile, rows_per_sample, oh_valid, pool):
    """Block-structured row matrix over the full-slab conv output.

    The conv output has b_tile*rows_per_sample - (K-1) rows; sample b's valid output
    row r lives at row b*rows_per_sample + r (r < oh_valid).  The returned matrix
    (a) drops junk / cross-sample rows and (b) if `pool`, 2:1-averages row pairs.
    """
    K = _KERNEL_SIZE
    cols = b_tile * rows_per_sample - (K - 1)
    out_per = oh_valid // 2 if pool else oh_valid
    r = jnp.arange(b_tile * out_per)
    b_of, j = r // out_per, r % out_per
    col = jnp.arange(cols)[None, :]
    if pool:
        c0 = (b_of * rows_per_sample + 2 * j)[:, None]
        m = 0.5 * ((col == c0) | (col == c0 + 1)).astype(jnp.float32)
    else:
        c0 = (b_of * rows_per_sample + j)[:, None]
        m = (col == c0).astype(jnp.float32)
    return m


def _col_pool(width, channels):
    """2:1 column pool over the (h, w*C + c) lane layout, as a (W*C, (W//2)*C) matrix."""
    ow = width // 2
    wi = jnp.arange(width)[:, None]
    ji = jnp.arange(ow)[None, :]
    colsel = ((wi == 2 * ji) | (wi == 2 * ji + 1)).astype(jnp.float32)   # (W, OW)
    q = 0.5 * jnp.einsum("wj,cd->wcjd", colsel,
                         jnp.eye(channels, dtype=jnp.float32))
    return q.reshape(width * channels, ow * channels)


def pack_params(params, image_size, b_tile):
    """One-time conversion of PyTorch-layout params into kernel-ready slabs."""
    k = _KERNEL_SIZE
    s1 = image_size           # 32
    c1 = s1 - k + 1           # 28
    s2 = c1 // 2              # 14
    c3 = s2 - k + 1           # 10
    s4 = c3 // 2              # 5

    t1, bc1 = _conv_to_toeplitz(params["c1_w"], params["c1_b"], s1)
    t3, bc3 = _conv_to_toeplitz(params["c3_w"], params["c3_b"], s2)
    t5, bc5 = _conv_to_toeplitz(params["c5_w"], params["c5_b"], s4)
    oc1 = params["c1_w"].shape[0]
    oc3 = params["c3_w"].shape[0]

    bf16 = jnp.bfloat16
    return {
        "t1": t1, "bc1": bc1,
        "p1": _row_pool_select(b_tile, s1, c1, pool=True).astype(bf16),
        "q1": _col_pool(c1, oc1).astype(bf16),
        "t3": t3, "bc3": bc3,
        "p3": _row_pool_select(b_tile, s2, c3, pool=True).astype(bf16),
        "q3": _col_pool(c3, oc3).astype(bf16),
        "t5": t5, "bc5": bc5,
        "s5": _row_pool_select(b_tile, s4, 1, pool=False).astype(bf16),
        # fc weights pre-transposed once to (in, out); bf16 for single-pass MXU.
        "wf1": params["fc1_w"].T.astype(bf16),
        "bf1": params["fc1_b"].reshape(1, -1).astype(jnp.float32),
        "wf2": params["fc2_w"].T.astype(bf16),
        "bf2": params["fc2_b"].reshape(1, -1).astype(jnp.float32),
    }


# --------------------------------- reference ---------------------------------------

def reference_forward(x_nchw, params):
    """Pure-JAX (f32) replica of the PyTorch module, for a numerical cross-check."""
    def conv(x, w, b):
        y = jax.lax.conv_general_dilated(x, w, (1, 1), "VALID",
                                         dimension_numbers=("NCHW", "OIHW", "NCHW"))
        return jnp.tanh(y + b[None, :, None, None])

    def pool(x):
        n, c, h, w = x.shape
        return x.reshape(n, c, h // 2, 2, w // 2, 2).mean(axis=(3, 5))

    f = conv(x_nchw, params["c1_w"], params["c1_b"])
    f = pool(f)
    f = conv(f, params["c3_w"], params["c3_b"])
    f = pool(f)
    f = conv(f, params["c5_w"], params["c5_b"])
    feat = f.reshape(f.shape[0], -1)
    h = jnp.tanh(feat @ params["fc1_w"].T + params["fc1_b"])
    return jnp.tanh(h @ params["fc2_w"].T + params["fc2_b"])


# ------------------------------ parameter init --------------------------------------

def init_params(key, hidden_dim=64, classes=2):
    def uinit(k, shape, fan_in):
        bound = 1.0 / (fan_in ** 0.5)
        return jax.random.uniform(k, shape, jnp.float32, -bound, bound)

    ks = jax.random.split(key, 10)
    return {
        "c1_w": uinit(ks[0], (6, 3, 5, 5), 3 * 25),
        "c1_b": uinit(ks[1], (6,), 3 * 25),
        "c3_w": uinit(ks[2], (16, 6, 5, 5), 6 * 25),
        "c3_b": uinit(ks[3], (16,), 6 * 25),
        "c5_w": uinit(ks[4], (120, 16, 5, 5), 16 * 25),
        "c5_b": uinit(ks[5], (120,), 16 * 25),
        "fc1_w": uinit(ks[6], (hidden_dim, 120), 120),
        "fc1_b": uinit(ks[7], (hidden_dim,), 120),
        "fc2_w": uinit(ks[8], (classes, hidden_dim), hidden_dim),
        "fc2_b": uinit(ks[9], (classes,), hidden_dim),
    }


# ------------------------------------ main -------------------------------------------

if __name__ == "__main__":
    key = jax.random.PRNGKey(0)
    k_x, k_p = jax.random.split(key)

    # Classic LeNet sizing (image_size=32 => c5 output is 1x1).  batch=8 with
    # B_TILE=4 gives grid=(2,): ~124-row conv matmuls and both v7x TCs kept busy.
    batch, image_size, b_tile = 8, 32, 4
    x = jax.random.normal(k_x, (batch, 3, image_size, image_size), jnp.float32)  # NCHW
    params = init_params(k_p, hidden_dim=64, classes=2)
    packed = pack_params(params, image_size, b_tile)   # one-time weight re-layout

    fwd = jax.jit(god_model_forward)
    out = jax.block_until_ready(fwd(x, packed))

    ref = jax.block_until_ready(reference_forward(x, params))
    assert out.shape == (batch, 2), out.shape
    assert bool(jnp.all(jnp.isfinite(out)))
    max_err = float(jnp.max(jnp.abs(out - ref)))
    assert max_err < 5e-2, f"mismatch vs f32 reference: {max_err}"
    print("KERNEL_OK")
</pallas_src>

<mosaic_0001>
module attributes {stable_mosaic.version = 11 : i64} {
  func.func @_lenet_kernel(%arg0: i32, %arg1: memref<128x96xf32, #tpu.memory_space<vmem>>, %arg2: memref<5x96x168xbf16, #tpu.memory_space<vmem>>, %arg3: memref<1x168xf32, #tpu.memory_space<vmem>>, %arg4: memref<56x124xbf16, #tpu.memory_space<vmem>>, %arg5: memref<168x84xbf16, #tpu.memory_space<vmem>>, %arg6: memref<5x84x160xbf16, #tpu.memory_space<vmem>>, %arg7: memref<1x160xf32, #tpu.memory_space<vmem>>, %arg8: memref<20x52xbf16, #tpu.memory_space<vmem>>, %arg9: memref<160x80xbf16, #tpu.memory_space<vmem>>, %arg10: memref<5x80x120xbf16, #tpu.memory_space<vmem>>, %arg11: memref<1x120xf32, #tpu.memory_space<vmem>>, %arg12: memref<4x16xbf16, #tpu.memory_space<vmem>>, %arg13: memref<120x64xbf16, #tpu.memory_space<vmem>>, %arg14: memref<1x64xf32, #tpu.memory_space<vmem>>, %arg15: memref<64x2xbf16, #tpu.memory_space<vmem>>, %arg16: memref<1x2xf32, #tpu.memory_space<vmem>>, %arg17: memref<1x4x2xf32, #tpu.memory_space<vmem>>) attributes {dimension_semantics = [#tpu.dimension_semantics<parallel>], iteration_bounds = array<i64: 2>, scalar_prefetch = 0 : i64, scratch_operands = 0 : i64, tpu.core_type = #tpu.core_type<tc>, window_params = [{transform_indices = @transform_0, window_bounds = array<i64: 128, 96>}, {pipeline_mode = #tpu.pipeline_mode<synchronous>, transform_indices = @transform_1, window_bounds = array<i64: 5, 96, 168>}, {pipeline_mode = #tpu.pipeline_mode<synchronous>, transform_indices = @transform_2, window_bounds = array<i64: 1, 168>}, {pipeline_mode = #tpu.pipeline_mode<synchronous>, transform_indices = @transform_3, window_bounds = array<i64: 56, 124>}, {pipeline_mode = #tpu.pipeline_mode<synchronous>, transform_indices = @transform_4, window_bounds = array<i64: 168, 84>}, {pipeline_mode = #tpu.pipeline_mode<synchronous>, transform_indices = @transform_5, window_bounds = array<i64: 5, 84, 160>}, {pipeline_mode = #tpu.pipeline_mode<synchronous>, transform_indices = @transform_6, window_bounds = array<i64: 1, 160>}, {pipeline_mode = #tpu.pipeline_mode<synchronous>, transform_indices = @transform_7, window_bounds = array<i64: 20, 52>}, {pipeline_mode = #tpu.pipeline_mode<synchronous>, transform_indices = @transform_8, window_bounds = array<i64: 160, 80>}, {pipeline_mode = #tpu.pipeline_mode<synchronous>, transform_indices = @transform_9, window_bounds = array<i64: 5, 80, 120>}, {pipeline_mode = #tpu.pipeline_mode<synchronous>, transform_indices = @transform_10, window_bounds = array<i64: 1, 120>}, {pipeline_mode = #tpu.pipeline_mode<synchronous>, transform_indices = @transform_11, window_bounds = array<i64: 4, 16>}, {pipeline_mode = #tpu.pipeline_mode<synchronous>, transform_indices = @transform_12, window_bounds = array<i64: 120, 64>}, {pipeline_mode = #tpu.pipeline_mode<synchronous>, transform_indices = @transform_13, window_bounds = array<i64: 1, 64>}, {pipeline_mode = #tpu.pipeline_mode<synchronous>, transform_indices = @transform_14, window_bounds = array<i64: 64, 2>}, {pipeline_mode = #tpu.pipeline_mode<synchronous>, transform_indices = @transform_15, window_bounds = array<i64: 1, 2>}, {transform_indices = @transform_16, window_bounds = array<i64: 1, 4, 2>}]} {
    %c0 = arith.constant 0 : index
    %c0_0 = arith.constant 0 : index
    %0 = vector.load %arg1[%c0, %c0_0] : memref<128x96xf32, #tpu.memory_space<vmem>>, vector<128x96xf32>
    %1 = arith.truncf %0 : vector<128x96xf32> to vector<128x96xbf16>
    %c0_1 = arith.constant 0 : index
    %c0_2 = arith.constant 0 : index
    %2 = vector.load %arg3[%c0_1, %c0_2] : memref<1x168xf32, #tpu.memory_space<vmem>>, vector<1x168xf32>
    %3 = vector.extract_strided_slice %1 {offsets = [0, 0], sizes = [124, 96], strides = [1, 1]} : vector<128x96xbf16> to vector<124x96xbf16>
    %c0_3 = arith.constant 0 : index
    %c0_4 = arith.constant 0 : index
    %c0_5 = arith.constant 0 : index
    %4 = vector.load %arg2[%c0_3, %c0_4, %c0_5] : memref<5x96x168xbf16, #tpu.memory_space<vmem>>, vector<1x96x168xbf16>
    %5 = vector.shape_cast %4 : vector<1x96x168xbf16> to vector<96x168xbf16>
    %cst = arith.constant dense<0.000000e+00> : vector<124x168xf32>
    %6 = tpu.matmul %3, %5, %cst {dimension_numbers = #tpu.dot_dimension_numbers<[1], [0], [0], [1], [0, 0, 1, 1], [], []>} : vector<124x96xbf16>, vector<96x168xbf16>, vector<124x168xf32> -> vector<124x168xf32>
    %7 = vector.broadcast %2 : vector<1x168xf32> to vector<124x168xf32>
    %8 = arith.addf %7, %6 : vector<124x168xf32>
    %9 = vector.extract_strided_slice %1 {offsets = [1, 0], sizes = [124, 96], strides = [1, 1]} : vector<128x96xbf16> to vector<124x96xbf16>
    %c1 = arith.constant 1 : index
    %c0_6 = arith.constant 0 : index
    %c0_7 = arith.constant 0 : index
    %10 = vector.load %arg2[%c1, %c0_6, %c0_7] : memref<5x96x168xbf16, #tpu.memory_space<vmem>>, vector<1x96x168xbf16>
    %11 = vector.shape_cast %10 : vector<1x96x168xbf16> to vector<96x168xbf16>
    %cst_8 = arith.constant dense<0.000000e+00> : vector<124x168xf32>
    %12 = tpu.matmul %9, %11, %cst_8 {dimension_numbers = #tpu.dot_dimension_numbers<[1], [0], [0], [1], [0, 0, 1, 1], [], []>} : vector<124x96xbf16>, vector<96x168xbf16>, vector<124x168xf32> -> vector<124x168xf32>
    %13 = arith.addf %8, %12 : vector<124x168xf32>
    %14 = vector.extract_strided_slice %1 {offsets = [2, 0], sizes = [124, 96], strides = [1, 1]} : vector<128x96xbf16> to vector<124x96xbf16>
    %c2 = arith.constant 2 : index
    %c0_9 = arith.constant 0 : index
    %c0_10 = arith.constant 0 : index
    %15 = vector.load %arg2[%c2, %c0_9, %c0_10] : memref<5x96x168xbf16, #tpu.memory_space<vmem>>, vector<1x96x168xbf16>
    %16 = vector.shape_cast %15 : vector<1x96x168xbf16> to vector<96x168xbf16>
    %cst_11 = arith.constant dense<0.000000e+00> : vector<124x168xf32>
    %17 = tpu.matmul %14, %16, %cst_11 {dimension_numbers = #tpu.dot_dimension_numbers<[1], [0], [0], [1], [0, 0, 1, 1], [], []>} : vector<124x96xbf16>, vector<96x168xbf16>, vector<124x168xf32> -> vector<124x168xf32>
    %18 = arith.addf %13, %17 : vector<124x168xf32>
    %19 = vector.extract_strided_slice %1 {offsets = [3, 0], sizes = [124, 96], strides = [1, 1]} : vector<128x96xbf16> to vector<124x96xbf16>
    %c3 = arith.constant 3 : index
    %c0_12 = arith.constant 0 : index
    %c0_13 = arith.constant 0 : index
    %20 = vector.load %arg2[%c3, %c0_12, %c0_13] : memref<5x96x168xbf16, #tpu.memory_space<vmem>>, vector<1x96x168xbf16>
    %21 = vector.shape_cast %20 : vector<1x96x168xbf16> to vector<96x168xbf16>
    %cst_14 = arith.constant dense<0.000000e+00> : vector<124x168xf32>
    %22 = tpu.matmul %19, %21, %cst_14 {dimension_numbers = #tpu.dot_dimension_numbers<[1], [0], [0], [1], [0, 0, 1, 1], [], []>} : vector<124x96xbf16>, vector<96x168xbf16>, vector<124x168xf32> -> vector<124x168xf32>
    %23 = arith.addf %18, %22 : vector<124x168xf32>
    %24 = vector.extract_strided_slice %1 {offsets = [4, 0], sizes = [124, 96], strides = [1, 1]} : vector<128x96xbf16> to vector<124x96xbf16>
    %c4 = arith.constant 4 : index
    %c0_15 = arith.constant 0 : index
    %c0_16 = arith.constant 0 : index
    %25 = vector.load %arg2[%c4, %c0_15, %c0_16] : memref<5x96x168xbf16, #tpu.memory_space<vmem>>, vector<1x96x168xbf16>
    %26 = vector.shape_cast %25 : vector<1x96x168xbf16> to vector<96x168xbf16>
    %cst_17 = arith.constant dense<0.000000e+00> : vector<124x168xf32>
    %27 = tpu.matmul %24, %26, %cst_17 {dimension_numbers = #tpu.dot_dimension_numbers<[1], [0], [0], [1], [0, 0, 1, 1], [], []>} : vector<124x96xbf16>, vector<96x168xbf16>, vector<124x168xf32> -> vector<124x168xf32>
    %28 = arith.addf %23, %27 : vector<124x168xf32>
    %29 = math.tanh %28 : vector<124x168xf32>
    %c0_18 = arith.constant 0 : index
    %c0_19 = arith.constant 0 : index
    %30 = vector.load %arg4[%c0_18, %c0_19] : memref<56x124xbf16, #tpu.memory_space<vmem>>, vector<56x124xbf16>
    %31 = arith.truncf %29 : vector<124x168xf32> to vector<124x168xbf16>
    %cst_20 = arith.constant dense<0.000000e+00> : vector<56x168xf32>
    %32 = tpu.matmul %30, %31, %cst_20 {dimension_numbers = #tpu.dot_dimension_numbers<[1], [0], [0], [1], [0, 0, 1, 1], [], []>} : vector<56x124xbf16>, vector<124x168xbf16>, vector<56x168xf32> -> vector<56x168xf32>
    %33 = arith.truncf %32 : vector<56x168xf32> to vector<56x168xbf16>
    %c0_21 = arith.constant 0 : index
    %c0_22 = arith.constant 0 : index
    %34 = vector.load %arg5[%c0_21, %c0_22] : memref<168x84xbf16, #tpu.memory_space<vmem>>, vector<168x84xbf16>
    %cst_23 = arith.constant dense<0.000000e+00> : vector<56x84xf32>
    %35 = tpu.matmul %33, %34, %cst_23 {dimension_numbers = #tpu.dot_dimension_numbers<[1], [0], [0], [1], [0, 0, 1, 1], [], []>} : vector<56x168xbf16>, vector<168x84xbf16>, vector<56x84xf32> -> vector<56x84xf32>
    %36 = arith.truncf %35 : vector<56x84xf32> to vector<56x84xbf16>
    %c0_24 = arith.constant 0 : index
    %c0_25 = arith.constant 0 : index
    %37 = vector.load %arg7[%c0_24, %c0_25] : memref<1x160xf32, #tpu.memory_space<vmem>>, vector<1x160xf32>
    %38 = vector.extract_strided_slice %36 {offsets = [0, 0], sizes = [52, 84], strides = [1, 1]} : vector<56x84xbf16> to vector<52x84xbf16>
    %c0_26 = arith.constant 0 : index
    %c0_27 = arith.constant 0 : index
    %c0_28 = arith.constant 0 : index
    %39 = vector.load %arg6[%c0_26, %c0_27, %c0_28] : memref<5x84x160xbf16, #tpu.memory_space<vmem>>, vector<1x84x160xbf16>
    %40 = vector.shape_cast %39 : vector<1x84x160xbf16> to vector<84x160xbf16>
    %cst_29 = arith.constant dense<0.000000e+00> : vector<52x160xf32>
    %41 = tpu.matmul %38, %40, %cst_29 {dimension_numbers = #tpu.dot_dimension_numbers<[1], [0], [0], [1], [0, 0, 1, 1], [], []>} : vector<52x84xbf16>, vector<84x160xbf16>, vector<52x160xf32> -> vector<52x160xf32>
    %42 = vector.broadcast %37 : vector<1x160xf32> to vector<52x160xf32>
    %43 = arith.addf %42, %41 : vector<52x160xf32>
    %44 = vector.extract_strided_slice %36 {offsets = [1, 0], sizes = [52, 84], strides = [1, 1]} : vector<56x84xbf16> to vector<52x84xbf16>
    %c1_30 = arith.constant 1 : index
    %c0_31 = arith.constant 0 : index
    %c0_32 = arith.constant 0 : index
    %45 = vector.load %arg6[%c1_30, %c0_31, %c0_32] : memref<5x84x160xbf16, #tpu.memory_space<vmem>>, vector<1x84x160xbf16>
    %46 = vector.shape_cast %45 : vector<1x84x160xbf16> to vector<84x160xbf16>
    %cst_33 = arith.constant dense<0.000000e+00> : vector<52x160xf32>
    %47 = tpu.matmul %44, %46, %cst_33 {dimension_numbers = #tpu.dot_dimension_numbers<[1], [0], [0], [1], [0, 0, 1, 1], [], []>} : vector<52x84xbf16>, vector<84x160xbf16>, vector<52x160xf32> -> vector<52x160xf32>
    %48 = arith.addf %43, %47 : vector<52x160xf32>
    %49 = vector.extract_strided_slice %36 {offsets = [2, 0], sizes = [52, 84], strides = [1, 1]} : vector<56x84xbf16> to vector<52x84xbf16>
    %c2_34 = arith.constant 2 : index
    %c0_35 = arith.constant 0 : index
    %c0_36 = arith.constant 0 : index
    %50 = vector.load %arg6[%c2_34, %c0_35, %c0_36] : memref<5x84x160xbf16, #tpu.memory_space<vmem>>, vector<1x84x160xbf16>
    %51 = vector.shape_cast %50 : vector<1x84x160xbf16> to vector<84x160xbf16>
    %cst_37 = arith.constant dense<0.000000e+00> : vector<52x160xf32>
    %52 = tpu.matmul %49, %51, %cst_37 {dimension_numbers = #tpu.dot_dimension_numbers<[1], [0], [0], [1], [0, 0, 1, 1], [], []>} : vector<52x84xbf16>, vector<84x160xbf16>, vector<52x160xf32> -> vector<52x160xf32>
    %53 = arith.addf %48, %52 : vector<52x160xf32>
    %54 = vector.extract_strided_slice %36 {offsets = [3, 0], sizes = [52, 84], strides = [1, 1]} : vector<56x84xbf16> to vector<52x84xbf16>
    %c3_38 = arith.constant 3 : index
    %c0_39 = arith.constant 0 : index
    %c0_40 = arith.constant 0 : index
    %55 = vector.load %arg6[%c3_38, %c0_39, %c0_40] : memref<5x84x160xbf16, #tpu.memory_space<vmem>>, vector<1x84x160xbf16>
    %56 = vector.shape_cast %55 : vector<1x84x160xbf16> to vector<84x160xbf16>
    %cst_41 = arith.constant dense<0.000000e+00> : vector<52x160xf32>
    %57 = tpu.matmul %54, %56, %cst_41 {dimension_numbers = #tpu.dot_dimension_numbers<[1], [0], [0], [1], [0, 0, 1, 1], [], []>} : vector<52x84xbf16>, vector<84x160xbf16>, vector<52x160xf32> -> vector<52x160xf32>
    %58 = arith.addf %53, %57 : vector<52x160xf32>
    %59 = vector.extract_strided_slice %36 {offsets = [4, 0], sizes = [52, 84], strides = [1, 1]} : vector<56x84xbf16> to vector<52x84xbf16>
    %c4_42 = arith.constant 4 : index
    %c0_43 = arith.constant 0 : index
    %c0_44 = arith.constant 0 : index
    %60 = vector.load %arg6[%c4_42, %c0_43, %c0_44] : memref<5x84x160xbf16, #tpu.memory_space<vmem>>, vector<1x84x160xbf16>
    %61 = vector.shape_cast %60 : vector<1x84x160xbf16> to vector<84x160xbf16>
    %cst_45 = arith.constant dense<0.000000e+00> : vector<52x160xf32>
    %62 = tpu.matmul %59, %61, %cst_45 {dimension_numbers = #tpu.dot_dimension_numbers<[1], [0], [0], [1], [0, 0, 1, 1], [], []>} : vector<52x84xbf16>, vector<84x160xbf16>, vector<52x160xf32> -> vector<52x160xf32>
    %63 = arith.addf %58, %62 : vector<52x160xf32>
    %64 = math.tanh %63 : vector<52x160xf32>
    %c0_46 = arith.constant 0 : index
    %c0_47 = arith.constant 0 : index
    %65 = vector.load %arg8[%c0_46, %c0_47] : memref<20x52xbf16, #tpu.memory_space<vmem>>, vector<20x52xbf16>
    %66 = arith.truncf %64 : vector<52x160xf32> to vector<52x160xbf16>
    %cst_48 = arith.constant dense<0.000000e+00> : vector<20x160xf32>
    %67 = tpu.matmul %65, %66, %cst_48 {dimension_numbers = #tpu.dot_dimension_numbers<[1], [0], [0], [1], [0, 0, 1, 1], [], []>} : vector<20x52xbf16>, vector<52x160xbf16>, vector<20x160xf32> -> vector<20x160xf32>
    %68 = arith.truncf %67 : vector<20x160xf32> to vector<20x160xbf16>
    %c0_49 = arith.constant 0 : index
    %c0_50 = arith.constant 0 : index
    %69 = vector.load %arg9[%c0_49, %c0_50] : memref<160x80xbf16, #tpu.memory_space<vmem>>, vector<160x80xbf16>
    %cst_51 = arith.constant dense<0.000000e+00> : vector<20x80xf32>
    %70 = tpu.matmul %68, %69, %cst_51 {dimension_numbers = #tpu.dot_dimension_numbers<[1], [0], [0], [1], [0, 0, 1, 1], [], []>} : vector<20x160xbf16>, vector<160x80xbf16>, vector<20x80xf32> -> vector<20x80xf32>
    %71 = arith.truncf %70 : vector<20x80xf32> to vector<20x80xbf16>
    %c0_52 = arith.constant 0 : index
    %c0_53 = arith.constant 0 : index
    %72 = vector.load %arg11[%c0_52, %c0_53] : memref<1x120xf32, #tpu.memory_space<vmem>>, vector<1x120xf32>
    %73 = vector.extract_strided_slice %71 {offsets = [0, 0], sizes = [16, 80], strides = [1, 1]} : vector<20x80xbf16> to vector<16x80xbf16>
    %c0_54 = arith.constant 0 : index
    %c0_55 = arith.constant 0 : index
    %c0_56 = arith.constant 0 : index
    %74 = vector.load %arg10[%c0_54, %c0_55, %c0_56] : memref<5x80x120xbf16, #tpu.memory_space<vmem>>, vector<1x80x120xbf16>
    %75 = vector.shape_cast %74 : vector<1x80x120xbf16> to vector<80x120xbf16>
    %cst_57 = arith.constant dense<0.000000e+00> : vector<16x120xf32>
    %76 = tpu.matmul %73, %75, %cst_57 {dimension_numbers = #tpu.dot_dimension_numbers<[1], [0], [0], [1], [0, 0, 1, 1], [], []>} : vector<16x80xbf16>, vector<80x120xbf16>, vector<16x120xf32> -> vector<16x120xf32>
    %77 = vector.broadcast %72 : vector<1x120xf32> to vector<16x120xf32>
    %78 = arith.addf %77, %76 : vector<16x120xf32>
    %79 = vector.extract_strided_slice %71 {offsets = [1, 0], sizes = [16, 80], strides = [1, 1]} : vector<20x80xbf16> to vector<16x80xbf16>
    %c1_58 = arith.constant 1 : index
    %c0_59 = arith.constant 0 : index
    %c0_60 = arith.constant 0 : index
    %80 = vector.load %arg10[%c1_58, %c0_59, %c0_60] : memref<5x80x120xbf16, #tpu.memory_space<vmem>>, vector<1x80x120xbf16>
    %81 = vector.shape_cast %80 : vector<1x80x120xbf16> to vector<80x120xbf16>
    %cst_61 = arith.constant dense<0.000000e+00> : vector<16x120xf32>
    %82 = tpu.matmul %79, %81, %cst_61 {dimension_numbers = #tpu.dot_dimension_numbers<[1], [0], [0], [1], [0, 0, 1, 1], [], []>} : vector<16x80xbf16>, vector<80x120xbf16>, vector<16x120xf32> -> vector<16x120xf32>
    %83 = arith.addf %78, %82 : vector<16x120xf32>
    %84 = vector.extract_strided_slice %71 {offsets = [2, 0], sizes = [16, 80], strides = [1, 1]} : vector<20x80xbf16> to vector<16x80xbf16>
    %c2_62 = arith.constant 2 : index
    %c0_63 = arith.constant 0 : index
    %c0_64 = arith.constant 0 : index
    %85 = vector.load %arg10[%c2_62, %c0_63, %c0_64] : memref<5x80x120xbf16, #tpu.memory_space<vmem>>, vector<1x80x120xbf16>
    %86 = vector.shape_cast %85 : vector<1x80x120xbf16> to vector<80x120xbf16>
    %cst_65 = arith.constant dense<0.000000e+00> : vector<16x120xf32>
    %87 = tpu.matmul %84, %86, %cst_65 {dimension_numbers = #tpu.dot_dimension_numbers<[1], [0], [0], [1], [0, 0, 1, 1], [], []>} : vector<16x80xbf16>, vector<80x120xbf16>, vector<16x120xf32> -> vector<16x120xf32>
    %88 = arith.addf %83, %87 : vector<16x120xf32>
    %89 = vector.extract_strided_slice %71 {offsets = [3, 0], sizes = [16, 80], strides = [1, 1]} : vector<20x80xbf16> to vector<16x80xbf16>
    %c3_66 = arith.constant 3 : index
    %c0_67 = arith.constant 0 : index
    %c0_68 = arith.constant 0 : index
    %90 = vector.load %arg10[%c3_66, %c0_67, %c0_68] : memref<5x80x120xbf16, #tpu.memory_space<vmem>>, vector<1x80x120xbf16>
    %91 = vector.shape_cast %90 : vector<1x80x120xbf16> to vector<80x120xbf16>
    %cst_69 = arith.constant dense<0.000000e+00> : vector<16x120xf32>
    %92 = tpu.matmul %89, %91, %cst_69 {dimension_numbers = #tpu.dot_dimension_numbers<[1], [0], [0], [1], [0, 0, 1, 1], [], []>} : vector<16x80xbf16>, vector<80x120xbf16>, vector<16x120xf32> -> vector<16x120xf32>
    %93 = arith.addf %88, %92 : vector<16x120xf32>
    %94 = vector.extract_strided_slice %71 {offsets = [4, 0], sizes = [16, 80], strides = [1, 1]} : vector<20x80xbf16> to vector<16x80xbf16>
    %c4_70 = arith.constant 4 : index
    %c0_71 = arith.constant 0 : index
    %c0_72 = arith.constant 0 : index
    %95 = vector.load %arg10[%c4_70, %c0_71, %c0_72] : memref<5x80x120xbf16, #tpu.memory_space<vmem>>, vector<1x80x120xbf16>
    %96 = vector.shape_cast %95 : vector<1x80x120xbf16> to vector<80x120xbf16>
    %cst_73 = arith.constant dense<0.000000e+00> : vector<16x120xf32>
    %97 = tpu.matmul %94, %96, %cst_73 {dimension_numbers = #tpu.dot_dimension_numbers<[1], [0], [0], [1], [0, 0, 1, 1], [], []>} : vector<16x80xbf16>, vector<80x120xbf16>, vector<16x120xf32> -> vector<16x120xf32>
    %98 = arith.addf %93, %97 : vector<16x120xf32>
    %99 = math.tanh %98 : vector<16x120xf32>
    %c0_74 = arith.constant 0 : index
    %c0_75 = arith.constant 0 : index
    %100 = vector.load %arg12[%c0_74, %c0_75] : memref<4x16xbf16, #tpu.memory_space<vmem>>, vector<4x16xbf16>
    %101 = arith.truncf %99 : vector<16x120xf32> to vector<16x120xbf16>
    %cst_76 = arith.constant dense<0.000000e+00> : vector<4x120xf32>
    %102 = tpu.matmul %100, %101, %cst_76 {dimension_numbers = #tpu.dot_dimension_numbers<[1], [0], [0], [1], [0, 0, 1, 1], [], []>} : vector<4x16xbf16>, vector<16x120xbf16>, vector<4x120xf32> -> vector<4x120xf32>
    %103 = arith.truncf %102 : vector<4x120xf32> to vector<4x120xbf16>
    %c0_77 = arith.constant 0 : index
    %c0_78 = arith.constant 0 : index
    %104 = vector.load %arg13[%c0_77, %c0_78] : memref<120x64xbf16, #tpu.memory_space<vmem>>, vector<120x64xbf16>
    %cst_79 = arith.constant dense<0.000000e+00> : vector<4x64xf32>
    %105 = tpu.matmul %103, %104, %cst_79 {dimension_numbers = #tpu.dot_dimension_numbers<[1], [0], [0], [1], [0, 0, 1, 1], [], []>} : vector<4x120xbf16>, vector<120x64xbf16>, vector<4x64xf32> -> vector<4x64xf32>
    %c0_80 = arith.constant 0 : index
    %c0_81 = arith.constant 0 : index
    %106 = vector.load %arg14[%c0_80, %c0_81] : memref<1x64xf32, #tpu.memory_space<vmem>>, vector<1x64xf32>
    %107 = vector.broadcast %106 : vector<1x64xf32> to vector<4x64xf32>
    %108 = arith.addf %105, %107 : vector<4x64xf32>
    %109 = math.tanh %108 : vector<4x64xf32>
    %110 = arith.truncf %109 : vector<4x64xf32> to vector<4x64xbf16>
    %c0_82 = arith.constant 0 : index
    %c0_83 = arith.constant 0 : index
    %111 = vector.load %arg15[%c0_82, %c0_83] : memref<64x2xbf16, #tpu.memory_space<vmem>>, vector<64x2xbf16>
    %cst_84 = arith.constant dense<0.000000e+00> : vector<4x2xf32>
    %112 = tpu.matmul %110, %111, %cst_84 {dimension_numbers = #tpu.dot_dimension_numbers<[1], [0], [0], [1], [0, 0, 1, 1], [], []>} : vector<4x64xbf16>, vector<64x2xbf16>, vector<4x2xf32> -> vector<4x2xf32>
    %c0_85 = arith.constant 0 : index
    %c0_86 = arith.constant 0 : index
    %113 = vector.load %arg16[%c0_85, %c0_86] : memref<1x2xf32, #tpu.memory_space<vmem>>, vector<1x2xf32>
    %114 = vector.broadcast %113 : vector<1x2xf32> to vector<4x2xf32>
    %115 = arith.addf %112, %114 : vector<4x2xf32>
    %116 = math.tanh %115 : vector<4x2xf32>
    %c0_87 = arith.constant 0 : index
    %c0_88 = arith.constant 0 : index
    %c0_89 = arith.constant 0 : index
    %117 = vector.load %arg17[%c0_87, %c0_88, %c0_89] : memref<1x4x2xf32, #tpu.memory_space<vmem>>, vector<1x4x2xf32>
    %118 = vector.shape_cast %117 : vector<1x4x2xf32> to vector<4x2xf32>
    %119 = vector.shape_cast %116 : vector<4x2xf32> to vector<1x4x2xf32>
    tpu.vector_store %arg17[%c0_87, %c0_88, %c0_89], %119 {strides = array<i32>} : memref<1x4x2xf32, #tpu.memory_space<vmem>>, vector<1x4x2xf32>,
    return
  }
  func.func @transform_0(%arg0: i32) -> (i32, i32) {
    %c0_i32 = arith.constant 0 : i32
    %c0_i32_0 = arith.constant 0 : i32
    return %arg0, %c0_i32 : i32, i32
  }
  func.func @transform_1(%arg0: i32) -> (i32, i32, i32) {
    %c0_i32 = arith.constant 0 : i32
    %c0_i32_0 = arith.constant 0 : i32
    %c0_i32_1 = arith.constant 0 : i32
    %c0_i32_2 = arith.constant 0 : i32
    return %c0_i32, %c0_i32_0, %c0_i32_1 : i32, i32, i32
  }
  func.func @transform_2(%arg0: i32) -> (i32, i32) {
    %c0_i32 = arith.constant 0 : i32
    %c0_i32_0 = arith.constant 0 : i32
    %c0_i32_1 = arith.constant 0 : i32
    return %c0_i32, %c0_i32_0 : i32, i32
  }
  func.func @transform_3(%arg0: i32) -> (i32, i32) {
    %c0_i32 = arith.constant 0 : i32
    %c0_i32_0 = arith.constant 0 : i32
    %c0_i32_1 = arith.constant 0 : i32
    return %c0_i32, %c0_i32_0 : i32, i32
  }
  func.func @transform_4(%arg0: i32) -> (i32, i32) {
    %c0_i32 = arith.constant 0 : i32
    %c0_i32_0 = arith.constant 0 : i32
    %c0_i32_1 = arith.constant 0 : i32
    return %c0_i32, %c0_i32_0 : i32, i32
  }
  func.func @transform_5(%arg0: i32) -> (i32, i32, i32) {
    %c0_i32 = arith.constant 0 : i32
    %c0_i32_0 = arith.constant 0 : i32
    %c0_i32_1 = arith.constant 0 : i32
    %c0_i32_2 = arith.constant 0 : i32
    return %c0_i32, %c0_i32_0, %c0_i32_1 : i32, i32, i32
  }
  func.func @transform_6(%arg0: i32) -> (i32, i32) {
    %c0_i32 = arith.constant 0 : i32
    %c0_i32_0 = arith.constant 0 : i32
    %c0_i32_1 = arith.constant 0 : i32
    return %c0_i32, %c0_i32_0 : i32, i32
  }
  func.func @transform_7(%arg0: i32) -> (i32, i32) {
    %c0_i32 = arith.constant 0 : i32
    %c0_i32_0 = arith.constant 0 : i32
    %c0_i32_1 = arith.constant 0 : i32
    return %c0_i32, %c0_i32_0 : i32, i32
  }
  func.func @transform_8(%arg0: i32) -> (i32, i32) {
    %c0_i32 = arith.constant 0 : i32
    %c0_i32_0 = arith.constant 0 : i32
    %c0_i32_1 = arith.constant 0 : i32
    return %c0_i32, %c0_i32_0 : i32, i32
  }
  func.func @transform_9(%arg0: i32) -> (i32, i32, i32) {
    %c0_i32 = arith.constant 0 : i32
    %c0_i32_0 = arith.constant 0 : i32
    %c0_i32_1 = arith.constant 0 : i32
    %c0_i32_2 = arith.constant 0 : i32
    return %c0_i32, %c0_i32_0, %c0_i32_1 : i32, i32, i32
  }
  func.func @transform_10(%arg0: i32) -> (i32, i32) {
    %c0_i32 = arith.constant 0 : i32
    %c0_i32_0 = arith.constant 0 : i32
    %c0_i32_1 = arith.constant 0 : i32
    return %c0_i32, %c0_i32_0 : i32, i32
  }
  func.func @transform_11(%arg0: i32) -> (i32, i32) {
    %c0_i32 = arith.constant 0 : i32
    %c0_i32_0 = arith.constant 0 : i32
    %c0_i32_1 = arith.constant 0 : i32
    return %c0_i32, %c0_i32_0 : i32, i32
  }
  func.func @transform_12(%arg0: i32) -> (i32, i32) {
    %c0_i32 = arith.constant 0 : i32
    %c0_i32_0 = arith.constant 0 : i32
    %c0_i32_1 = arith.constant 0 : i32
    return %c0_i32, %c0_i32_0 : i32, i32
  }
  func.func @transform_13(%arg0: i32) -> (i32, i32) {
    %c0_i32 = arith.constant 0 : i32
    %c0_i32_0 = arith.constant 0 : i32
    %c0_i32_1 = arith.constant 0 : i32
    return %c0_i32, %c0_i32_0 : i32, i32
  }
  func.func @transform_14(%arg0: i32) -> (i32, i32) {
    %c0_i32 = arith.constant 0 : i32
    %c0_i32_0 = arith.constant 0 : i32
    %c0_i32_1 = arith.constant 0 : i32
    return %c0_i32, %c0_i32_0 : i32, i32
  }
  func.func @transform_15(%arg0: i32) -> (i32, i32) {
    %c0_i32 = arith.constant 0 : i32
    %c0_i32_0 = arith.constant 0 : i32
    %c0_i32_1 = arith.constant 0 : i32
    return %c0_i32, %c0_i32_0 : i32, i32
  }
  func.func @transform_16(%arg0: i32) -> (i32, i32, i32) {
    %c0_i32 = arith.constant 0 : i32
    %c0_i32_0 = arith.constant 0 : i32
    %c0_i32_1 = arith.constant 0 : i32
    return %arg0, %c0_i32, %c0_i32_0 : i32, i32, i32
  }
}

</mosaic_0001>

<llo_original>
// kernel: god_model_forward.1
$region0: #{god_model_forward.1}
  #allocation0 [shape = 'u32[]', space=smem, size = 0x4, offset = 0x4, fixed_abs, tag = 'smem constant byte address 0x4 - core index']
  #allocation1 [shape = 'u32[72,128]{1,0:T(1,128)}', space=vmem, size = 0x9000, scoped, tag = 'internal scratch']
  %s0 = inlined_call_operand.vmem [shape: f32[256,96], index: 0, kind: input, shape index: {}]
  %s1 = inlined_call_operand.vmem [shape: bf16[5,96,168], index: 1, kind: input, shape index: {}]
  %s2 = inlined_call_operand.vmem [shape: f32[1,168], index: 2, kind: input, shape index: {}]
  %s3 = inlined_call_operand.vmem [shape: bf16[56,124], index: 3, kind: input, shape index: {}]
  %s4 = inlined_call_operand.vmem [shape: bf16[168,84], index: 4, kind: input, shape index: {}]
  %s5 = inlined_call_operand.vmem [shape: bf16[5,84,160], index: 5, kind: input, shape index: {}]
  %s6 = inlined_call_operand.vmem [shape: f32[1,160], index: 6, kind: input, shape index: {}]
  %s7 = inlined_call_operand.vmem [shape: bf16[20,52], index: 7, kind: input, shape index: {}]
  %s8 = inlined_call_operand.vmem [shape: bf16[160,80], index: 8, kind: input, shape index: {}]
  %s9 = inlined_call_operand.vmem [shape: bf16[5,80,120], index: 9, kind: input, shape index: {}]
  %s10 = inlined_call_operand.vmem [shape: f32[1,120], index: 10, kind: input, shape index: {}]
  %s11 = inlined_call_operand.vmem [shape: bf16[4,16], index: 11, kind: input, shape index: {}]
  %s12 = inlined_call_operand.vmem [shape: bf16[120,64], index: 12, kind: input, shape index: {}]
  %s13 = inlined_call_operand.vmem [shape: f32[1,64], index: 13, kind: input, shape index: {}]
  %s14 = inlined_call_operand.vmem [shape: bf16[64,2], index: 14, kind: input, shape index: {}]
  %s15 = inlined_call_operand.vmem [shape: f32[1,2], index: 15, kind: input, shape index: {}]
  %s16 = inlined_call_operand.vmem [shape: f32[2,4,2], index: 16, kind: output, shape index: {}]
  %s17 = sld [smem:[#allocation0]]
  $region97: #{god_model_forward.1} parent=0
    _
  %s19 = ssub.s32 1, %s17
  %s20 = scalar_select 0, %s19, %s17
  loop: start=0, step=1, limit=4
  $region2: #{god_model_forward.1} parent=0 // loop_pre_header
    _
  $region3: #{god_model_forward.1} parent=0 // loop_header
    %s22 = sphi 0, %s26
    %p23 = scmp.ge.s32.totalorder %s22, 4
    %s32 = sphi 0, %s34
    %s35 = sphi 0, %s32
    %s36 = sphi 0, %s35
    %s52 = sphi 0, %s36
    %s56 = sphi 0, %s56
    %s58 = sphi 0, %s56
    %s59 = sphi 0, %s58
    %s73 = sphi 0, %s59
    %s77 = sphi 0, %s77
    %s79 = sphi 0, %s77
    %s80 = sphi 0, %s79
    %s94 = sphi 0, %s80
    %s98 = sphi 0, %s98
    %s100 = sphi 0, %s98
    %s101 = sphi 0, %s100
    %s115 = sphi 0, %s101
    %s119 = sphi 0, %s119
    %s121 = sphi 0, %s119
    %s122 = sphi 0, %s121
    %s136 = sphi 0, %s122
    %s140 = sphi 0, %s140
    %s142 = sphi 0, %s140
    %s143 = sphi 0, %s142
    %s157 = sphi 0, %s143
    %s161 = sphi 0, %s161
    %s163 = sphi 0, %s161
    %s164 = sphi 0, %s163
    %s178 = sphi 0, %s164
    %s182 = sphi 0, %s182
    %s184 = sphi 0, %s182
    %s185 = sphi 0, %s184
    %s199 = sphi 0, %s185
    %s203 = sphi 0, %s203
    %s205 = sphi 0, %s203
    %s206 = sphi 0, %s205
    %s220 = sphi 0, %s206
    %s224 = sphi 0, %s224
    %s226 = sphi 0, %s224
    %s227 = sphi 0, %s226
    %s241 = sphi 0, %s227
    %s245 = sphi 0, %s245
    %s247 = sphi 0, %s245
    %s248 = sphi 0, %s247
    %s262 = sphi 0, %s248
    %s266 = sphi 0, %s266
    %s268 = sphi 0, %s266
    %s269 = sphi 0, %s268
    %s283 = sphi 0, %s269
    %s287 = sphi 0, %s287
    %s289 = sphi 0, %s287
    %s290 = sphi 0, %s289
    %s304 = sphi 0, %s290
    %s308 = sphi 0, %s308
    %s310 = sphi 0, %s308
    %s311 = sphi 0, %s310
    %s325 = sphi 0, %s311
    %s329 = sphi 0, %s329
    %s331 = sphi 0, %s329
    %s332 = sphi 0, %s331
    %s346 = sphi 0, %s332
    %s350 = sphi 0, %s350
    %s352 = sphi 0, %s350
    %s353 = sphi 0, %s352
    %s367 = sphi 0, %s353
    %s373 = sphi 0, %s375
    %s376 = sphi 0, %s373
    %s377 = sphi 0, %s376
    %s393 = sphi 0, %s377
  $region4: #{god_model_forward.1} parent=0 // loop_header_branch
    %25 = sbr.rel (%p23) target = $region8
  $region5: #{god_model_forward.1} parent=0 // loop_body
    %s27 = ssub.s32 %s22, 1
    %s28 = ssub.s32 %s22, 2
    %s29 = sadd.s32 %s22, 1
    %s30 = ssub.s32 %s22, %s29
    %p31 = scmp.eq.s32.totalorder %s30, 0
    %s33 = sadd.s32 %s32, 1
    %s34 = scalar_select %p31, %s32, %s33
    %p37 = pneg %p31
    %p38 = scmp.eq.s32.totalorder %s22, 1
    %p39 = por %p37, %p38
    %p40 = scmp.ne.s32.totalorder %s32, %s35
    %p41 = scmp.eq.s32.totalorder %s22, 0
    %p42 = por %p40, %p41
    %p43 = scmp.ne.s32.totalorder %s32, %s35
    %p44 = scmp.eq.s32.totalorder %s27, 1
    %p45 = por %p43, %p44
    %p46 = scmp.ne.s32.totalorder %s35, %s36
    %p47 = scmp.eq.s32.totalorder %s27, 0
    %p48 = por %p46, %p47
    %p49 = scmp.ne.s32.totalorder %s35, %s36
    %p50 = scmp.eq.s32.totalorder %s28, 1
    %p51 = por %p49, %p50
    %p53 = scmp.ne.s32.totalorder %s36, %s52
    %p54 = scmp.eq.s32.totalorder %s28, 0
    %p55 = por %p53, %p54
    %s57 = sadd.s32 %s56, 1
    %p60 = scmp.eq.s32.totalorder %s22, 1
    %p61 = scmp.ne.s32.totalorder %s56, %s58
    %p62 = scmp.eq.s32.totalorder %s22, 0
    %p63 = por %p61, %p62
    %p64 = scmp.ne.s32.totalorder %s56, %s58
    %p65 = scmp.eq.s32.totalorder %s27, 1
    %p66 = por %p64, %p65
    %p67 = scmp.ne.s32.totalorder %s58, %s59
    %p68 = scmp.eq.s32.totalorder %s27, 0
    %p69 = por %p67, %p68
    %p70 = scmp.ne.s32.totalorder %s58, %s59
    %p71 = scmp.eq.s32.totalorder %s28, 1
    %p72 = por %p70, %p71
    %p74 = scmp.ne.s32.totalorder %s59, %s73
    %p75 = scmp.eq.s32.totalorder %s28, 0
    %p76 = por %p74, %p75
    %s78 = sadd.s32 %s77, 1
    %p81 = scmp.eq.s32.totalorder %s22, 1
    %p82 = scmp.ne.s32.totalorder %s77, %s79
    %p83 = scmp.eq.s32.totalorder %s22, 0
    %p84 = por %p82, %p83
    %p85 = scmp.ne.s32.totalorder %s77, %s79
    %p86 = scmp.eq.s32.totalorder %s27, 1
    %p87 = por %p85, %p86
    %p88 = scmp.ne.s32.totalorder %s79, %s80
    %p89 = scmp.eq.s32.totalorder %s27, 0
    %p90 = por %p88, %p89
    %p91 = scmp.ne.s32.totalorder %s79, %s80
    %p92 = scmp.eq.s32.totalorder %s28, 1
    %p93 = por %p91, %p92
    %p95 = scmp.ne.s32.totalorder %s80, %s94
    %p96 = scmp.eq.s32.totalorder %s28, 0
    %p97 = por %p95, %p96
    %s99 = sadd.s32 %s98, 1
    %p102 = scmp.eq.s32.totalorder %s22, 1
    %p103 = scmp.ne.s32.totalorder %s98, %s100
    %p104 = scmp.eq.s32.totalorder %s22, 0
    %p105 = por %p103, %p104
    %p106 = scmp.ne.s32.totalorder %s98, %s100
    %p107 = scmp.eq.s32.totalorder %s27, 1
    %p108 = por %p106, %p107
    %p109 = scmp.ne.s32.totalorder %s100, %s101
    %p110 = scmp.eq.s32.totalorder %s27, 0
    %p111 = por %p109, %p110
    %p112 = scmp.ne.s32.totalorder %s100, %s101
    %p113 = scmp.eq.s32.totalorder %s28, 1
    %p114 = por %p112, %p113
    %p116 = scmp.ne.s32.totalorder %s101, %s115
    %p117 = scmp.eq.s32.totalorder %s28, 0
    %p118 = por %p116, %p117
    %s120 = sadd.s32 %s119, 1
    %p123 = scmp.eq.s32.totalorder %s22, 1
    %p124 = scmp.ne.s32.totalorder %s119, %s121
    %p125 = scmp.eq.s32.totalorder %s22, 0
    %p126 = por %p124, %p125
    %p127 = scmp.ne.s32.totalorder %s119, %s121
    %p128 = scmp.eq.s32.totalorder %s27, 1
    %p129 = por %p127, %p128
    %p130 = scmp.ne.s32.totalorder %s121, %s122
    %p131 = scmp.eq.s32.totalorder %s27, 0
    %p132 = por %p130, %p131
    %p133 = scmp.ne.s32.totalorder %s121, %s122
    %p134 = scmp.eq.s32.totalorder %s28, 1
    %p135 = por %p133, %p134
    %p137 = scmp.ne.s32.totalorder %s122, %s136
    %p138 = scmp.eq.s32.totalorder %s28, 0
    %p139 = por %p137, %p138
    %s141 = sadd.s32 %s140, 1
    %p144 = scmp.eq.s32.totalorder %s22, 1
    %p145 = scmp.ne.s32.totalorder %s140, %s142
    %p146 = scmp.eq.s32.totalorder %s22, 0
    %p147 = por %p145, %p146
    %p148 = scmp.ne.s32.totalorder %s140, %s142
    %p149 = scmp.eq.s32.totalorder %s27, 1
    %p150 = por %p148, %p149
    %p151 = scmp.ne.s32.totalorder %s142, %s143
    %p152 = scmp.eq.s32.totalorder %s27, 0
    %p153 = por %p151, %p152
    %p154 = scmp.ne.s32.totalorder %s142, %s143
    %p155 = scmp.eq.s32.totalorder %s28, 1
    %p156 = por %p154, %p155
    %p158 = scmp.ne.s32.totalorder %s143, %s157
    %p159 = scmp.eq.s32.totalorder %s28, 0
    %p160 = por %p158, %p159
    %s162 = sadd.s32 %s161, 1
    %p165 = scmp.eq.s32.totalorder %s22, 1
    %p166 = scmp.ne.s32.totalorder %s161, %s163
    %p167 = scmp.eq.s32.totalorder %s22, 0
    %p168 = por %p166, %p167
    %p169 = scmp.ne.s32.totalorder %s161, %s163
    %p170 = scmp.eq.s32.totalorder %s27, 1
    %p171 = por %p169, %p170
    %p172 = scmp.ne.s32.totalorder %s163, %s164
    %p173 = scmp.eq.s32.totalorder %s27, 0
    %p174 = por %p172, %p173
    %p175 = scmp.ne.s32.totalorder %s163, %s164
    %p176 = scmp.eq.s32.totalorder %s28, 1
    %p177 = por %p175, %p176
    %p179 = scmp.ne.s32.totalorder %s164, %s178
    %p180 = scmp.eq.s32.totalorder %s28, 0
    %p181 = por %p179, %p180
    %s183 = sadd.s32 %s182, 1
    %p186 = scmp.eq.s32.totalorder %s22, 1
    %p187 = scmp.ne.s32.totalorder %s182, %s184
    %p188 = scmp.eq.s32.totalorder %s22, 0
    %p189 = por %p187, %p188
    %p190 = scmp.ne.s32.totalorder %s182, %s184
    %p191 = scmp.eq.s32.totalorder %s27, 1
    %p192 = por %p190, %p191
    %p193 = scmp.ne.s32.totalorder %s184, %s185
    %p194 = scmp.eq.s32.totalorder %s27, 0
    %p195 = por %p193, %p194
    %p196 = scmp.ne.s32.totalorder %s184, %s185
    %p197 = scmp.eq.s32.totalorder %s28, 1
    %p198 = por %p196, %p197
    %p200 = scmp.ne.s32.totalorder %s185, %s199
    %p201 = scmp.eq.s32.totalorder %s28, 0
    %p202 = por %p200, %p201
    %s204 = sadd.s32 %s203, 1
    %p207 = scmp.eq.s32.totalorder %s22, 1
    %p208 = scmp.ne.s32.totalorder %s203, %s205
    %p209 = scmp.eq.s32.totalorder %s22, 0
    %p210 = por %p208, %p209
    %p211 = scmp.ne.s32.totalorder %s203, %s205
    %p212 = scmp.eq.s32.totalorder %s27, 1
    %p213 = por %p211, %p212
    %p214 = scmp.ne.s32.totalorder %s205, %s206
    %p215 = scmp.eq.s32.totalorder %s27, 0
    %p216 = por %p214, %p215
    %p217 = scmp.ne.s32.totalorder %s205, %s206
    %p218 = scmp.eq.s32.totalorder %s28, 1
    %p219 = por %p217, %p218
    %p221 = scmp.ne.s32.totalorder %s206, %s220
    %p222 = scmp.eq.s32.totalorder %s28, 0
    %p223 = por %p221, %p222
    %s225 = sadd.s32 %s224, 1
    %p228 = scmp.eq.s32.totalorder %s22, 1
    %p229 = scmp.ne.s32.totalorder %s224, %s226
    %p230 = scmp.eq.s32.totalorder %s22, 0
    %p231 = por %p229, %p230
    %p232 = scmp.ne.s32.totalorder %s224, %s226
    %p233 = scmp.eq.s32.totalorder %s27, 1
    %p234 = por %p232, %p233
    %p235 = scmp.ne.s32.totalorder %s226, %s227
    %p236 = scmp.eq.s32.totalorder %s27, 0
    %p237 = por %p235, %p236
    %p238 = scmp.ne.s32.totalorder %s226, %s227
    %p239 = scmp.eq.s32.totalorder %s28, 1
    %p240 = por %p238, %p239
    %p242 = scmp.ne.s32.totalorder %s227, %s241
    %p243 = scmp.eq.s32.totalorder %s28, 0
    %p244 = por %p242, %p243
    %s246 = sadd.s32 %s245, 1
    %p249 = scmp.eq.s32.totalorder %s22, 1
    %p250 = scmp.ne.s32.totalorder %s245, %s247
    %p251 = scmp.eq.s32.totalorder %s22, 0
    %p252 = por %p250, %p251
    %p253 = scmp.ne.s32.totalorder %s245, %s247
    %p254 = scmp.eq.s32.totalorder %s27, 1
    %p255 = por %p253, %p254
    %p256 = scmp.ne.s32.totalorder %s247, %s248
    %p257 = scmp.eq.s32.totalorder %s27, 0
    %p258 = por %p256, %p257
    %p259 = scmp.ne.s32.totalorder %s247, %s248
    %p260 = scmp.eq.s32.totalorder %s28, 1
    %p261 = por %p259, %p260
    %p263 = scmp.ne.s32.totalorder %s248, %s262
    %p264 = scmp.eq.s32.totalorder %s28, 0
    %p265 = por %p263, %p264
    %s267 = sadd.s32 %s266, 1
    %p270 = scmp.eq.s32.totalorder %s22, 1
    %p271 = scmp.ne.s32.totalorder %s266, %s268
    %p272 = scmp.eq.s32.totalorder %s22, 0
    %p273 = por %p271, %p272
    %p274 = scmp.ne.s32.totalorder %s266, %s268
    %p275 = scmp.eq.s32.totalorder %s27, 1
    %p276 = por %p274, %p275
    %p277 = scmp.ne.s32.totalorder %s268, %s269
    %p278 = scmp.eq.s32.totalorder %s27, 0
    %p279 = por %p277, %p278
    %p280 = scmp.ne.s32.totalorder %s268, %s269
    %p281 = scmp.eq.s32.totalorder %s28, 1
    %p282 = por %p280, %p281
    %p284 = scmp.ne.s32.totalorder %s269, %s283
    %p285 = scmp.eq.s32.totalorder %s28, 0
    %p286 = por %p284, %p285
    %s288 = sadd.s32 %s287, 1
    %p291 = scmp.eq.s32.totalorder %s22, 1
    %p292 = scmp.ne.s32.totalorder %s287, %s289
    %p293 = scmp.eq.s32.totalorder %s22, 0
    %p294 = por %p292, %p293
    %p295 = scmp.ne.s32.totalorder %s287, %s289
    %p296 = scmp.eq.s32.totalorder %s27, 1
    %p297 = por %p295, %p296
    %p298 = scmp.ne.s32.totalorder %s289, %s290
    %p299 = scmp.eq.s32.totalorder %s27, 0
    %p300 = por %p298, %p299
    %p301 = scmp.ne.s32.totalorder %s289, %s290
    %p302 = scmp.eq.s32.totalorder %s28, 1
    %p303 = por %p301, %p302
    %p305 = scmp.ne.s32.totalorder %s290, %s304
    %p306 = scmp.eq.s32.totalorder %s28, 0
    %p307 = por %p305, %p306
    %s309 = sadd.s32 %s308, 1
    %p312 = scmp.eq.s32.totalorder %s22, 1
    %p313 = scmp.ne.s32.totalorder %s308, %s310
    %p314 = scmp.eq.s32.totalorder %s22, 0
    %p315 = por %p313, %p314
    %p316 = scmp.ne.s32.totalorder %s308, %s310
    %p317 = scmp.eq.s32.totalorder %s27, 1
    %p318 = por %p316, %p317
    %p319 = scmp.ne.s32.totalorder %s310, %s311
    %p320 = scmp.eq.s32.totalorder %s27, 0
    %p321 = por %p319, %p320
    %p322 = scmp.ne.s32.totalorder %s310, %s311
    %p323 = scmp.eq.s32.totalorder %s28, 1
    %p324 = por %p322, %p323
    %p326 = scmp.ne.s32.totalorder %s311, %s325
    %p327 = scmp.eq.s32.totalorder %s28, 0
    %p328 = por %p326, %p327
    %s330 = sadd.s32 %s329, 1
    %p333 = scmp.eq.s32.totalorder %s22, 1
    %p334 = scmp.ne.s32.totalorder %s329, %s331
    %p335 = scmp.eq.s32.totalorder %s22, 0
    %p336 = por %p334, %p335
    %p337 = scmp.ne.s32.totalorder %s329, %s331
    %p338 = scmp.eq.s32.totalorder %s27, 1
    %p339 = por %p337, %p338
    %p340 = scmp.ne.s32.totalorder %s331, %s332
    %p341 = scmp.eq.s32.totalorder %s27, 0
    %p342 = por %p340, %p341
    %p343 = scmp.ne.s32.totalorder %s331, %s332
    %p344 = scmp.eq.s32.totalorder %s28, 1
    %p345 = por %p343, %p344
    %p347 = scmp.ne.s32.totalorder %s332, %s346
    %p348 = scmp.eq.s32.totalorder %s28, 0
    %p349 = por %p347, %p348
    %s351 = sadd.s32 %s350, 1
    %p354 = scmp.eq.s32.totalorder %s22, 1
    %p355 = scmp.ne.s32.totalorder %s350, %s352
    %p356 = scmp.eq.s32.totalorder %s22, 0
    %p357 = por %p355, %p356
    %p358 = scmp.ne.s32.totalorder %s350, %s352
    %p359 = scmp.eq.s32.totalorder %s27, 1
    %p360 = por %p358, %p359
    %p361 = scmp.ne.s32.totalorder %s352, %s353
    %p362 = scmp.eq.s32.totalorder %s27, 0
    %p363 = por %p361, %p362
    %p364 = scmp.ne.s32.totalorder %s352, %s353
    %p365 = scmp.eq.s32.totalorder %s28, 1
    %p366 = por %p364, %p365
    %p368 = scmp.ne.s32.totalorder %s353, %s367
    %p369 = scmp.eq.s32.totalorder %s28, 0
    %p370 = por %p368, %p369
    %s371 = ssub.s32 %s22, %s29
    %p372 = scmp.eq.s32.totalorder %s371, 0
    %s374 = sadd.s32 %s373, 1
    %s375 = scalar_select %p372, %s373, %s374
    %p378 = pneg %p372
    %p379 = scmp.eq.s32.totalorder %s22, 1
    %p380 = por %p378, %p379
    %p381 = scmp.ne.s32.totalorder %s373, %s376
    %p382 = scmp.eq.s32.totalorder %s22, 0
    %p383 = por %p381, %p382
    %p384 = scmp.ne.s32.totalorder %s373, %s376
    %p385 = scmp.eq.s32.totalorder %s27, 1
    %p386 = por %p384, %p385
    %p387 = scmp.ne.s32.totalorder %s376, %s377
    %p388 = scmp.eq.s32.totalorder %s27, 0
    %p389 = por %p387, %p388
    %p390 = scmp.ne.s32.totalorder %s376, %s377
    %p391 = scmp.eq.s32.totalorder %s28, 1
    %p392 = por %p390, %p391
    %p394 = scmp.ne.s32.totalorder %s377, %s393
    %p395 = scmp.eq.s32.totalorder %s28, 0
    %p396 = por %p394, %p395
    %p397 = scmp.le.s32.totalorder 1, %s22
    %p398 = scmp.lt.s32.totalorder %s22, 3
    %p399 = pnand %p397, %p398
    %p400 = pneg %p399
    // Predicated region
    $region9: #{god_model_forward.1} parent=5 // pred_check
      _
    $region10: #{god_model_forward.1} parent=5 // pred_check_branch
      %402 = sbr.rel (%p399) target = $region12
    $region11: #{god_model_forward.1} parent=5 // pred_region
      %s403 = ssub.s32 %s22, 1
      // Predicated region
      $region13: #{god_model_forward.1} parent=11 // pred_check
        %p404 = pneg %p69
      $region14: #{god_model_forward.1} parent=11 // pred_check_branch
        %406 = sbr.rel (%p404) target = $region16
      $region15: #{god_model_forward.1} parent=11 // pred_region
        _
      $region16: #{god_model_forward.1} parent=11 // pred_fallthru
        _
      // Predicated region
      $region17: #{god_model_forward.1} parent=11 // pred_check
        %p407 = pneg %p90
      $region18: #{god_model_forward.1} parent=11 // pred_check_branch
        %409 = sbr.rel (%p407) target = $region20
      $region19: #{god_model_forward.1} parent=11 // pred_region
        _
      $region20: #{god_model_forward.1} parent=11 // pred_fallthru
        _
      // Predicated region
      $region21: #{god_model_forward.1} parent=11 // pred_check
        %p410 = pneg %p111
      $region22: #{god_model_forward.1} parent=11 // pred_check_branch
        %412 = sbr.rel (%p410) target = $region24
      $region23: #{god_model_forward.1} parent=11 // pred_region
        _
      $region24: #{god_model_forward.1} parent=11 // pred_fallthru
        _
      // Predicated region
      $region25: #{god_model_forward.1} parent=11 // pred_check
        %p413 = pneg %p132
      $region26: #{god_model_forward.1} parent=11 // pred_check_branch
        %415 = sbr.rel (%p413) target = $region28
      $region27: #{god_model_forward.1} parent=11 // pred_region
        _
      $region28: #{god_model_forward.1} parent=11 // pred_fallthru
        _
      // Predicated region
      $region29: #{god_model_forward.1} parent=11 // pred_check
        %p416 = pneg %p153
      $region30: #{god_model_forward.1} parent=11 // pred_check_branch
        %418 = sbr.rel (%p416) target = $region32
      $region31: #{god_model_forward.1} parent=11 // pred_region
        _
      $region32: #{god_model_forward.1} parent=11 // pred_fallthru
        _
      // Predicated region
      $region33: #{god_model_forward.1} parent=11 // pred_check
        %p419 = pneg %p174
      $region34: #{god_model_forward.1} parent=11 // pred_check_branch
        %421 = sbr.rel (%p419) target = $region36
      $region35: #{god_model_forward.1} parent=11 // pred_region
        _
      $region36: #{god_model_forward.1} parent=11 // pred_fallthru
        _
      // Predicated region
      $region37: #{god_model_forward.1} parent=11 // pred_check
        %p422 = pneg %p195
      $region38: #{god_model_forward.1} parent=11 // pred_check_branch
        %424 = sbr.rel (%p422) target = $region40
      $region39: #{god_model_forward.1} parent=11 // pred_region
        _
      $region40: #{god_model_forward.1} parent=11 // pred_fallthru
        _
      // Predicated region
      $region41: #{god_model_forward.1} parent=11 // pred_check
        %p425 = pneg %p216
      $region42: #{god_model_forward.1} parent=11 // pred_check_branch
        %427 = sbr.rel (%p425) target = $region44
      $region43: #{god_model_forward.1} parent=11 // pred_region
        _
      $region44: #{god_model_forward.1} parent=11 // pred_fallthru
        _
      // Predicated region
      $region45: #{god_model_forward.1} parent=11 // pred_check
        %p428 = pneg %p237
      $region46: #{god_model_forward.1} parent=11 // pred_check_branch
        %430 = sbr.rel (%p428) target = $region48
      $region47: #{god_model_forward.1} parent=11 // pred_region
        _
      $region48: #{god_model_forward.1} parent=11 // pred_fallthru
        _
      // Predicated region
      $region49: #{god_model_forward.1} parent=11 // pred_check
        %p431 = pneg %p258
      $region50: #{god_model_forward.1} parent=11 // pred_check_branch
        %433 = sbr.rel (%p431) target = $region52
      $region51: #{god_model_forward.1} parent=11 // pred_region
        _
      $region52: #{god_model_forward.1} parent=11 // pred_fallthru
        _
      // Predicated region
      $region53: #{god_model_forward.1} parent=11 // pred_check
        %p434 = pneg %p279
      $region54: #{god_model_forward.1} parent=11 // pred_check_branch
        %436 = sbr.rel (%p434) target = $region56
      $region55: #{god_model_forward.1} parent=11 // pred_region
        _
      $region56: #{god_model_forward.1} parent=11 // pred_fallthru
        _
      // Predicated region
      $region57: #{god_model_forward.1} parent=11 // pred_check
        %p437 = pneg %p300
      $region58: #{god_model_forward.1} parent=11 // pred_check_branch
        %439 = sbr.rel (%p437) target = $region60
      $region59: #{god_model_forward.1} parent=11 // pred_region
        _
      $region60: #{god_model_forward.1} parent=11 // pred_fallthru
        _
      // Predicated region
      $region61: #{god_model_forward.1} parent=11 // pred_check
        %p440 = pneg %p321
      $region62: #{god_model_forward.1} parent=11 // pred_check_branch
        %442 = sbr.rel (%p440) target = $region64
      $region63: #{god_model_forward.1} parent=11 // pred_region
        _
      $region64: #{god_model_forward.1} parent=11 // pred_fallthru
        _
      // Predicated region
      $region65: #{god_model_forward.1} parent=11 // pred_check
        %p443 = pneg %p342
      $region66: #{god_model_forward.1} parent=11 // pred_check_branch
        %445 = sbr.rel (%p443) target = $region68
      $region67: #{god_model_forward.1} parent=11 // pred_region
        _
      $region68: #{god_model_forward.1} parent=11 // pred_fallthru
        _
      // Predicated region
      $region69: #{god_model_forward.1} parent=11 // pred_check
        %p446 = pneg %p363
      $region70: #{god_model_forward.1} parent=11 // pred_check_branch
        %448 = sbr.rel (%p446) target = $region72
      $region71: #{god_model_forward.1} parent=11 // pred_region
        _
      $region72: #{god_model_forward.1} parent=11 // pred_fallthru
        _
    $region12: #{god_model_forward.1} parent=5 // pred_fallthru
      _
    %p449 = scmp.lt.s32.totalorder %s22, 2
    // Predicated region
    $region73: #{god_model_forward.1} parent=5 // pred_check
      %p450 = pneg %p449
    $region74: #{god_model_forward.1} parent=5 // pred_check_branch
      %452 = sbr.rel (%p450) target = $region76
    $region75: #{god_model_forward.1} parent=5 // pred_region
      // Predicated region
      $region77: #{god_model_forward.1} parent=75 // pred_check
        %p453 = pneg %p42
      $region78: #{god_model_forward.1} parent=75 // pred_check_branch
        %455 = sbr.rel (%p453) target = $region80
      $region79: #{god_model_forward.1} parent=75 // pred_region
        %s456 = smul.u32 16, %s22
        %p457 = scmp.lt.s32.totalorder %s456, 31
        %s458 = scalar_select %p457, %s456, 31
        %s459 = smul.addr %s458, 8
        %s460 = scalar_lea.vmem %s0, %s459
        %s461 = smul.u32 16, %s22
      $region80: #{god_model_forward.1} parent=75 // pred_fallthru
        _
    $region76: #{god_model_forward.1} parent=5 // pred_fallthru
      _
    %p462 = scmp.le.s32.totalorder 1, %s22
    %p463 = scmp.lt.s32.totalorder %s22, 3
    %p464 = pnand %p462, %p463
    %p465 = pneg %p464
    // Predicated region
    $region81: #{god_model_forward.1} parent=5 // pred_check
      _
    $region82: #{god_model_forward.1} parent=5 // pred_check_branch
      %467 = sbr.rel (%p464) target = $region84
    $region83: #{god_model_forward.1} parent=5 // pred_region
      %s468 = ssub.s32 %s22, 1
      %s469 = smul.u32 16, %s27
      %p470 = scmp.lt.s32.totalorder %s469, 31
      %s471 = scalar_select %p470, %s469, 31
      %s472 = smul.addr %s471, 8
      %s473 = scalar_lea.vmem %s0, %s472
      %p474 = pneg %p48
      %p475 = pneg %p45
      %p476 = pneg %p69
      %p477 = pneg %p66
      %p478 = pneg %p90
      %p479 = pneg %p87
      %p480 = pneg %p111
      %p481 = pneg %p108
      %p482 = pneg %p132
      %p483 = pneg %p129
      %p484 = pneg %p153
      %p485 = pneg %p150
      %p486 = pneg %p174
      %p487 = pneg %p171
      %p488 = pneg %p195
      %p489 = pneg %p192
      %p490 = pneg %p216
      %p491 = pneg %p213
      %p492 = pneg %p237
      %p493 = pneg %p234
      %p494 = pneg %p258
      %p495 = pneg %p255
      %p496 = pneg %p279
      %p497 = pneg %p276
      %p498 = pneg %p300
      %p499 = pneg %p297
      %p500 = pneg %p321
      %p501 = pneg %p318
      %p502 = pneg %p342
      %p503 = pneg %p339
      %p504 = pneg %p363
      %p505 = pneg %p360
      %p506 = pneg %p389
      %p507 = pneg %p386
      %p508 = scmp.lt.s32.totalorder %s27, 1
      %s509 = scalar_select %p508, %s27, 1
      %s510 = smul.addr %s509, 4
      %s511 = scalar_lea.vmem %s16, %s510
      %s512 = smul.u32 16, %s27
      %p513 = scmp.lt.s32.totalorder %s512, 31
      %s514 = scalar_select %p513, %s512, 31
      %s515 = smul.addr %s514, 8
      %s516 = scalar_lea.vmem %s0, %s515
      %s517 = smul.u32 16, %s27
      %p518 = scmp.lt.s32.totalorder %s27, 1
      %s519 = scalar_select %p518, %s27, 1
      %s520 = smul.addr %s519, 4
      %s521 = scalar_lea.vmem %s16, %s520
      %v523 = vld [vmem:[%s516] sm:$0xff]
      %v524 = vld [vmem:[%s516 + $0x8] sm:$0xff]
      %v525 = vld [vmem:[%s516 + $0x10] sm:$0xff]
      %v526 = vld [vmem:[%s516 + $0x18] sm:$0xff]
      %v527 = vld [vmem:[%s516 + $0x20] sm:$0xff]
      %v528 = vld [vmem:[%s516 + $0x28] sm:$0xff]
      %v529 = vld [vmem:[%s516 + $0x30] sm:$0xff]
      %v530 = vld [vmem:[%s516 + $0x38] sm:$0xff]
      %v531 = vld [vmem:[%s516 + $0x40] sm:$0xff]
      %v532 = vld [vmem:[%s516 + $0x48] sm:$0xff]
      %v533 = vld [vmem:[%s516 + $0x50] sm:$0xff]
      %v534 = vld [vmem:[%s516 + $0x58] sm:$0xff]
      %v535 = vld [vmem:[%s516 + $0x60] sm:$0xff]
      %v536 = vld [vmem:[%s516 + $0x68] sm:$0xff]
      %v537 = vld [vmem:[%s516 + $0x70] sm:$0xff]
      %v538 = vld [vmem:[%s516 + $0x78] sm:$0xff]
      %v539 = vpack.c.bf16 %v523, %v523
      %v540 = vpack.c.bf16 %v524, %v524
      %v541 = vpack.c.bf16 %v525, %v525
      %v542 = vpack.c.bf16 %v526, %v526
      %v543 = vpack.c.bf16 %v527, %v527
      %v544 = vpack.c.bf16 %v528, %v528
      %v545 = vpack.c.bf16 %v529, %v529
      %v546 = vpack.c.bf16 %v530, %v530
      %v547 = vpack.c.bf16 %v531, %v531
      %v548 = vpack.c.bf16 %v532, %v532
      %v549 = vpack.c.bf16 %v533, %v533
      %v550 = vpack.c.bf16 %v534, %v534
      %v551 = vpack.c.bf16 %v535, %v535
      %v552 = vpack.c.bf16 %v536, %v536
      %v553 = vpack.c.bf16 %v537, %v537
      %v554 = vpack.c.bf16 %v538, %v538
      %v555 = vld [vmem:[%s2] sm:$0x3]
      %v556 = vld [vmem:[%s1] sm:$0xff]
      %v557 = vld [vmem:[%s1 + $0x8] sm:$0xff]
      %v558 = vld [vmem:[%s1 + $0x10] sm:$0xff]
      %v559 = vld [vmem:[%s1 + $0x18] sm:$0xff]
      %v560 = vld [vmem:[%s1 + $0x20] sm:$0xff]
      %v561 = vld [vmem:[%s1 + $0x28] sm:$0xff]
      %v562 = vld [vmem:[%s1 + $0x30] sm:$0xff]
      %v563 = vld [vmem:[%s1 + $0x38] sm:$0xff]
      %v564 = vld [vmem:[%s1 + $0x40] sm:$0xff]
      %v565 = vld [vmem:[%s1 + $0x48] sm:$0xff]
      %v566 = vld [vmem:[%s1 + $0x50] sm:$0xff]
      %v567 = vld [vmem:[%s1 + $0x58] sm:$0xff]
      %v584 = vunpack.c.l.b16 %v539
      %v585 = vunpack.c.l.b16 %v540
      %v586 = vunpack.c.l.b16 %v541
      %v587 = vunpack.c.l.b16 %v542
      %v588 = vunpack.c.l.b16 %v543
      %v589 = vunpack.c.l.b16 %v544
      %v590 = vunpack.c.l.b16 %v545
      %v591 = vunpack.c.l.b16 %v546
      %v592 = vunpack.c.l.b16 %v547
      %v593 = vunpack.c.l.b16 %v548
      %v594 = vunpack.c.l.b16 %v549
      %v595 = vunpack.c.l.b16 %v550
      %v596 = vunpack.c.l.b16 %v551
      %v597 = vunpack.c.l.b16 %v552
      %v598 = vunpack.c.l.b16 %v553
      %v599 = vunpack.c.l.b16 %v554
      %v600 = vpack.c.b16 %v585, %v584
      %v601 = vpack.c.b16 %v587, %v586
      %v602 = vpack.c.b16 %v589, %v588
      %v603 = vpack.c.b16 %v591, %v590
      %v604 = vpack.c.b16 %v593, %v592
      %v605 = vpack.c.b16 %v595, %v594
      %v606 = vpack.c.b16 %v597, %v596
      %v607 = vpack.c.b16 %v599, %v598
      %v620 = vunpack.c.l.b16 %v556
      %v621 = vunpack.c.h.b16 %v556
      %v622 = vunpack.c.l.b16 %v557
      %v623 = vunpack.c.h.b16 %v557
      %v624 = vunpack.c.l.b16 %v558
      %v625 = vunpack.c.h.b16 %v558
      %v626 = vunpack.c.l.b16 %v559
      %v627 = vunpack.c.h.b16 %v559
      %v628 = vunpack.c.l.b16 %v560
      %v629 = vunpack.c.h.b16 %v560
      %v630 = vunpack.c.l.b16 %v561
      %v631 = vunpack.c.h.b16 %v561
      %v632 = vunpack.c.l.b16 %v562
      %v633 = vunpack.c.h.b16 %v562
      %v634 = vunpack.c.l.b16 %v563
      %v635 = vunpack.c.h.b16 %v563
      %v636 = vunpack.c.l.b16 %v564
      %v637 = vunpack.c.h.b16 %v564
      %v638 = vunpack.c.l.b16 %v565
      %v639 = vunpack.c.h.b16 %v565
      %v640 = vunpack.c.l.b16 %v566
      %v641 = vunpack.c.h.b16 %v566
      %v642 = vunpack.c.l.b16 %v567
      %v643 = vunpack.c.h.b16 %v567
      %v644 = vpack.c.b16 %v622, %v620
      %v645 = vpack.c.b16 %v623, %v621
      %v646 = vpack.c.b16 %v626, %v624
      %v647 = vpack.c.b16 %v627, %v625
      %v648 = vpack.c.b16 %v630, %v628
      %v649 = vpack.c.b16 %v631, %v629
      %v650 = vpack.c.b16 %v634, %v632
      %v651 = vpack.c.b16 %v635, %v633
      %v652 = vpack.c.b16 %v638, %v636
      %v653 = vpack.c.b16 %v639, %v637
      %v654 = vpack.c.b16 %v642, %v640
      %v655 = vpack.c.b16 %v643, %v641
      %vm668 = vcmask 785408
      %v670 = vsel %vm668, %v600, 0
      %v673 = vsel %vm668, %v601, 0
      %v676 = vsel %vm668, %v602, 0
      %v679 = vsel %vm668, %v603, 0
      %v682 = vsel %vm668, %v604, 0
      %v685 = vsel %vm668, %v605, 0
      %v688 = vsel %vm668, %v606, 0
      %v691 = vsel %vm668, %v607, 0
      %693 = vmatpush.bf16.msra.mxu0 0
      %694 = vmatpush.bf16.msra.mxu0 0
      %695 = vmatpush.bf16.msra.mxu0 %v654
      %696 = vmatpush.bf16.msra.mxu0 %v652
      %697 = vmatpush.bf16.msra.mxu0 %v650
      %698 = vmatpush.bf16.msra.mxu0 %v648
      %699 = vmatpush.bf16.msra.mxu0 %v646
      %700 = vmatpush.bf16.msra.mxu0 %v644
      %701 = vmatmul.bf16.gmra.mxu0 %v670
      %v702 = vpop.f32.mrf.mxu0
      %v703 = vadd.f32 0.0, %v702
      %v704 = vpop.f32.mrf.mxu0
      %v705 = vadd.f32 0.0, %v704
      %706 = vmatmul.bf16.gmra.mxu0 %v673
      %v707 = vpop.f32.mrf.mxu0
      %v708 = vadd.f32 0.0, %v707
      %v709 = vpop.f32.mrf.mxu0
      %v710 = vadd.f32 0.0, %v709
      %711 = vmatmul.bf16.gmra.mxu0 %v676
      %v712 = vpop.f32.mrf.mxu0
      %v713 = vadd.f32 0.0, %v712
      %v714 = vpop.f32.mrf.mxu0
      %v715 = vadd.f32 0.0, %v714
      %716 = vmatmul.bf16.gmra.mxu0 %v679
      %v717 = vpop.f32.mrf.mxu0
      %v718 = vadd.f32 0.0, %v717
      %v719 = vpop.f32.mrf.mxu0
      %v720 = vadd.f32 0.0, %v719
      %721 = vmatmul.bf16.gmra.mxu0 %v682
      %v722 = vpop.f32.mrf.mxu0
      %v723 = vadd.f32 0.0, %v722
      %v724 = vpop.f32.mrf.mxu0
      %v725 = vadd.f32 0.0, %v724
      %726 = vmatmul.bf16.gmra.mxu0 %v685
      %v727 = vpop.f32.mrf.mxu0
      %v728 = vadd.f32 0.0, %v727
      %v729 = vpop.f32.mrf.mxu0
      %v730 = vadd.f32 0.0, %v729
      %731 = vmatmul.bf16.gmra.mxu0 %v688
      %v732 = vpop.f32.mrf.mxu0
      %v733 = vadd.f32 0.0, %v732
      %v734 = vpop.f32.mrf.mxu0
      %v735 = vadd.f32 0.0, %v734
      %736 = vmatmul.bf16.gmra.mxu0 %v691
      %v737 = vpop.f32.mrf.mxu0
      %v738 = vadd.f32 0.0, %v737
      %v739 = vpop.f32.mrf.mxu0
      %v740 = vadd.f32 0.0, %v739
      %741 = vdwg.mxu0
      %742 = vmatpush.bf16.msra.mxu0 0
      %743 = vmatpush.bf16.msra.mxu0 0
      %744 = vmatpush.bf16.msra.mxu0 %v655
      %745 = vmatpush.bf16.msra.mxu0 %v653
      %746 = vmatpush.bf16.msra.mxu0 %v651
      %747 = vmatpush.bf16.msra.mxu0 %v649
      %748 = vmatpush.bf16.msra.mxu0 %v647
      %749 = vmatpush.bf16.msra.mxu0 %v645
      %750 = vmatmul.bf16.gmra.mxu0 %v670
      %v751 = vpop.f32.mrf.mxu0
      %v752 = vadd.f32 0.0, %v751
      %v753 = vpop.f32.mrf.mxu0
      %v754 = vadd.f32 0.0, %v753
      %755 = vmatmul.bf16.gmra.mxu0 %v673
      %v756 = vpop.f32.mrf.mxu0
      %v757 = vadd.f32 0.0, %v756
      %v758 = vpop.f32.mrf.mxu0
      %v759 = vadd.f32 0.0, %v758
      %760 = vmatmul.bf16.gmra.mxu0 %v676
      %v761 = vpop.f32.mrf.mxu0
      %v762 = vadd.f32 0.0, %v761
      %v763 = vpop.f32.mrf.mxu0
      %v764 = vadd.f32 0.0, %v763
      %765 = vmatmul.bf16.gmra.mxu0 %v679
      %v766 = vpop.f32.mrf.mxu0
      %v767 = vadd.f32 0.0, %v766
      %v768 = vpop.f32.mrf.mxu0
      %v769 = vadd.f32 0.0, %v768
      %770 = vmatmul.bf16.gmra.mxu0 %v682
      %v771 = vpop.f32.mrf.mxu0
      %v772 = vadd.f32 0.0, %v771
      %v773 = vpop.f32.mrf.mxu0
      %v774 = vadd.f32 0.0, %v773
      %775 = vmatmul.bf16.gmra.mxu0 %v685
      %v776 = vpop.f32.mrf.mxu0
      %v777 = vadd.f32 0.0, %v776
      %v778 = vpop.f32.mrf.mxu0
      %v779 = vadd.f32 0.0, %v778
      %780 = vmatmul.bf16.gmra.mxu0 %v688
      %v781 = vpop.f32.mrf.mxu0
      %v782 = vadd.f32 0.0, %v781
      %v783 = vpop.f32.mrf.mxu0
      %v784 = vadd.f32 0.0, %v783
      %785 = vmatmul.bf16.gmra.mxu0 %v691
      %v786 = vpop.f32.mrf.mxu0
      %v787 = vadd.f32 0.0, %v786
      %v788 = vpop.f32.mrf.mxu0
      %v789 = vadd.f32 0.0, %v788
      %790 = vdwg.mxu0
      %v792 = vperm.slane %v555, 0
      %v793 = vperm.slane %v555, 1
      %v796 = vadd.f32 %v792, %v703
      %v797 = vadd.f32 %v793, %v752
      %v798 = vadd.f32 %v792, %v705
      %v799 = vadd.f32 %v793, %v754
      %v800 = vadd.f32 %v792, %v708
      %v801 = vadd.f32 %v793, %v757
      %v802 = vadd.f32 %v792, %v710
      %v803 = vadd.f32 %v793, %v759
      %v804 = vadd.f32 %v792, %v713
      %v805 = vadd.f32 %v793, %v762
      %v806 = vadd.f32 %v792, %v715
      %v807 = vadd.f32 %v793, %v764
      %v808 = vadd.f32 %v792, %v718
      %v809 = vadd.f32 %v793, %v767
      %v810 = vadd.f32 %v792, %v720
      %v811 = vadd.f32 %v793, %v769
      %v812 = vadd.f32 %v792, %v723
      %v813 = vadd.f32 %v793, %v772
      %v814 = vadd.f32 %v792, %v725
      %v815 = vadd.f32 %v793, %v774
      %v816 = vadd.f32 %v792, %v728
      %v817 = vadd.f32 %v793, %v777
      %v818 = vadd.f32 %v792, %v730
      %v819 = vadd.f32 %v793, %v779
      %v820 = vadd.f32 %v792, %v733
      %v821 = vadd.f32 %v793, %v782
      %v822 = vadd.f32 %v792, %v735
      %v823 = vadd.f32 %v793, %v784
      %v824 = vadd.f32 %v792, %v738
      %v825 = vadd.f32 %v793, %v787
      %v826 = vadd.f32 %v792, %v740
      %v827 = vadd.f32 %v793, %v789
      %s828 = scalar_lea.vmem %s1, 96
      %v829 = vld [vmem:[%s828] sm:$0xff]
      %v830 = vld [vmem:[%s828 + $0x8] sm:$0xff]
      %v831 = vld [vmem:[%s828 + $0x10] sm:$0xff]
      %v832 = vld [vmem:[%s828 + $0x18] sm:$0xff]
      %v833 = vld [vmem:[%s828 + $0x20] sm:$0xff]
      %v834 = vld [vmem:[%s828 + $0x28] sm:$0xff]
      %v835 = vld [vmem:[%s828 + $0x30] sm:$0xff]
      %v836 = vld [vmem:[%s828 + $0x38] sm:$0xff]
      %v837 = vld [vmem:[%s828 + $0x40] sm:$0xff]
      %v838 = vld [vmem:[%s828 + $0x48] sm:$0xff]
      %v839 = vld [vmem:[%s828 + $0x50] sm:$0xff]
      %v840 = vld [vmem:[%s828 + $0x58] sm:$0xff]
      %vm841 = vsmask.f32 7424
      %v842 = vshrl.u32 %v600, 16
      %v844 = vshll.u32 %v600, 16
      %v846 = vrot.slane %v844, 1
      %v847 = vor.u32 %v842, %v846
      %v848 = vshll.u32 %v601, 16
      %v850 = vrot.slane %v848, 1
      %v851 = vsel %vm841, %v847, %v850
      %v852 = vshrl.u32 %v601, 16
      %v854 = vor.u32 %v852, %v850
      %v855 = vshll.u32 %v602, 16
      %v857 = vrot.slane %v855, 1
      %v858 = vsel %vm841, %v854, %v857
      %v859 = vshrl.u32 %v602, 16
      %v861 = vor.u32 %v859, %v857
      %v862 = vshll.u32 %v603, 16
      %v864 = vrot.slane %v862, 1
      %v865 = vsel %vm841, %v861, %v864
      %v866 = vshrl.u32 %v603, 16
      %v868 = vor.u32 %v866, %v864
      %v869 = vshll.u32 %v604, 16
      %v871 = vrot.slane %v869, 1
      %v872 = vsel %vm841, %v868, %v871
      %v873 = vshrl.u32 %v604, 16
      %v875 = vor.u32 %v873, %v871
      %v876 = vshll.u32 %v605, 16
      %v878 = vrot.slane %v876, 1
      %v879 = vsel %vm841, %v875, %v878
      %v880 = vshrl.u32 %v605, 16
      %v882 = vor.u32 %v880, %v878
      %v883 = vshll.u32 %v606, 16
      %v885 = vrot.slane %v883, 1
      %v886 = vsel %vm841, %v882, %v885
      %v887 = vshrl.u32 %v606, 16
      %v889 = vor.u32 %v887, %v885
      %v890 = vshll.u32 %v607, 16
      %v892 = vrot.slane %v890, 1
      %v893 = vsel %vm841, %v889, %v892
      %v894 = vshrl.u32 %v607, 16
      %v896 = vor.u32 %v894, %v892
      %v909 = vunpack.c.l.b16 %v829
      %v910 = vunpack.c.h.b16 %v829
      %v911 = vunpack.c.l.b16 %v830
      %v912 = vunpack.c.h.b16 %v830
      %v913 = vunpack.c.l.b16 %v831
      %v914 = vunpack.c.h.b16 %v831
      %v915 = vunpack.c.l.b16 %v832
      %v916 = vunpack.c.h.b16 %v832
      %v917 = vunpack.c.l.b16 %v833
      %v918 = vunpack.c.h.b16 %v833
      %v919 = vunpack.c.l.b16 %v834
      %v920 = vunpack.c.h.b16 %v834
      %v921 = vunpack.c.l.b16 %v835
      %v922 = vunpack.c.h.b16 %v835
      %v923 = vunpack.c.l.b16 %v836
      %v924 = vunpack.c.h.b16 %v836
      %v925 = vunpack.c.l.b16 %v837
      %v926 = vunpack.c.h.b16 %v837
      %v927 = vunpack.c.l.b16 %v838
      %v928 = vunpack.c.h.b16 %v838
      %v929 = vunpack.c.l.b16 %v839
      %v930 = vunpack.c.h.b16 %v839
      %v931 = vunpack.c.l.b16 %v840
      %v932 = vunpack.c.h.b16 %v840
      %v933 = vpack.c.b16 %v911, %v909
      %v934 = vpack.c.b16 %v912, %v910
      %v935 = vpack.c.b16 %v915, %v913
      %v936 = vpack.c.b16 %v916, %v914
      %v937 = vpack.c.b16 %v919, %v917
      %v938 = vpack.c.b16 %v920, %v918
      %v939 = vpack.c.b16 %v923, %v921
      %v940 = vpack.c.b16 %v924, %v922
      %v941 = vpack.c.b16 %v927, %v925
      %v942 = vpack.c.b16 %v928, %v926
      %v943 = vpack.c.b16 %v931, %v929
      %v944 = vpack.c.b16 %v932, %v930
      %v958 = vsel %vm668, %v851, 0
      %v961 = vsel %vm668, %v858, 0
      %v964 = vsel %vm668, %v865, 0
      %v967 = vsel %vm668, %v872, 0
      %v970 = vsel %vm668, %v879, 0
      %v973 = vsel %vm668, %v886, 0
      %v976 = vsel %vm668, %v893, 0
      %v979 = vsel %vm668, %v896, 0
      %981 = vmatpush.bf16.msra.mxu0 0
      %982 = vmatpush.bf16.msra.mxu0 0
      %983 = vmatpush.bf16.msra.mxu0 %v943
      %984 = vmatpush.bf16.msra.mxu0 %v941
      %985 = vmatpush.bf16.msra.mxu0 %v939
      %986 = vmatpush.bf16.msra.mxu0 %v937
      %987 = vmatpush.bf16.msra.mxu0 %v935
      %988 = vmatpush.bf16.msra.mxu0 %v933
      %989 = vmatmul.bf16.gmra.mxu0 %v958
      %v990 = vpop.f32.mrf.mxu0
      %v991 = vadd.f32 0.0, %v990
      %v992 = vpop.f32.mrf.mxu0
      %v993 = vadd.f32 0.0, %v992
      %994 = vmatmul.bf16.gmra.mxu0 %v961
      %v995 = vpop.f32.mrf.mxu0
      %v996 = vadd.f32 0.0, %v995
      %v997 = vpop.f32.mrf.mxu0
      %v998 = vadd.f32 0.0, %v997
      %999 = vmatmul.bf16.gmra.mxu0 %v964
      %v1000 = vpop.f32.mrf.mxu0
      %v1001 = vadd.f32 0.0, %v1000
      %v1002 = vpop.f32.mrf.mxu0
      %v1003 = vadd.f32 0.0, %v1002
      %1004 = vmatmul.bf16.gmra.mxu0 %v967
      %v1005 = vpop.f32.mrf.mxu0
      %v1006 = vadd.f32 0.0, %v1005
      %v1007 = vpop.f32.mrf.mxu0
      %v1008 = vadd.f32 0.0, %v1007
      %1009 = vmatmul.bf16.gmra.mxu0 %v970
      %v1010 = vpop.f32.mrf.mxu0
      %v1011 = vadd.f32 0.0, %v1010
      %v1012 = vpop.f32.mrf.mxu0
      %v1013 = vadd.f32 0.0, %v1012
      %1014 = vmatmul.bf16.gmra.mxu0 %v973
      %v1015 = vpop.f32.mrf.mxu0
      %v1016 = vadd.f32 0.0, %v1015
      %v1017 = vpop.f32.mrf.mxu0
      %v1018 = vadd.f32 0.0, %v1017
      %1019 = vmatmul.bf16.gmra.mxu0 %v976
      %v1020 = vpop.f32.mrf.mxu0
      %v1021 = vadd.f32 0.0, %v1020
      %v1022 = vpop.f32.mrf.mxu0
      %v1023 = vadd.f32 0.0, %v1022
      %1024 = vmatmul.bf16.gmra.mxu0 %v979
      %v1025 = vpop.f32.mrf.mxu0
      %v1026 = vadd.f32 0.0, %v1025
      %v1027 = vpop.f32.mrf.mxu0
      %v1028 = vadd.f32 0.0, %v1027
      %1029 = vdwg.mxu0
      %1030 = vmatpush.bf16.msra.mxu0 0
      %1031 = vmatpush.bf16.msra.mxu0 0
      %1032 = vmatpush.bf16.msra.mxu0 %v944
      %1033 = vmatpush.bf16.msra.mxu0 %v942
      %1034 = vmatpush.bf16.msra.mxu0 %v940
      %1035 = vmatpush.bf16.msra.mxu0 %v938
      %1036 = vmatpush.bf16.msra.mxu0 %v936
      %1037 = vmatpush.bf16.msra.mxu0 %v934
      %1038 = vmatmul.bf16.gmra.mxu0 %v958
      %v1039 = vpop.f32.mrf.mxu0
      %v1040 = vadd.f32 0.0, %v1039
      %v1041 = vpop.f32.mrf.mxu0
      %v1042 = vadd.f32 0.0, %v1041
      %1043 = vmatmul.bf16.gmra.mxu0 %v961
      %v1044 = vpop.f32.mrf.mxu0
      %v1045 = vadd.f32 0.0, %v1044
      %v1046 = vpop.f32.mrf.mxu0
      %v1047 = vadd.f32 0.0, %v1046
      %1048 = vmatmul.bf16.gmra.mxu0 %v964
      %v1049 = vpop.f32.mrf.mxu0
      %v1050 = vadd.f32 0.0, %v1049
      %v1051 = vpop.f32.mrf.mxu0
      %v1052 = vadd.f32 0.0, %v1051
      %1053 = vmatmul.bf16.gmra.mxu0 %v967
      %v1054 = vpop.f32.mrf.mxu0
      %v1055 = vadd.f32 0.0, %v1054
      %v1056 = vpop.f32.mrf.mxu0
      %v1057 = vadd.f32 0.0, %v1056
      %1058 = vmatmul.bf16.gmra.mxu0 %v970
      %v1059 = vpop.f32.mrf.mxu0
      %v1060 = vadd.f32 0.0, %v1059
      %v1061 = vpop.f32.mrf.mxu0
      %v1062 = vadd.f32 0.0, %v1061
      %1063 = vmatmul.bf16.gmra.mxu0 %v973
      %v1064 = vpop.f32.mrf.mxu0
      %v1065 = vadd.f32 0.0, %v1064
      %v1066 = vpop.f32.mrf.mxu0
      %v1067 = vadd.f32 0.0, %v1066
      %1068 = vmatmul.bf16.gmra.mxu0 %v976
      %v1069 = vpop.f32.mrf.mxu0
      %v1070 = vadd.f32 0.0, %v1069
      %v1071 = vpop.f32.mrf.mxu0
      %v1072 = vadd.f32 0.0, %v1071
      %1073 = vmatmul.bf16.gmra.mxu0 %v979
      %v1074 = vpop.f32.mrf.mxu0
      %v1075 = vadd.f32 0.0, %v1074
      %v1076 = vpop.f32.mrf.mxu0
      %v1077 = vadd.f32 0.0, %v1076
      %1078 = vdwg.mxu0
      %v1079 = vadd.f32 %v796, %v991
      %v1080 = vadd.f32 %v797, %v1040
      %v1081 = vadd.f32 %v798, %v993
      %v1082 = vadd.f32 %v799, %v1042
      %v1083 = vadd.f32 %v800, %v996
      %v1084 = vadd.f32 %v801, %v1045
      %v1085 = vadd.f32 %v802, %v998
      %v1086 = vadd.f32 %v803, %v1047
      %v1087 = vadd.f32 %v804, %v1001
      %v1088 = vadd.f32 %v805, %v1050
      %v1089 = vadd.f32 %v806, %v1003
      %v1090 = vadd.f32 %v807, %v1052
      %v1091 = vadd.f32 %v808, %v1006
      %v1092 = vadd.f32 %v809, %v1055
      %v1093 = vadd.f32 %v810, %v1008
      %v1094 = vadd.f32 %v811, %v1057
      %v1095 = vadd.f32 %v812, %v1011
      %v1096 = vadd.f32 %v813, %v1060
      %v1097 = vadd.f32 %v814, %v1013
      %v1098 = vadd.f32 %v815, %v1062
      %v1099 = vadd.f32 %v816, %v1016
      %v1100 = vadd.f32 %v817, %v1065
      %v1101 = vadd.f32 %v818, %v1018
      %v1102 = vadd.f32 %v819, %v1067
      %v1103 = vadd.f32 %v820, %v1021
      %v1104 = vadd.f32 %v821, %v1070
      %v1105 = vadd.f32 %v822, %v1023
      %v1106 = vadd.f32 %v823, %v1072
      %v1107 = vadd.f32 %v824, %v1026
      %v1108 = vadd.f32 %v825, %v1075
      %v1109 = vadd.f32 %v826, %v1028
      %v1110 = vadd.f32 %v827, %v1077
      %s1111 = scalar_lea.vmem %s1, 192
      %v1112 = vld [vmem:[%s1111] sm:$0xff]
      %v1113 = vld [vmem:[%s1111 + $0x8] sm:$0xff]
      %v1114 = vld [vmem:[%s1111 + $0x10] sm:$0xff]
      %v1115 = vld [vmem:[%s1111 + $0x18] sm:$0xff]
      %v1116 = vld [vmem:[%s1111 + $0x20] sm:$0xff]
      %v1117 = vld [vmem:[%s1111 + $0x28] sm:$0xff]
      %v1118 = vld [vmem:[%s1111 + $0x30] sm:$0xff]
      %v1119 = vld [vmem:[%s1111 + $0x38] sm:$0xff]
      %v1120 = vld [vmem:[%s1111 + $0x40] sm:$0xff]
      %v1121 = vld [vmem:[%s1111 + $0x48] sm:$0xff]
      %v1122 = vld [vmem:[%s1111 + $0x50] sm:$0xff]
      %v1123 = vld [vmem:[%s1111 + $0x58] sm:$0xff]
      %vm1124 = vcmask 1046528
      %v1125 = vrot.slane %v600, 1
      %v1126 = vrot.slane %v601, 1
      %v1127 = vsel %vm1124, %v1125, %v1126
      %v1128 = vrot.slane %v602, 1
      %v1129 = vsel %vm1124, %v1126, %v1128
      %v1130 = vrot.slane %v603, 1
      %v1131 = vsel %vm1124, %v1128, %v1130
      %v1132 = vrot.slane %v604, 1
      %v1133 = vsel %vm1124, %v1130, %v1132
      %v1134 = vrot.slane %v605, 1
      %v1135 = vsel %vm1124, %v1132, %v1134
      %v1136 = vrot.slane %v606, 1
      %v1137 = vsel %vm1124, %v1134, %v1136
      %v1138 = vrot.slane %v607, 1
      %v1139 = vsel %vm1124, %v1136, %v1138
      %v1152 = vunpack.c.l.b16 %v1112
      %v1153 = vunpack.c.h.b16 %v1112
      %v1154 = vunpack.c.l.b16 %v1113
      %v1155 = vunpack.c.h.b16 %v1113
      %v1156 = vunpack.c.l.b16 %v1114
      %v1157 = vunpack.c.h.b16 %v1114
      %v1158 = vunpack.c.l.b16 %v1115
      %v1159 = vunpack.c.h.b16 %v1115
      %v1160 = vunpack.c.l.b16 %v1116
      %v1161 = vunpack.c.h.b16 %v1116
      %v1162 = vunpack.c.l.b16 %v1117
      %v1163 = vunpack.c.h.b16 %v1117
      %v1164 = vunpack.c.l.b16 %v1118
      %v1165 = vunpack.c.h.b16 %v1118
      %v1166 = vunpack.c.l.b16 %v1119
      %v1167 = vunpack.c.h.b16 %v1119
      %v1168 = vunpack.c.l.b16 %v1120
      %v1169 = vunpack.c.h.b16 %v1120
      %v1170 = vunpack.c.l.b16 %v1121
      %v1171 = vunpack.c.h.b16 %v1121
      %v1172 = vunpack.c.l.b16 %v1122
      %v1173 = vunpack.c.h.b16 %v1122
      %v1174 = vunpack.c.l.b16 %v1123
      %v1175 = vunpack.c.h.b16 %v1123
      %v1176 = vpack.c.b16 %v1154, %v1152
      %v1177 = vpack.c.b16 %v1155, %v1153
      %v1178 = vpack.c.b16 %v1158, %v1156
      %v1179 = vpack.c.b16 %v1159, %v1157
      %v1180 = vpack.c.b16 %v1162, %v1160
      %v1181 = vpack.c.b16 %v1163, %v1161
      %v1182 = vpack.c.b16 %v1166, %v1164
      %v1183 = vpack.c.b16 %v1167, %v1165
      %v1184 = vpack.c.b16 %v1170, %v1168
      %v1185 = vpack.c.b16 %v1171, %v1169
      %v1186 = vpack.c.b16 %v1174, %v1172
      %v1187 = vpack.c.b16 %v1175, %v1173
      %v1201 = vsel %vm668, %v1127, 0
      %v1204 = vsel %vm668, %v1129, 0
      %v1207 = vsel %vm668, %v1131, 0
      %v1210 = vsel %vm668, %v1133, 0
      %v1213 = vsel %vm668, %v1135, 0
      %v1216 = vsel %vm668, %v1137, 0
      %v1219 = vsel %vm668, %v1139, 0
      %v1222 = vsel %vm668, %v1138, 0
      %1224 = vmatpush.bf16.msra.mxu0 0
      %1225 = vmatpush.bf16.msra.mxu0 0
      %1226 = vmatpush.bf16.msra.mxu0 %v1186
      %1227 = vmatpush.bf16.msra.mxu0 %v1184
      %1228 = vmatpush.bf16.msra.mxu0 %v1182
      %1229 = vmatpush.bf16.msra.mxu0 %v1180
      %1230 = vmatpush.bf16.msra.mxu0 %v1178
      %1231 = vmatpush.bf16.msra.mxu0 %v1176
      %1232 = vmatmul.bf16.gmra.mxu0 %v1201
      %v1233 = vpop.f32.mrf.mxu0
      %v1234 = vadd.f32 0.0, %v1233
      %v1235 = vpop.f32.mrf.mxu0
      %v1236 = vadd.f32 0.0, %v1235
      %1237 = vmatmul.bf16.gmra.mxu0 %v1204
      %v1238 = vpop.f32.mrf.mxu0
      %v1239 = vadd.f32 0.0, %v1238
      %v1240 = vpop.f32.mrf.mxu0
      %v1241 = vadd.f32 0.0, %v1240
      %1242 = vmatmul.bf16.gmra.mxu0 %v1207
      %v1243 = vpop.f32.mrf.mxu0
      %v1244 = vadd.f32 0.0, %v1243
      %v1245 = vpop.f32.mrf.mxu0
      %v1246 = vadd.f32 0.0, %v1245
      %1247 = vmatmul.bf16.gmra.mxu0 %v1210
      %v1248 = vpop.f32.mrf.mxu0
      %v1249 = vadd.f32 0.0, %v1248
      %v1250 = vpop.f32.mrf.mxu0
      %v1251 = vadd.f32 0.0, %v1250
      %1252 = vmatmul.bf16.gmra.mxu0 %v1213
      %v1253 = vpop.f32.mrf.mxu0
      %v1254 = vadd.f32 0.0, %v1253
      %v1255 = vpop.f32.mrf.mxu0
      %v1256 = vadd.f32 0.0, %v1255
      %1257 = vmatmul.bf16.gmra.mxu0 %v1216
      %v1258 = vpop.f32.mrf.mxu0
      %v1259 = vadd.f32 0.0, %v1258
      %v1260 = vpop.f32.mrf.mxu0
      %v1261 = vadd.f32 0.0, %v1260
      %1262 = vmatmul.bf16.gmra.mxu0 %v1219
      %v1263 = vpop.f32.mrf.mxu0
      %v1264 = vadd.f32 0.0, %v1263
      %v1265 = vpop.f32.mrf.mxu0
      %v1266 = vadd.f32 0.0, %v1265
      %1267 = vmatmul.bf16.gmra.mxu0 %v1222
      %v1268 = vpop.f32.mrf.mxu0
      %v1269 = vadd.f32 0.0, %v1268
      %v1270 = vpop.f32.mrf.mxu0
      %v1271 = vadd.f32 0.0, %v1270
      %1272 = vdwg.mxu0
      %1273 = vmatpush.bf16.msra.mxu0 0
      %1274 = vmatpush.bf16.msra.mxu0 0
      %1275 = vmatpush.bf16.msra.mxu0 %v1187
      %1276 = vmatpush.bf16.msra.mxu0 %v1185
      %1277 = vmatpush.bf16.msra.mxu0 %v1183
      %1278 = vmatpush.bf16.msra.mxu0 %v1181
      %1279 = vmatpush.bf16.msra.mxu0 %v1179
      %1280 = vmatpush.bf16.msra.mxu0 %v1177
      %1281 = vmatmul.bf16.gmra.mxu0 %v1201
      %v1282 = vpop.f32.mrf.mxu0
      %v1283 = vadd.f32 0.0, %v1282
      %v1284 = vpop.f32.mrf.mxu0
      %v1285 = vadd.f32 0.0, %v1284
      %1286 = vmatmul.bf16.gmra.mxu0 %v1204
      %v1287 = vpop.f32.mrf.mxu0
      %v1288 = vadd.f32 0.0, %v1287
      %v1289 = vpop.f32.mrf.mxu0
      %v1290 = vadd.f32 0.0, %v1289
      %1291 = vmatmul.bf16.gmra.mxu0 %v1207
      %v1292 = vpop.f32.mrf.mxu0
      %v1293 = vadd.f32 0.0, %v1292
      %v1294 = vpop.f32.mrf.mxu0
      %v1295 = vadd.f32 0.0, %v1294
      %1296 = vmatmul.bf16.gmra.mxu0 %v1210
      %v1297 = vpop.f32.mrf.mxu0
      %v1298 = vadd.f32 0.0, %v1297
      %v1299 = vpop.f32.mrf.mxu0
      %v1300 = vadd.f32 0.0, %v1299
      %1301 = vmatmul.bf16.gmra.mxu0 %v1213
      %v1302 = vpop.f32.mrf.mxu0
      %v1303 = vadd.f32 0.0, %v1302
      %v1304 = vpop.f32.mrf.mxu0
      %v1305 = vadd.f32 0.0, %v1304
      %1306 = vmatmul.bf16.gmra.mxu0 %v1216
      %v1307 = vpop.f32.mrf.mxu0
      %v1308 = vadd.f32 0.0, %v1307
      %v1309 = vpop.f32.mrf.mxu0
      %v1310 = vadd.f32 0.0, %v1309
      %1311 = vmatmul.bf16.gmra.mxu0 %v1219
      %v1312 = vpop.f32.mrf.mxu0
      %v1313 = vadd.f32 0.0, %v1312
      %v1314 = vpop.f32.mrf.mxu0
      %v1315 = vadd.f32 0.0, %v1314
      %1316 = vmatmul.bf16.gmra.mxu0 %v1222
      %v1317 = vpop.f32.mrf.mxu0
      %v1318 = vadd.f32 0.0, %v1317
      %v1319 = vpop.f32.mrf.mxu0
      %v1320 = vadd.f32 0.0, %v1319
      %1321 = vdwg.mxu0
      %v1322 = vadd.f32 %v1079, %v1234
      %v1323 = vadd.f32 %v1080, %v1283
      %v1324 = vadd.f32 %v1081, %v1236
      %v1325 = vadd.f32 %v1082, %v1285
      %v1326 = vadd.f32 %v1083, %v1239
      %v1327 = vadd.f32 %v1084, %v1288
      %v1328 = vadd.f32 %v1085, %v1241
      %v1329 = vadd.f32 %v1086, %v1290
      %v1330 = vadd.f32 %v1087, %v1244
      %v1331 = vadd.f32 %v1088, %v1293
      %v1332 = vadd.f32 %v1089, %v1246
      %v1333 = vadd.f32 %v1090, %v1295
      %v1334 = vadd.f32 %v1091, %v1249
      %v1335 = vadd.f32 %v1092, %v1298
      %v1336 = vadd.f32 %v1093, %v1251
      %v1337 = vadd.f32 %v1094, %v1300
      %v1338 = vadd.f32 %v1095, %v1254
      %v1339 = vadd.f32 %v1096, %v1303
      %v1340 = vadd.f32 %v1097, %v1256
      %v1341 = vadd.f32 %v1098, %v1305
      %v1342 = vadd.f32 %v1099, %v1259
      %v1343 = vadd.f32 %v1100, %v1308
      %v1344 = vadd.f32 %v1101, %v1261
      %v1345 = vadd.f32 %v1102, %v1310
      %v1346 = vadd.f32 %v1103, %v1264
      %v1347 = vadd.f32 %v1104, %v1313
      %v1348 = vadd.f32 %v1105, %v1266
      %v1349 = vadd.f32 %v1106, %v1315
      %v1350 = vadd.f32 %v1107, %v1269
      %v1351 = vadd.f32 %v1108, %v1318
      %v1352 = vadd.f32 %v1109, %v1271
      %v1353 = vadd.f32 %v1110, %v1320
      %s1354 = scalar_lea.vmem %s1, 288
      %v1355 = vld [vmem:[%s1354] sm:$0xff]
      %v1356 = vld [vmem:[%s1354 + $0x8] sm:$0xff]
      %v1357 = vld [vmem:[%s1354 + $0x10] sm:$0xff]
      %v1358 = vld [vmem:[%s1354 + $0x18] sm:$0xff]
      %v1359 = vld [vmem:[%s1354 + $0x20] sm:$0xff]
      %v1360 = vld [vmem:[%s1354 + $0x28] sm:$0xff]
      %v1361 = vld [vmem:[%s1354 + $0x30] sm:$0xff]
      %v1362 = vld [vmem:[%s1354 + $0x38] sm:$0xff]
      %v1363 = vld [vmem:[%s1354 + $0x40] sm:$0xff]
      %v1364 = vld [vmem:[%s1354 + $0x48] sm:$0xff]
      %v1365 = vld [vmem:[%s1354 + $0x50] sm:$0xff]
      %v1366 = vld [vmem:[%s1354 + $0x58] sm:$0xff]
      %vm1367 = vsmask.f32 6400
      %v1368 = vrot.slane %v842, 1
      %v1369 = vrot.slane %v844, 2
      %v1370 = vor.u32 %v1368, %v1369
      %v1371 = vrot.slane %v852, 1
      %v1372 = vrot.slane %v848, 2
      %v1373 = vor.u32 %v1371, %v1372
      %v1374 = vsel %vm1367, %v1370, %v1373
      %v1375 = vrot.slane %v859, 1
      %v1376 = vrot.slane %v855, 2
      %v1377 = vor.u32 %v1375, %v1376
      %v1378 = vsel %vm1367, %v1373, %v1377
      %v1379 = vrot.slane %v866, 1
      %v1380 = vrot.slane %v862, 2
      %v1381 = vor.u32 %v1379, %v1380
      %v1382 = vsel %vm1367, %v1377, %v1381
      %v1383 = vrot.slane %v873, 1
      %v1384 = vrot.slane %v869, 2
      %v1385 = vor.u32 %v1383, %v1384
      %v1386 = vsel %vm1367, %v1381, %v1385
      %v1387 = vrot.slane %v880, 1
      %v1388 = vrot.slane %v876, 2
      %v1389 = vor.u32 %v1387, %v1388
      %v1390 = vsel %vm1367, %v1385, %v1389
      %v1391 = vrot.slane %v887, 1
      %v1392 = vrot.slane %v883, 2
      %v1393 = vor.u32 %v1391, %v1392
      %v1394 = vsel %vm1367, %v1389, %v1393
      %v1395 = vrot.slane %v894, 1
      %v1396 = vrot.slane %v890, 2
      %v1397 = vor.u32 %v1395, %v1396
      %v1398 = vsel %vm1367, %v1393, %v1397
      %v1411 = vunpack.c.l.b16 %v1355
      %v1412 = vunpack.c.h.b16 %v1355
      %v1413 = vunpack.c.l.b16 %v1356
      %v1414 = vunpack.c.h.b16 %v1356
      %v1415 = vunpack.c.l.b16 %v1357
      %v1416 = vunpack.c.h.b16 %v1357
      %v1417 = vunpack.c.l.b16 %v1358
      %v1418 = vunpack.c.h.b16 %v1358
      %v1419 = vunpack.c.l.b16 %v1359
      %v1420 = vunpack.c.h.b16 %v1359
      %v1421 = vunpack.c.l.b16 %v1360
      %v1422 = vunpack.c.h.b16 %v1360
      %v1423 = vunpack.c.l.b16 %v1361
      %v1424 = vunpack.c.h.b16 %v1361
      %v1425 = vunpack.c.l.b16 %v1362
      %v1426 = vunpack.c.h.b16 %v1362
      %v1427 = vunpack.c.l.b16 %v1363
      %v1428 = vunpack.c.h.b16 %v1363
      %v1429 = vunpack.c.l.b16 %v1364
      %v1430 = vunpack.c.h.b16 %v1364
      %v1431 = vunpack.c.l.b16 %v1365
      %v1432 = vunpack.c.h.b16 %v1365
      %v1433 = vunpack.c.l.b16 %v1366
      %v1434 = vunpack.c.h.b16 %v1366
      %v1435 = vpack.c.b16 %v1413, %v1411
      %v1436 = vpack.c.b16 %v1414, %v1412
      %v1437 = vpack.c.b16 %v1417, %v1415
      %v1438 = vpack.c.b16 %v1418, %v1416
      %v1439 = vpack.c.b16 %v1421, %v1419
      %v1440 = vpack.c.b16 %v1422, %v1420
      %v1441 = vpack.c.b16 %v1425, %v1423
      %v1442 = vpack.c.b16 %v1426, %v1424
      %v1443 = vpack.c.b16 %v1429, %v1427
      %v1444 = vpack.c.b16 %v1430, %v1428
      %v1445 = vpack.c.b16 %v1433, %v1431
      %v1446 = vpack.c.b16 %v1434, %v1432
      %v1460 = vsel %vm668, %v1374, 0
      %v1463 = vsel %vm668, %v1378, 0
      %v1466 = vsel %vm668, %v1382, 0
      %v1469 = vsel %vm668, %v1386, 0
      %v1472 = vsel %vm668, %v1390, 0
      %v1475 = vsel %vm668, %v1394, 0
      %v1478 = vsel %vm668, %v1398, 0
      %v1481 = vsel %vm668, %v1397, 0
      %1483 = vmatpush.bf16.msra.mxu0 0
      %1484 = vmatpush.bf16.msra.mxu0 0
      %1485 = vmatpush.bf16.msra.mxu0 %v1445
      %1486 = vmatpush.bf16.msra.mxu0 %v1443
      %1487 = vmatpush.bf16.msra.mxu0 %v1441
      %1488 = vmatpush.bf16.msra.mxu0 %v1439
      %1489 = vmatpush.bf16.msra.mxu0 %v1437
      %1490 = vmatpush.bf16.msra.mxu0 %v1435
      %1491 = vmatmul.bf16.gmra.mxu0 %v1460
      %v1492 = vpop.f32.mrf.mxu0
      %v1493 = vadd.f32 0.0, %v1492
      %v1494 = vpop.f32.mrf.mxu0
      %v1495 = vadd.f32 0.0, %v1494
      %1496 = vmatmul.bf16.gmra.mxu0 %v1463
      %v1497 = vpop.f32.mrf.mxu0
      %v1498 = vadd.f32 0.0, %v1497
      %v1499 = vpop.f32.mrf.mxu0
      %v1500 = vadd.f32 0.0, %v1499
      %1501 = vmatmul.bf16.gmra.mxu0 %v1466
      %v1502 = vpop.f32.mrf.mxu0
      %v1503 = vadd.f32 0.0, %v1502
      %v1504 = vpop.f32.mrf.mxu0
      %v1505 = vadd.f32 0.0, %v1504
      %1506 = vmatmul.bf16.gmra.mxu0 %v1469
      %v1507 = vpop.f32.mrf.mxu0
      %v1508 = vadd.f32 0.0, %v1507
      %v1509 = vpop.f32.mrf.mxu0
      %v1510 = vadd.f32 0.0, %v1509
      %1511 = vmatmul.bf16.gmra.mxu0 %v1472
      %v1512 = vpop.f32.mrf.mxu0
      %v1513 = vadd.f32 0.0, %v1512
      %v1514 = vpop.f32.mrf.mxu0
      %v1515 = vadd.f32 0.0, %v1514
      %1516 = vmatmul.bf16.gmra.mxu0 %v1475
      %v1517 = vpop.f32.mrf.mxu0
      %v1518 = vadd.f32 0.0, %v1517
      %v1519 = vpop.f32.mrf.mxu0
      %v1520 = vadd.f32 0.0, %v1519
      %1521 = vmatmul.bf16.gmra.mxu0 %v1478
      %v1522 = vpop.f32.mrf.mxu0
      %v1523 = vadd.f32 0.0, %v1522
      %v1524 = vpop.f32.mrf.mxu0
      %v1525 = vadd.f32 0.0, %v1524
      %1526 = vmatmul.bf16.gmra.mxu0 %v1481
      %v1527 = vpop.f32.mrf.mxu0
      %v1528 = vadd.f32 0.0, %v1527
      %v1529 = vpop.f32.mrf.mxu0
      %v1530 = vadd.f32 0.0, %v1529
      %1531 = vdwg.mxu0
      %1532 = vmatpush.bf16.msra.mxu0 0
      %1533 = vmatpush.bf16.msra.mxu0 0
      %1534 = vmatpush.bf16.msra.mxu0 %v1446
      %1535 = vmatpush.bf16.msra.mxu0 %v1444
      %1536 = vmatpush.bf16.msra.mxu0 %v1442
      %1537 = vmatpush.bf16.msra.mxu0 %v1440
      %1538 = vmatpush.bf16.msra.mxu0 %v1438
      %1539 = vmatpush.bf16.msra.mxu0 %v1436
      %1540 = vmatmul.bf16.gmra.mxu0 %v1460
      %v1541 = vpop.f32.mrf.mxu0
      %v1542 = vadd.f32 0.0, %v1541
      %v1543 = vpop.f32.mrf.mxu0
      %v1544 = vadd.f32 0.0, %v1543
      %1545 = vmatmul.bf16.gmra.mxu0 %v1463
      %v1546 = vpop.f32.mrf.mxu0
      %v1547 = vadd.f32 0.0, %v1546
      %v1548 = vpop.f32.mrf.mxu0
      %v1549 = vadd.f32 0.0, %v1548
      %1550 = vmatmul.bf16.gmra.mxu0 %v1466
      %v1551 = vpop.f32.mrf.mxu0
      %v1552 = vadd.f32 0.0, %v1551
      %v1553 = vpop.f32.mrf.mxu0
      %v1554 = vadd.f32 0.0, %v1553
      %1555 = vmatmul.bf16.gmra.mxu0 %v1469
      %v1556 = vpop.f32.mrf.mxu0
      %v1557 = vadd.f32 0.0, %v1556
      %v1558 = vpop.f32.mrf.mxu0
      %v1559 = vadd.f32 0.0, %v1558
      %1560 = vmatmul.bf16.gmra.mxu0 %v1472
      %v1561 = vpop.f32.mrf.mxu0
      %v1562 = vadd.f32 0.0, %v1561
      %v1563 = vpop.f32.mrf.mxu0
      %v1564 = vadd.f32 0.0, %v1563
      %1565 = vmatmul.bf16.gmra.mxu0 %v1475
      %v1566 = vpop.f32.mrf.mxu0
      %v1567 = vadd.f32 0.0, %v1566
      %v1568 = vpop.f32.mrf.mxu0
      %v1569 = vadd.f32 0.0, %v1568
      %1570 = vmatmul.bf16.gmra.mxu0 %v1478
      %v1571 = vpop.f32.mrf.mxu0
      %v1572 = vadd.f32 0.0, %v1571
      %v1573 = vpop.f32.mrf.mxu0
      %v1574 = vadd.f32 0.0, %v1573
      %1575 = vmatmul.bf16.gmra.mxu0 %v1481
      %v1576 = vpop.f32.mrf.mxu0
      %v1577 = vadd.f32 0.0, %v1576
      %v1578 = vpop.f32.mrf.mxu0
      %v1579 = vadd.f32 0.0, %v1578
      %1580 = vdwg.mxu0
      %v1581 = vadd.f32 %v1322, %v1493
      %v1582 = vadd.f32 %v1323, %v1542
      %v1583 = vadd.f32 %v1324, %v1495
      %v1584 = vadd.f32 %v1325, %v1544
      %v1585 = vadd.f32 %v1326, %v1498
      %v1586 = vadd.f32 %v1327, %v1547
      %v1587 = vadd.f32 %v1328, %v1500
      %v1588 = vadd.f32 %v1329, %v1549
      %v1589 = vadd.f32 %v1330, %v1503
      %v1590 = vadd.f32 %v1331, %v1552
      %v1591 = vadd.f32 %v1332, %v1505
      %v1592 = vadd.f32 %v1333, %v1554
      %v1593 = vadd.f32 %v1334, %v1508
      %v1594 = vadd.f32 %v1335, %v1557
      %v1595 = vadd.f32 %v1336, %v1510
      %v1596 = vadd.f32 %v1337, %v1559
      %v1597 = vadd.f32 %v1338, %v1513
      %v1598 = vadd.f32 %v1339, %v1562
      %v1599 = vadd.f32 %v1340, %v1515
      %v1600 = vadd.f32 %v1341, %v1564
      %v1601 = vadd.f32 %v1342, %v1518
      %v1602 = vadd.f32 %v1343, %v1567
      %v1603 = vadd.f32 %v1344, %v1520
      %v1604 = vadd.f32 %v1345, %v1569
      %v1605 = vadd.f32 %v1346, %v1523
      %v1606 = vadd.f32 %v1347, %v1572
      %v1607 = vadd.f32 %v1348, %v1525
      %v1608 = vadd.f32 %v1349, %v1574
      %v1609 = vadd.f32 %v1350, %v1528
      %v1610 = vadd.f32 %v1351, %v1577
      %v1611 = vadd.f32 %v1352, %v1530
      %v1612 = vadd.f32 %v1353, %v1579
      %s1613 = scalar_lea.vmem %s1, 384
      %v1614 = vld [vmem:[%s1613] sm:$0xff]
      %v1615 = vld [vmem:[%s1613 + $0x8] sm:$0xff]
      %v1616 = vld [vmem:[%s1613 + $0x10] sm:$0xff]
      %v1617 = vld [vmem:[%s1613 + $0x18] sm:$0xff]
      %v1618 = vld [vmem:[%s1613 + $0x20] sm:$0xff]
      %v1619 = vld [vmem:[%s1613 + $0x28] sm:$0xff]
      %v1620 = vld [vmem:[%s1613 + $0x30] sm:$0xff]
      %v1621 = vld [vmem:[%s1613 + $0x38] sm:$0xff]
      %v1622 = vld [vmem:[%s1613 + $0x40] sm:$0xff]
      %v1623 = vld [vmem:[%s1613 + $0x48] sm:$0xff]
      %v1624 = vld [vmem:[%s1613 + $0x50] sm:$0xff]
      %v1625 = vld [vmem:[%s1613 + $0x58] sm:$0xff]
      %vm1626 = vcmask 1045504
      %v1627 = vrot.slane %v600, 2
      %v1628 = vrot.slane %v601, 2
      %v1629 = vsel %vm1626, %v1627, %v1628
      %v1630 = vrot.slane %v602, 2
      %v1631 = vsel %vm1626, %v1628, %v1630
      %v1632 = vrot.slane %v603, 2
      %v1633 = vsel %vm1626, %v1630, %v1632
      %v1634 = vrot.slane %v604, 2
      %v1635 = vsel %vm1626, %v1632, %v1634
      %v1636 = vrot.slane %v605, 2
      %v1637 = vsel %vm1626, %v1634, %v1636
      %v1638 = vrot.slane %v606, 2
      %v1639 = vsel %vm1626, %v1636, %v1638
      %v1640 = vrot.slane %v607, 2
      %v1641 = vsel %vm1626, %v1638, %v1640
      %v1654 = vunpack.c.l.b16 %v1614
      %v1655 = vunpack.c.h.b16 %v1614
      %v1656 = vunpack.c.l.b16 %v1615
      %v1657 = vunpack.c.h.b16 %v1615
      %v1658 = vunpack.c.l.b16 %v1616
      %v1659 = vunpack.c.h.b16 %v1616
      %v1660 = vunpack.c.l.b16 %v1617
      %v1661 = vunpack.c.h.b16 %v1617
      %v1662 = vunpack.c.l.b16 %v1618
      %v1663 = vunpack.c.h.b16 %v1618
      %v1664 = vunpack.c.l.b16 %v1619
      %v1665 = vunpack.c.h.b16 %v1619
      %v1666 = vunpack.c.l.b16 %v1620
      %v1667 = vunpack.c.h.b16 %v1620
      %v1668 = vunpack.c.l.b16 %v1621
      %v1669 = vunpack.c.h.b16 %v1621
      %v1670 = vunpack.c.l.b16 %v1622
      %v1671 = vunpack.c.h.b16 %v1622
      %v1672 = vunpack.c.l.b16 %v1623
      %v1673 = vunpack.c.h.b16 %v1623
      %v1674 = vunpack.c.l.b16 %v1624
      %v1675 = vunpack.c.h.b16 %v1624
      %v1676 = vunpack.c.l.b16 %v1625
      %v1677 = vunpack.c.h.b16 %v1625
      %v1678 = vpack.c.b16 %v1656, %v1654
      %v1679 = vpack.c.b16 %v1657, %v1655
      %v1680 = vpack.c.b16 %v1660, %v1658
      %v1681 = vpack.c.b16 %v1661, %v1659
      %v1682 = vpack.c.b16 %v1664, %v1662
      %v1683 = vpack.c.b16 %v1665, %v1663
      %v1684 = vpack.c.b16 %v1668, %v1666
      %v1685 = vpack.c.b16 %v1669, %v1667
      %v1686 = vpack.c.b16 %v1672, %v1670
      %v1687 = vpack.c.b16 %v1673, %v1671
      %v1688 = vpack.c.b16 %v1676, %v1674
      %v1689 = vpack.c.b16 %v1677, %v1675
      %v1703 = vsel %vm668, %v1629, 0
      %v1706 = vsel %vm668, %v1631, 0
      %v1709 = vsel %vm668, %v1633, 0
      %v1712 = vsel %vm668, %v1635, 0
      %v1715 = vsel %vm668, %v1637, 0
      %v1718 = vsel %vm668, %v1639, 0
      %v1721 = vsel %vm668, %v1641, 0
      %v1724 = vsel %vm668, %v1640, 0
      %1726 = vmatpush.bf16.msra.mxu0 0
      %1727 = vmatpush.bf16.msra.mxu0 0
      %1728 = vmatpush.bf16.msra.mxu0 %v1688
      %1729 = vmatpush.bf16.msra.mxu0 %v1686
      %1730 = vmatpush.bf16.msra.mxu0 %v1684
      %1731 = vmatpush.bf16.msra.mxu0 %v1682
      %1732 = vmatpush.bf16.msra.mxu0 %v1680
      %1733 = vmatpush.bf16.msra.mxu0 %v1678
      %1734 = vmatmul.bf16.gmra.mxu0 %v1703
      %v1735 = vpop.f32.mrf.mxu0
      %v1736 = vadd.f32 0.0, %v1735
      %v1737 = vpop.f32.mrf.mxu0
      %v1738 = vadd.f32 0.0, %v1737
      %1739 = vmatmul.bf16.gmra.mxu0 %v1706
      %v1740 = vpop.f32.mrf.mxu0
      %v1741 = vadd.f32 0.0, %v1740
      %v1742 = vpop.f32.mrf.mxu0
      %v1743 = vadd.f32 0.0, %v1742
      %1744 = vmatmul.bf16.gmra.mxu0 %v1709
      %v1745 = vpop.f32.mrf.mxu0
      %v1746 = vadd.f32 0.0, %v1745
      %v1747 = vpop.f32.mrf.mxu0
      %v1748 = vadd.f32 0.0, %v1747
      %1749 = vmatmul.bf16.gmra.mxu0 %v1712
      %v1750 = vpop.f32.mrf.mxu0
      %v1751 = vadd.f32 0.0, %v1750
      %v1752 = vpop.f32.mrf.mxu0
      %v1753 = vadd.f32 0.0, %v1752
      %1754 = vmatmul.bf16.gmra.mxu0 %v1715
      %v1755 = vpop.f32.mrf.mxu0
      %v1756 = vadd.f32 0.0, %v1755
      %v1757 = vpop.f32.mrf.mxu0
      %v1758 = vadd.f32 0.0, %v1757
      %1759 = vmatmul.bf16.gmra.mxu0 %v1718
      %v1760 = vpop.f32.mrf.mxu0
      %v1761 = vadd.f32 0.0, %v1760
      %v1762 = vpop.f32.mrf.mxu0
      %v1763 = vadd.f32 0.0, %v1762
      %1764 = vmatmul.bf16.gmra.mxu0 %v1721
      %v1765 = vpop.f32.mrf.mxu0
      %v1766 = vadd.f32 0.0, %v1765
      %v1767 = vpop.f32.mrf.mxu0
      %v1768 = vadd.f32 0.0, %v1767
      %1769 = vmatmul.bf16.gmra.mxu0 %v1724
      %v1770 = vpop.f32.mrf.mxu0
      %v1771 = vadd.f32 0.0, %v1770
      %v1772 = vpop.f32.mrf.mxu0
      %v1773 = vadd.f32 0.0, %v1772
      %1774 = vdwg.mxu0
      %1775 = vmatpush.bf16.msra.mxu0 0
      %1776 = vmatpush.bf16.msra.mxu0 0
      %1777 = vmatpush.bf16.msra.mxu0 %v1689
      %1778 = vmatpush.bf16.msra.mxu0 %v1687
      %1779 = vmatpush.bf16.msra.mxu0 %v1685
      %1780 = vmatpush.bf16.msra.mxu0 %v1683
      %1781 = vmatpush.bf16.msra.mxu0 %v1681
      %1782 = vmatpush.bf16.msra.mxu0 %v1679
      %1783 = vmatmul.bf16.gmra.mxu0 %v1703
      %v1784 = vpop.f32.mrf.mxu0
      %v1785 = vadd.f32 0.0, %v1784
      %v1786 = vpop.f32.mrf.mxu0
      %v1787 = vadd.f32 0.0, %v1786
      %1788 = vmatmul.bf16.gmra.mxu0 %v1706
      %v1789 = vpop.f32.mrf.mxu0
      %v1790 = vadd.f32 0.0, %v1789
      %v1791 = vpop.f32.mrf.mxu0
      %v1792 = vadd.f32 0.0, %v1791
      %1793 = vmatmul.bf16.gmra.mxu0 %v1709
      %v1794 = vpop.f32.mrf.mxu0
      %v1795 = vadd.f32 0.0, %v1794
      %v1796 = vpop.f32.mrf.mxu0
      %v1797 = vadd.f32 0.0, %v1796
      %1798 = vmatmul.bf16.gmra.mxu0 %v1712
      %v1799 = vpop.f32.mrf.mxu0
      %v1800 = vadd.f32 0.0, %v1799
      %v1801 = vpop.f32.mrf.mxu0
      %v1802 = vadd.f32 0.0, %v1801
      %1803 = vmatmul.bf16.gmra.mxu0 %v1715
      %v1804 = vpop.f32.mrf.mxu0
      %v1805 = vadd.f32 0.0, %v1804
      %v1806 = vpop.f32.mrf.mxu0
      %v1807 = vadd.f32 0.0, %v1806
      %1808 = vmatmul.bf16.gmra.mxu0 %v1718
      %v1809 = vpop.f32.mrf.mxu0
      %v1810 = vadd.f32 0.0, %v1809
      %v1811 = vpop.f32.mrf.mxu0
      %v1812 = vadd.f32 0.0, %v1811
      %1813 = vmatmul.bf16.gmra.mxu0 %v1721
      %v1814 = vpop.f32.mrf.mxu0
      %v1815 = vadd.f32 0.0, %v1814
      %v1816 = vpop.f32.mrf.mxu0
      %v1817 = vadd.f32 0.0, %v1816
      %1818 = vmatmul.bf16.gmra.mxu0 %v1724
      %v1819 = vpop.f32.mrf.mxu0
      %v1820 = vadd.f32 0.0, %v1819
      %v1821 = vpop.f32.mrf.mxu0
      %v1822 = vadd.f32 0.0, %v1821
      %1823 = vdwg.mxu0
      %v1824 = vadd.f32 %v1581, %v1736
      %v1825 = vadd.f32 %v1582, %v1785
      %v1826 = vadd.f32 %v1583, %v1738
      %v1827 = vadd.f32 %v1584, %v1787
      %v1828 = vadd.f32 %v1585, %v1741
      %v1829 = vadd.f32 %v1586, %v1790
      %v1830 = vadd.f32 %v1587, %v1743
      %v1831 = vadd.f32 %v1588, %v1792
      %v1832 = vadd.f32 %v1589, %v1746
      %v1833 = vadd.f32 %v1590, %v1795
      %v1834 = vadd.f32 %v1591, %v1748
      %v1835 = vadd.f32 %v1592, %v1797
      %v1836 = vadd.f32 %v1593, %v1751
      %v1837 = vadd.f32 %v1594, %v1800
      %v1838 = vadd.f32 %v1595, %v1753
      %v1839 = vadd.f32 %v1596, %v1802
      %v1840 = vadd.f32 %v1597, %v1756
      %v1841 = vadd.f32 %v1598, %v1805
      %v1842 = vadd.f32 %v1599, %v1758
      %v1843 = vadd.f32 %v1600, %v1807
      %v1844 = vadd.f32 %v1601, %v1761
      %v1845 = vadd.f32 %v1602, %v1810
      %v1846 = vadd.f32 %v1603, %v1763
      %v1847 = vadd.f32 %v1604, %v1812
      %v1848 = vadd.f32 %v1605, %v1766
      %v1849 = vadd.f32 %v1606, %v1815
      %v1850 = vadd.f32 %v1607, %v1768
      %v1851 = vadd.f32 %v1608, %v1817
      %v1852 = vadd.f32 %v1609, %v1771
      %v1853 = vadd.f32 %v1610, %v1820
      %v1854 = vadd.f32 %v1611, %v1773
      %v1855 = vadd.f32 %v1612, %v1822
      %v1856 = vtanh.pop %v1824
      %v1857 = vtanh.pop %v1825
      %v1858 = vtanh.pop %v1826
      %v1859 = vtanh.pop %v1827
      %v1860 = vtanh.pop %v1828
      %v1861 = vtanh.pop %v1829
      %v1862 = vtanh.pop %v1830
      %v1863 = vtanh.pop %v1831
      %v1864 = vtanh.pop %v1832
      %v1865 = vtanh.pop %v1833
      %v1866 = vtanh.pop %v1834
      %v1867 = vtanh.pop %v1835
      %v1868 = vtanh.pop %v1836
      %v1869 = vtanh.pop %v1837
      %v1870 = vtanh.pop %v1838
      %v1871 = vtanh.pop %v1839
      %v1872 = vtanh.pop %v1840
      %v1873 = vtanh.pop %v1841
      %v1874 = vtanh.pop %v1842
      %v1875 = vtanh.pop %v1843
      %v1876 = vtanh.pop %v1844
      %v1877 = vtanh.pop %v1845
      %v1878 = vtanh.pop %v1846
      %v1879 = vtanh.pop %v1847
      %v1880 = vtanh.pop %v1848
      %v1881 = vtanh.pop %v1849
      %v1882 = vtanh.pop %v1850
      %v1883 = vtanh.pop %v1851
      %v1884 = vtanh.pop %v1852
      %v1885 = vtanh.pop %v1853
      %v1886 = vtanh.pop %v1854
      %v1887 = vtanh.pop %v1855
      %v1888 = vld [vmem:[%s3] sm:$0xf]
      %v1889 = vld [vmem:[%s3 + $0x4] sm:$0xf]
      %v1890 = vld [vmem:[%s3 + $0x8] sm:$0xf]
      %v1891 = vld [vmem:[%s3 + $0xc] sm:$0xf]
      %v1892 = vld [vmem:[%s3 + $0x10] sm:$0xf]
      %v1893 = vld [vmem:[%s3 + $0x14] sm:$0xf]
      %v1894 = vld [vmem:[%s3 + $0x18] sm:$0xf]
      %v1895 = vpack.c.bf16 %v1858, %v1856
      %v1896 = vpack.c.bf16 %v1859, %v1857
      %v1897 = vpack.c.bf16 %v1862, %v1860
      %v1898 = vpack.c.bf16 %v1863, %v1861
      %v1899 = vpack.c.bf16 %v1866, %v1864
      %v1900 = vpack.c.bf16 %v1867, %v1865
      %v1901 = vpack.c.bf16 %v1870, %v1868
      %v1902 = vpack.c.bf16 %v1871, %v1869
      %v1903 = vpack.c.bf16 %v1874, %v1872
      %v1904 = vpack.c.bf16 %v1875, %v1873
      %v1905 = vpack.c.bf16 %v1878, %v1876
      %v1906 = vpack.c.bf16 %v1879, %v1877
      %v1907 = vpack.c.bf16 %v1882, %v1880
      %v1908 = vpack.c.bf16 %v1883, %v1881
      %v1909 = vpack.c.bf16 %v1886, %v1884
      %v1910 = vpack.c.bf16 %v1887, %v1885
      %v1918 = vunpack.c.l.b16 %v1888
      %v1919 = vunpack.c.l.b16 %v1889
      %v1920 = vunpack.c.l.b16 %v1890
      %v1921 = vunpack.c.l.b16 %v1891
      %v1922 = vunpack.c.l.b16 %v1892
      %v1923 = vunpack.c.l.b16 %v1893
      %v1924 = vunpack.c.l.b16 %v1894
      %v1925 = vpack.c.b16 %v1919, %v1918
      %v1926 = vpack.c.b16 %v1921, %v1920
      %v1927 = vpack.c.b16 %v1923, %v1922
      %v1928 = vpack.c.b16 %v1924, %v1924
      %vm1929 = vcmask 1014784
      %v1931 = vsel %vm1929, %v1925, 0
      %v1934 = vsel %vm1929, %v1926, 0
      %v1937 = vsel %vm1929, %v1927, 0
      %v1940 = vsel %vm1929, %v1928, 0
      %vm1942 = vcmask 1045504
      %v1944 = vsel %vm1942, %v1909, 0
      %v1947 = vsel %vm1942, %v1910, 0
      %1949 = vmatpush.bf16.msra.mxu0 %v1944
      %1950 = vmatpush.bf16.msra.mxu0 %v1907
      %1951 = vmatpush.bf16.msra.mxu0 %v1905
      %1952 = vmatpush.bf16.msra.mxu0 %v1903
      %1953 = vmatpush.bf16.msra.mxu0 %v1901
      %1954 = vmatpush.bf16.msra.mxu0 %v1899
      %1955 = vmatpush.bf16.msra.mxu0 %v1897
      %1956 = vmatpush.bf16.msra.mxu0 %v1895
      %1957 = vmatmul.bf16.gmra.mxu0 %v1931
      %v1958 = vpop.f32.mrf.mxu0
      %v1959 = vadd.f32 0.0, %v1958
      %v1960 = vpop.f32.mrf.mxu0
      %v1961 = vadd.f32 0.0, %v1960
      %1962 = vmatmul.bf16.gmra.mxu0 %v1934
      %v1963 = vpop.f32.mrf.mxu0
      %v1964 = vadd.f32 0.0, %v1963
      %v1965 = vpop.f32.mrf.mxu0
      %v1966 = vadd.f32 0.0, %v1965
      %1967 = vmatmul.bf16.gmra.mxu0 %v1937
      %v1968 = vpop.f32.mrf.mxu0
      %v1969 = vadd.f32 0.0, %v1968
      %v1970 = vpop.f32.mrf.mxu0
      %v1971 = vadd.f32 0.0, %v1970
      %1972 = vmatmul.bf16.gmra.mxu0 %v1940
      %v1973 = vpop.f32.mrf.mxu0
      %v1974 = vadd.f32 0.0, %v1973
      %v1975 = vpop.f32.mrf.mxu0
      %1976 = vdwg.mxu0
      %1977 = vmatpush.bf16.msra.mxu0 %v1947
      %1978 = vmatpush.bf16.msra.mxu0 %v1908
      %1979 = vmatpush.bf16.msra.mxu0 %v1906
      %1980 = vmatpush.bf16.msra.mxu0 %v1904
      %1981 = vmatpush.bf16.msra.mxu0 %v1902
      %1982 = vmatpush.bf16.msra.mxu0 %v1900
      %1983 = vmatpush.bf16.msra.mxu0 %v1898
      %1984 = vmatpush.bf16.msra.mxu0 %v1896
      %1985 = vmatmul.bf16.gmra.mxu0 %v1931
      %v1986 = vpop.f32.mrf.mxu0
      %v1987 = vadd.f32 0.0, %v1986
      %v1988 = vpop.f32.mrf.mxu0
      %v1989 = vadd.f32 0.0, %v1988
      %1990 = vmatmul.bf16.gmra.mxu0 %v1934
      %v1991 = vpop.f32.mrf.mxu0
      %v1992 = vadd.f32 0.0, %v1991
      %v1993 = vpop.f32.mrf.mxu0
      %v1994 = vadd.f32 0.0, %v1993
      %1995 = vmatmul.bf16.gmra.mxu0 %v1937
      %v1996 = vpop.f32.mrf.mxu0
      %v1997 = vadd.f32 0.0, %v1996
      %v1998 = vpop.f32.mrf.mxu0
      %v1999 = vadd.f32 0.0, %v1998
      %2000 = vmatmul.bf16.gmra.mxu0 %v1940
      %v2001 = vpop.f32.mrf.mxu0
      %v2002 = vadd.f32 0.0, %v2001
      %v2003 = vpop.f32.mrf.mxu0
      %2004 = vdwg.mxu0
      %v2005 = vpack.c.bf16 %v1961, %v1959
      %v2006 = vpack.c.bf16 %v1989, %v1987
      %v2007 = vpack.c.bf16 %v1966, %v1964
      %v2008 = vpack.c.bf16 %v1994, %v1992
      %v2009 = vpack.c.bf16 %v1971, %v1969
      %v2010 = vpack.c.bf16 %v1999, %v1997
      %v2011 = vpack.c.bf16 %v1974, %v1974
      %v2012 = vpack.c.bf16 %v2002, %v2002
      %v2013 = vld [vmem:[%s4] sm:$0xf]
      %v2014 = vld [vmem:[%s4 + $0x4] sm:$0xf]
      %v2015 = vld [vmem:[%s4 + $0x8] sm:$0xf]
      %v2016 = vld [vmem:[%s4 + $0xc] sm:$0xf]
      %v2017 = vld [vmem:[%s4 + $0x10] sm:$0xf]
      %v2018 = vld [vmem:[%s4 + $0x14] sm:$0xf]
      %v2019 = vld [vmem:[%s4 + $0x18] sm:$0xf]
      %v2020 = vld [vmem:[%s4 + $0x1c] sm:$0xf]
      %v2021 = vld [vmem:[%s4 + $0x20] sm:$0xf]
      %v2022 = vld [vmem:[%s4 + $0x24] sm:$0xf]
      %v2023 = vld [vmem:[%s4 + $0x28] sm:$0xf]
      %v2024 = vld [vmem:[%s4 + $0x2c] sm:$0xf]
      %v2025 = vld [vmem:[%s4 + $0x30] sm:$0xf]
      %v2026 = vld [vmem:[%s4 + $0x34] sm:$0xf]
      %v2027 = vld [vmem:[%s4 + $0x38] sm:$0xf]
      %v2028 = vld [vmem:[%s4 + $0x3c] sm:$0xf]
      %v2029 = vld [vmem:[%s4 + $0x40] sm:$0xf]
      %v2030 = vld [vmem:[%s4 + $0x44] sm:$0xf]
      %v2031 = vld [vmem:[%s4 + $0x48] sm:$0xf]
      %v2032 = vld [vmem:[%s4 + $0x4c] sm:$0xf]
      %v2033 = vld [vmem:[%s4 + $0x50] sm:$0xf]
      %v2055 = vunpack.c.l.b16 %v2013
      %v2056 = vunpack.c.l.b16 %v2014
      %v2057 = vunpack.c.l.b16 %v2015
      %v2058 = vunpack.c.l.b16 %v2016
      %v2059 = vunpack.c.l.b16 %v2017
      %v2060 = vunpack.c.l.b16 %v2018
      %v2061 = vunpack.c.l.b16 %v2019
      %v2062 = vunpack.c.l.b16 %v2020
      %v2063 = vunpack.c.l.b16 %v2021
      %v2064 = vunpack.c.l.b16 %v2022
      %v2065 = vunpack.c.l.b16 %v2023
      %v2066 = vunpack.c.l.b16 %v2024
      %v2067 = vunpack.c.l.b16 %v2025
      %v2068 = vunpack.c.l.b16 %v2026
      %v2069 = vunpack.c.l.b16 %v2027
      %v2070 = vunpack.c.l.b16 %v2028
      %v2071 = vunpack.c.l.b16 %v2029
      %v2072 = vunpack.c.l.b16 %v2030
      %v2073 = vunpack.c.l.b16 %v2031
      %v2074 = vunpack.c.l.b16 %v2032
      %v2075 = vunpack.c.l.b16 %v2033
      %v2076 = vpack.c.b16 %v2056, %v2055
      %v2077 = vpack.c.b16 %v2058, %v2057
      %v2078 = vpack.c.b16 %v2060, %v2059
      %v2079 = vpack.c.b16 %v2062, %v2061
      %v2080 = vpack.c.b16 %v2064, %v2063
      %v2081 = vpack.c.b16 %v2066, %v2065
      %v2082 = vpack.c.b16 %v2068, %v2067
      %v2083 = vpack.c.b16 %v2070, %v2069
      %v2084 = vpack.c.b16 %v2072, %v2071
      %v2085 = vpack.c.b16 %v2074, %v2073
      %v2086 = vpack.c.b16 %v2075, %v2075
      %vm2097 = vcmask 326656
      %v2099 = vsel %vm2097, %v2006, 0
      %v2102 = vsel %vm2097, %v2008, 0
      %v2105 = vsel %vm2097, %v2010, 0
      %v2108 = vsel %vm2097, %v2012, 0
      %vm2110 = vcmask 1043456
      %v2112 = vsel %vm2110, %v2086, 0
      %2114 = vmatpush.bf16.msra.mxu0 %v2083
      %2115 = vmatpush.bf16.msra.mxu0 %v2082
      %2116 = vmatpush.bf16.msra.mxu0 %v2081
      %2117 = vmatpush.bf16.msra.mxu0 %v2080
      %2118 = vmatpush.bf16.msra.mxu0 %v2079
      %2119 = vmatpush.bf16.msra.mxu0 %v2078
      %2120 = vmatpush.bf16.msra.mxu0 %v2077
      %2121 = vmatpush.bf16.msra.mxu0 %v2076
      %2122 = vmatmul.bf16.gmra.mxu0 %v2005
      %v2123 = vpop.f32.mrf.mxu0
      %v2124 = vadd.f32 0.0, %v2123
      %v2125 = vpop.f32.mrf.mxu0
      %v2126 = vadd.f32 0.0, %v2125
      %2127 = vmatmul.bf16.gmra.mxu0 %v2007
      %v2128 = vpop.f32.mrf.mxu0
      %v2129 = vadd.f32 0.0, %v2128
      %v2130 = vpop.f32.mrf.mxu0
      %v2131 = vadd.f32 0.0, %v2130
      %2132 = vmatmul.bf16.gmra.mxu0 %v2009
      %v2133 = vpop.f32.mrf.mxu0
      %v2134 = vadd.f32 0.0, %v2133
      %v2135 = vpop.f32.mrf.mxu0
      %v2136 = vadd.f32 0.0, %v2135
      %2137 = vmatmul.bf16.gmra.mxu0 %v2011
      %v2138 = vpop.f32.mrf.mxu0
      %v2139 = vadd.f32 0.0, %v2138
      %v2140 = vpop.f32.mrf.mxu0
      %2141 = vdwg.mxu0
      %2142 = vmatpush.bf16.msra.mxu0 0
      %2143 = vmatpush.bf16.msra.mxu0 0
      %2144 = vmatpush.bf16.msra.mxu0 0
      %2145 = vmatpush.bf16.msra.mxu0 0
      %2146 = vmatpush.bf16.msra.mxu0 0
      %2147 = vmatpush.bf16.msra.mxu0 %v2112
      %2148 = vmatpush.bf16.msra.mxu0 %v2085
      %2149 = vmatpush.bf16.msra.mxu0 %v2084
      %2150 = vmatmul.bf16.gmra.mxu0 %v2099
      %v2151 = vpop.f32.mrf.mxu0
      %v2152 = vadd.f32 %v2124, %v2151
      %v2153 = vpop.f32.mrf.mxu0
      %v2154 = vadd.f32 %v2126, %v2153
      %2155 = vmatmul.bf16.gmra.mxu0 %v2102
      %v2156 = vpop.f32.mrf.mxu0
      %v2157 = vadd.f32 %v2129, %v2156
      %v2158 = vpop.f32.mrf.mxu0
      %v2159 = vadd.f32 %v2131, %v2158
      %2160 = vmatmul.bf16.gmra.mxu0 %v2105
      %v2161 = vpop.f32.mrf.mxu0
      %v2162 = vadd.f32 %v2134, %v2161
      %v2163 = vpop.f32.mrf.mxu0
      %v2164 = vadd.f32 %v2136, %v2163
      %2165 = vmatmul.bf16.gmra.mxu0 %v2108
      %v2166 = vpop.f32.mrf.mxu0
      %v2167 = vadd.f32 %v2139, %v2166
      %v2168 = vpop.f32.mrf.mxu0
      %2169 = vdwg.mxu0
      %v2170 = vpack.c.bf16 %v2152, %v2152
      %v2171 = vpack.c.bf16 %v2154, %v2154
      %v2172 = vpack.c.bf16 %v2157, %v2157
      %v2173 = vpack.c.bf16 %v2159, %v2159
      %v2174 = vpack.c.bf16 %v2162, %v2162
      %v2175 = vpack.c.bf16 %v2164, %v2164
      %v2176 = vpack.c.bf16 %v2167, %v2167
      %v2177 = vld [vmem:[%s6] sm:$0x3]
      %v2178 = vld [vmem:[%s5] sm:$0xff]
      %v2179 = vld [vmem:[%s5 + $0x8] sm:$0xff]
      %v2180 = vld [vmem:[%s5 + $0x10] sm:$0xff]
      %v2181 = vld [vmem:[%s5 + $0x18] sm:$0xff]
      %v2182 = vld [vmem:[%s5 + $0x20] sm:$0xff]
      %v2183 = vld [vmem:[%s5 + $0x28] sm:$0xff]
      %v2184 = vld [vmem:[%s5 + $0x30] sm:$0xff]
      %v2185 = vld [vmem:[%s5 + $0x38] sm:$0xff]
      %v2186 = vld [vmem:[%s5 + $0x40] sm:$0xff]
      %v2187 = vld [vmem:[%s5 + $0x48] sm:$0xff]
      %v2188 = vld [vmem:[%s5 + $0x50] sm:$0x33]
      %v2196 = vunpack.c.l.b16 %v2170
      %v2197 = vunpack.c.l.b16 %v2171
      %v2198 = vunpack.c.l.b16 %v2172
      %v2199 = vunpack.c.l.b16 %v2173
      %v2200 = vunpack.c.l.b16 %v2174
      %v2201 = vunpack.c.l.b16 %v2175
      %v2202 = vunpack.c.l.b16 %v2176
      %v2203 = vpack.c.b16 %v2197, %v2196
      %v2204 = vpack.c.b16 %v2199, %v2198
      %v2205 = vpack.c.b16 %v2201, %v2200
      %v2206 = vpack.c.b16 %v2202, %v2202
      %v2218 = vunpack.c.l.b16 %v2178
      %v2219 = vunpack.c.h.b16 %v2178
      %v2220 = vunpack.c.l.b16 %v2179
      %v2221 = vunpack.c.h.b16 %v2179
      %v2222 = vunpack.c.l.b16 %v2180
      %v2223 = vunpack.c.h.b16 %v2180
      %v2224 = vunpack.c.l.b16 %v2181
      %v2225 = vunpack.c.h.b16 %v2181
      %v2226 = vunpack.c.l.b16 %v2182
      %v2227 = vunpack.c.h.b16 %v2182
      %v2228 = vunpack.c.l.b16 %v2183
      %v2229 = vunpack.c.h.b16 %v2183
      %v2230 = vunpack.c.l.b16 %v2184
      %v2231 = vunpack.c.h.b16 %v2184
      %v2232 = vunpack.c.l.b16 %v2185
      %v2233 = vunpack.c.h.b16 %v2185
      %v2234 = vunpack.c.l.b16 %v2186
      %v2235 = vunpack.c.h.b16 %v2186
      %v2236 = vunpack.c.l.b16 %v2187
      %v2237 = vunpack.c.h.b16 %v2187
      %v2238 = vunpack.c.l.b16 %v2188
      %v2239 = vunpack.c.h.b16 %v2188
      %v2240 = vpack.c.b16 %v2220, %v2218
      %v2241 = vpack.c.b16 %v2221, %v2219
      %v2242 = vpack.c.b16 %v2224, %v2222
      %v2243 = vpack.c.b16 %v2225, %v2223
      %v2244 = vpack.c.b16 %v2228, %v2226
      %v2245 = vpack.c.b16 %v2229, %v2227
      %v2246 = vpack.c.b16 %v2232, %v2230
      %v2247 = vpack.c.b16 %v2233, %v2231
      %v2248 = vpack.c.b16 %v2236, %v2234
      %v2249 = vpack.c.b16 %v2237, %v2235
      %v2250 = vpack.c.b16 %v2238, %v2238
      %v2251 = vpack.c.b16 %v2239, %v2239
      %vm2262 = vcmask 687104
      %v2264 = vsel %vm2262, %v2203, 0
      %v2267 = vsel %vm2262, %v2204, 0
      %v2270 = vsel %vm2262, %v2205, 0
      %v2273 = vsel %vm2262, %v2206, 0
      %vm2275 = vcmask 1041408
      %v2277 = vsel %vm2275, %v2250, 0
      %v2280 = vsel %vm2275, %v2251, 0
      %2282 = vmatpush.bf16.msra.mxu0 0
      %2283 = vmatpush.bf16.msra.mxu0 0
      %2284 = vmatpush.bf16.msra.mxu0 %v2277
      %2285 = vmatpush.bf16.msra.mxu0 %v2248
      %2286 = vmatpush.bf16.msra.mxu0 %v2246
      %2287 = vmatpush.bf16.msra.mxu0 %v2244
      %2288 = vmatpush.bf16.msra.mxu0 %v2242
      %2289 = vmatpush.bf16.msra.mxu0 %v2240
      %2290 = vmatmul.bf16.gmra.mxu0 %v2264
      %v2291 = vpop.f32.mrf.mxu0
      %v2292 = vadd.f32 0.0, %v2291
      %v2293 = vpop.f32.mrf.mxu0
      %v2294 = vadd.f32 0.0, %v2293
      %2295 = vmatmul.bf16.gmra.mxu0 %v2267
      %v2296 = vpop.f32.mrf.mxu0
      %v2297 = vadd.f32 0.0, %v2296
      %v2298 = vpop.f32.mrf.mxu0
      %v2299 = vadd.f32 0.0, %v2298
      %2300 = vmatmul.bf16.gmra.mxu0 %v2270
      %v2301 = vpop.f32.mrf.mxu0
      %v2302 = vadd.f32 0.0, %v2301
      %v2303 = vpop.f32.mrf.mxu0
      %v2304 = vadd.f32 0.0, %v2303
      %2305 = vmatmul.bf16.gmra.mxu0 %v2273
      %v2306 = vpop.f32.mrf.mxu0
      %v2307 = vadd.f32 0.0, %v2306
      %v2308 = vpop.f32.mrf.mxu0
      %2309 = vdwg.mxu0
      %2310 = vmatpush.bf16.msra.mxu0 0
      %2311 = vmatpush.bf16.msra.mxu0 0
      %2312 = vmatpush.bf16.msra.mxu0 %v2280
      %2313 = vmatpush.bf16.msra.mxu0 %v2249
      %2314 = vmatpush.bf16.msra.mxu0 %v2247
      %2315 = vmatpush.bf16.msra.mxu0 %v2245
      %2316 = vmatpush.bf16.msra.mxu0 %v2243
      %2317 = vmatpush.bf16.msra.mxu0 %v2241
      %2318 = vmatmul.bf16.gmra.mxu0 %v2264
      %v2319 = vpop.f32.mrf.mxu0
      %v2320 = vadd.f32 0.0, %v2319
      %v2321 = vpop.f32.mrf.mxu0
      %v2322 = vadd.f32 0.0, %v2321
      %2323 = vmatmul.bf16.gmra.mxu0 %v2267
      %v2324 = vpop.f32.mrf.mxu0
      %v2325 = vadd.f32 0.0, %v2324
      %v2326 = vpop.f32.mrf.mxu0
      %v2327 = vadd.f32 0.0, %v2326
      %2328 = vmatmul.bf16.gmra.mxu0 %v2270
      %v2329 = vpop.f32.mrf.mxu0
      %v2330 = vadd.f32 0.0, %v2329
      %v2331 = vpop.f32.mrf.mxu0
      %v2332 = vadd.f32 0.0, %v2331
      %2333 = vmatmul.bf16.gmra.mxu0 %v2273
      %v2334 = vpop.f32.mrf.mxu0
      %v2335 = vadd.f32 0.0, %v2334
      %v2336 = vpop.f32.mrf.mxu0
      %2337 = vdwg.mxu0
      %v2339 = vperm.slane %v2177, 0
      %v2340 = vperm.slane %v2177, 1
      %v2343 = vadd.f32 %v2339, %v2292
      %v2344 = vadd.f32 %v2340, %v2320
      %v2345 = vadd.f32 %v2339, %v2294
      %v2346 = vadd.f32 %v2340, %v2322
      %v2347 = vadd.f32 %v2339, %v2297
      %v2348 = vadd.f32 %v2340, %v2325
      %v2349 = vadd.f32 %v2339, %v2299
      %v2350 = vadd.f32 %v2340, %v2327
      %v2351 = vadd.f32 %v2339, %v2302
      %v2352 = vadd.f32 %v2340, %v2330
      %v2353 = vadd.f32 %v2339, %v2304
      %v2354 = vadd.f32 %v2340, %v2332
      %v2355 = vadd.f32 %v2339, %v2307
      %v2356 = vadd.f32 %v2340, %v2335
      %s2357 = scalar_lea.vmem %s5, 88
      %v2358 = vld [vmem:[%s2357] sm:$0xff]
      %v2359 = vld [vmem:[%s2357 + $0x8] sm:$0xff]
      %v2360 = vld [vmem:[%s2357 + $0x10] sm:$0xff]
      %v2361 = vld [vmem:[%s2357 + $0x18] sm:$0xff]
      %v2362 = vld [vmem:[%s2357 + $0x20] sm:$0xff]
      %v2363 = vld [vmem:[%s2357 + $0x28] sm:$0xff]
      %v2364 = vld [vmem:[%s2357 + $0x30] sm:$0xff]
      %v2365 = vld [vmem:[%s2357 + $0x38] sm:$0xff]
      %v2366 = vld [vmem:[%s2357 + $0x40] sm:$0xff]
      %v2367 = vld [vmem:[%s2357 + $0x48] sm:$0xff]
      %v2368 = vld [vmem:[%s2357 + $0x50] sm:$0x33]
      %v2369 = vshrl.u32 %v2203, 16
      %v2371 = vshll.u32 %v2203, 16
      %v2373 = vrot.slane %v2371, 1
      %v2374 = vor.u32 %v2369, %v2373
      %v2375 = vshll.u32 %v2204, 16
      %v2377 = vrot.slane %v2375, 1
      %v2378 = vsel %vm841, %v2374, %v2377
      %v2379 = vshrl.u32 %v2204, 16
      %v2381 = vor.u32 %v2379, %v2377
      %v2382 = vshll.u32 %v2205, 16
      %v2384 = vrot.slane %v2382, 1
      %v2385 = vsel %vm841, %v2381, %v2384
      %v2386 = vshrl.u32 %v2205, 16
      %v2388 = vor.u32 %v2386, %v2384
      %v2389 = vshll.u32 %v2206, 16
      %v2391 = vrot.slane %v2389, 1
      %v2392 = vsel %vm841, %v2388, %v2391
      %v2393 = vshrl.u32 %v2206, 16
      %v2395 = vor.u32 %v2393, %v2391
      %v2407 = vunpack.c.l.b16 %v2358
      %v2408 = vunpack.c.h.b16 %v2358
      %v2409 = vunpack.c.l.b16 %v2359
      %v2410 = vunpack.c.h.b16 %v2359
      %v2411 = vunpack.c.l.b16 %v2360
      %v2412 = vunpack.c.h.b16 %v2360
      %v2413 = vunpack.c.l.b16 %v2361
      %v2414 = vunpack.c.h.b16 %v2361
      %v2415 = vunpack.c.l.b16 %v2362
      %v2416 = vunpack.c.h.b16 %v2362
      %v2417 = vunpack.c.l.b16 %v2363
      %v2418 = vunpack.c.h.b16 %v2363
      %v2419 = vunpack.c.l.b16 %v2364
      %v2420 = vunpack.c.h.b16 %v2364
      %v2421 = vunpack.c.l.b16 %v2365
      %v2422 = vunpack.c.h.b16 %v2365
      %v2423 = vunpack.c.l.b16 %v2366
      %v2424 = vunpack.c.h.b16 %v2366
      %v2425 = vunpack.c.l.b16 %v2367
      %v2426 = vunpack.c.h.b16 %v2367
      %v2427 = vunpack.c.l.b16 %v2368
      %v2428 = vunpack.c.h.b16 %v2368
      %v2429 = vpack.c.b16 %v2409, %v2407
      %v2430 = vpack.c.b16 %v2410, %v2408
      %v2431 = vpack.c.b16 %v2413, %v2411
      %v2432 = vpack.c.b16 %v2414, %v2412
      %v2433 = vpack.c.b16 %v2417, %v2415
      %v2434 = vpack.c.b16 %v2418, %v2416
      %v2435 = vpack.c.b16 %v2421, %v2419
      %v2436 = vpack.c.b16 %v2422, %v2420
      %v2437 = vpack.c.b16 %v2425, %v2423
      %v2438 = vpack.c.b16 %v2426, %v2424
      %v2439 = vpack.c.b16 %v2427, %v2427
      %v2440 = vpack.c.b16 %v2428, %v2428
      %v2452 = vsel %vm2262, %v2378, 0
      %v2455 = vsel %vm2262, %v2385, 0
      %v2458 = vsel %vm2262, %v2392, 0
      %v2461 = vsel %vm2262, %v2395, 0
      %v2464 = vsel %vm2275, %v2439, 0
      %v2467 = vsel %vm2275, %v2440, 0
      %2469 = vmatpush.bf16.msra.mxu0 0
      %2470 = vmatpush.bf16.msra.mxu0 0
      %2471 = vmatpush.bf16.msra.mxu0 %v2464
      %2472 = vmatpush.bf16.msra.mxu0 %v2437
      %2473 = vmatpush.bf16.msra.mxu0 %v2435
      %2474 = vmatpush.bf16.msra.mxu0 %v2433
      %2475 = vmatpush.bf16.msra.mxu0 %v2431
      %2476 = vmatpush.bf16.msra.mxu0 %v2429
      %2477 = vmatmul.bf16.gmra.mxu0 %v2452
      %v2478 = vpop.f32.mrf.mxu0
      %v2479 = vadd.f32 0.0, %v2478
      %v2480 = vpop.f32.mrf.mxu0
      %v2481 = vadd.f32 0.0, %v2480
      %2482 = vmatmul.bf16.gmra.mxu0 %v2455
      %v2483 = vpop.f32.mrf.mxu0
      %v2484 = vadd.f32 0.0, %v2483
      %v2485 = vpop.f32.mrf.mxu0
      %v2486 = vadd.f32 0.0, %v2485
      %2487 = vmatmul.bf16.gmra.mxu0 %v2458
      %v2488 = vpop.f32.mrf.mxu0
      %v2489 = vadd.f32 0.0, %v2488
      %v2490 = vpop.f32.mrf.mxu0
      %v2491 = vadd.f32 0.0, %v2490
      %2492 = vmatmul.bf16.gmra.mxu0 %v2461
      %v2493 = vpop.f32.mrf.mxu0
      %v2494 = vadd.f32 0.0, %v2493
      %v2495 = vpop.f32.mrf.mxu0
      %2496 = vdwg.mxu0
      %2497 = vmatpush.bf16.msra.mxu0 0
      %2498 = vmatpush.bf16.msra.mxu0 0
      %2499 = vmatpush.bf16.msra.mxu0 %v2467
      %2500 = vmatpush.bf16.msra.mxu0 %v2438
      %2501 = vmatpush.bf16.msra.mxu0 %v2436
      %2502 = vmatpush.bf16.msra.mxu0 %v2434
      %2503 = vmatpush.bf16.msra.mxu0 %v2432
      %2504 = vmatpush.bf16.msra.mxu0 %v2430
      %2505 = vmatmul.bf16.gmra.mxu0 %v2452
      %v2506 = vpop.f32.mrf.mxu0
      %v2507 = vadd.f32 0.0, %v2506
      %v2508 = vpop.f32.mrf.mxu0
      %v2509 = vadd.f32 0.0, %v2508
      %2510 = vmatmul.bf16.gmra.mxu0 %v2455
      %v2511 = vpop.f32.mrf.mxu0
      %v2512 = vadd.f32 0.0, %v2511
      %v2513 = vpop.f32.mrf.mxu0
      %v2514 = vadd.f32 0.0, %v2513
      %2515 = vmatmul.bf16.gmra.mxu0 %v2458
      %v2516 = vpop.f32.mrf.mxu0
      %v2517 = vadd.f32 0.0, %v2516
      %v2518 = vpop.f32.mrf.mxu0
      %v2519 = vadd.f32 0.0, %v2518
      %2520 = vmatmul.bf16.gmra.mxu0 %v2461
      %v2521 = vpop.f32.mrf.mxu0
      %v2522 = vadd.f32 0.0, %v2521
      %v2523 = vpop.f32.mrf.mxu0
      %2524 = vdwg.mxu0
      %v2525 = vadd.f32 %v2343, %v2479
      %v2526 = vadd.f32 %v2344, %v2507
      %v2527 = vadd.f32 %v2345, %v2481
      %v2528 = vadd.f32 %v2346, %v2509
      %v2529 = vadd.f32 %v2347, %v2484
      %v2530 = vadd.f32 %v2348, %v2512
      %v2531 = vadd.f32 %v2349, %v2486
      %v2532 = vadd.f32 %v2350, %v2514
      %v2533 = vadd.f32 %v2351, %v2489
      %v2534 = vadd.f32 %v2352, %v2517
      %v2535 = vadd.f32 %v2353, %v2491
      %v2536 = vadd.f32 %v2354, %v2519
      %v2537 = vadd.f32 %v2355, %v2494
      %v2538 = vadd.f32 %v2356, %v2522
      %s2539 = scalar_lea.vmem %s5, 176
      %v2540 = vld [vmem:[%s2539] sm:$0xff]
      %v2541 = vld [vmem:[%s2539 + $0x8] sm:$0xff]
      %v2542 = vld [vmem:[%s2539 + $0x10] sm:$0xff]
      %v2543 = vld [vmem:[%s2539 + $0x18] sm:$0xff]
      %v2544 = vld [vmem:[%s2539 + $0x20] sm:$0xff]
      %v2545 = vld [vmem:[%s2539 + $0x28] sm:$0xff]
      %v2546 = vld [vmem:[%s2539 + $0x30] sm:$0xff]
      %v2547 = vld [vmem:[%s2539 + $0x38] sm:$0xff]
      %v2548 = vld [vmem:[%s2539 + $0x40] sm:$0xff]
      %v2549 = vld [vmem:[%s2539 + $0x48] sm:$0xff]
      %v2550 = vld [vmem:[%s2539 + $0x50] sm:$0x33]
      %v2551 = vrot.slane %v2203, 1
      %v2552 = vrot.slane %v2204, 1
      %v2553 = vsel %vm1124, %v2551, %v2552
      %v2554 = vrot.slane %v2205, 1
      %v2555 = vsel %vm1124, %v2552, %v2554
      %v2556 = vrot.slane %v2206, 1
      %v2557 = vsel %vm1124, %v2554, %v2556
      %v2569 = vunpack.c.l.b16 %v2540
      %v2570 = vunpack.c.h.b16 %v2540
      %v2571 = vunpack.c.l.b16 %v2541
      %v2572 = vunpack.c.h.b16 %v2541
      %v2573 = vunpack.c.l.b16 %v2542
      %v2574 = vunpack.c.h.b16 %v2542
      %v2575 = vunpack.c.l.b16 %v2543
      %v2576 = vunpack.c.h.b16 %v2543
      %v2577 = vunpack.c.l.b16 %v2544
      %v2578 = vunpack.c.h.b16 %v2544
      %v2579 = vunpack.c.l.b16 %v2545
      %v2580 = vunpack.c.h.b16 %v2545
      %v2581 = vunpack.c.l.b16 %v2546
      %v2582 = vunpack.c.h.b16 %v2546
      %v2583 = vunpack.c.l.b16 %v2547
      %v2584 = vunpack.c.h.b16 %v2547
      %v2585 = vunpack.c.l.b16 %v2548
      %v2586 = vunpack.c.h.b16 %v2548
      %v2587 = vunpack.c.l.b16 %v2549
      %v2588 = vunpack.c.h.b16 %v2549
      %v2589 = vunpack.c.l.b16 %v2550
      %v2590 = vunpack.c.h.b16 %v2550
      %v2591 = vpack.c.b16 %v2571, %v2569
      %v2592 = vpack.c.b16 %v2572, %v2570
      %v2593 = vpack.c.b16 %v2575, %v2573
      %v2594 = vpack.c.b16 %v2576, %v2574
      %v2595 = vpack.c.b16 %v2579, %v2577
      %v2596 = vpack.c.b16 %v2580, %v2578
      %v2597 = vpack.c.b16 %v2583, %v2581
      %v2598 = vpack.c.b16 %v2584, %v2582
      %v2599 = vpack.c.b16 %v2587, %v2585
      %v2600 = vpack.c.b16 %v2588, %v2586
      %v2601 = vpack.c.b16 %v2589, %v2589
      %v2602 = vpack.c.b16 %v2590, %v2590
      %v2614 = vsel %vm2262, %v2553, 0
      %v2617 = vsel %vm2262, %v2555, 0
      %v2620 = vsel %vm2262, %v2557, 0
      %v2623 = vsel %vm2262, %v2556, 0
      %v2626 = vsel %vm2275, %v2601, 0
      %v2629 = vsel %vm2275, %v2602, 0
      %2631 = vmatpush.bf16.msra.mxu0 0
      %2632 = vmatpush.bf16.msra.mxu0 0
      %2633 = vmatpush.bf16.msra.mxu0 %v2626
      %2634 = vmatpush.bf16.msra.mxu0 %v2599
      %2635 = vmatpush.bf16.msra.mxu0 %v2597
      %2636 = vmatpush.bf16.msra.mxu0 %v2595
      %2637 = vmatpush.bf16.msra.mxu0 %v2593
      %2638 = vmatpush.bf16.msra.mxu0 %v2591
      %2639 = vmatmul.bf16.gmra.mxu0 %v2614
      %v2640 = vpop.f32.mrf.mxu0
      %v2641 = vadd.f32 0.0, %v2640
      %v2642 = vpop.f32.mrf.mxu0
      %v2643 = vadd.f32 0.0, %v2642
      %2644 = vmatmul.bf16.gmra.mxu0 %v2617
      %v2645 = vpop.f32.mrf.mxu0
      %v2646 = vadd.f32 0.0, %v2645
      %v2647 = vpop.f32.mrf.mxu0
      %v2648 = vadd.f32 0.0, %v2647
      %2649 = vmatmul.bf16.gmra.mxu0 %v2620
      %v2650 = vpop.f32.mrf.mxu0
      %v2651 = vadd.f32 0.0, %v2650
      %v2652 = vpop.f32.mrf.mxu0
      %v2653 = vadd.f32 0.0, %v2652
      %2654 = vmatmul.bf16.gmra.mxu0 %v2623
      %v2655 = vpop.f32.mrf.mxu0
      %v2656 = vadd.f32 0.0, %v2655
      %v2657 = vpop.f32.mrf.mxu0
      %2658 = vdwg.mxu0
      %2659 = vmatpush.bf16.msra.mxu0 0
      %2660 = vmatpush.bf16.msra.mxu0 0
      %2661 = vmatpush.bf16.msra.mxu0 %v2629
      %2662 = vmatpush.bf16.msra.mxu0 %v2600
      %2663 = vmatpush.bf16.msra.mxu0 %v2598
      %2664 = vmatpush.bf16.msra.mxu0 %v2596
      %2665 = vmatpush.bf16.msra.mxu0 %v2594
      %2666 = vmatpush.bf16.msra.mxu0 %v2592
      %2667 = vmatmul.bf16.gmra.mxu0 %v2614
      %v2668 = vpop.f32.mrf.mxu0
      %v2669 = vadd.f32 0.0, %v2668
      %v2670 = vpop.f32.mrf.mxu0
      %v2671 = vadd.f32 0.0, %v2670
      %2672 = vmatmul.bf16.gmra.mxu0 %v2617
      %v2673 = vpop.f32.mrf.mxu0
      %v2674 = vadd.f32 0.0, %v2673
      %v2675 = vpop.f32.mrf.mxu0
      %v2676 = vadd.f32 0.0, %v2675
      %2677 = vmatmul.bf16.gmra.mxu0 %v2620
      %v2678 = vpop.f32.mrf.mxu0
      %v2679 = vadd.f32 0.0, %v2678
      %v2680 = vpop.f32.mrf.mxu0
      %v2681 = vadd.f32 0.0, %v2680
      %2682 = vmatmul.bf16.gmra.mxu0 %v2623
      %v2683 = vpop.f32.mrf.mxu0
      %v2684 = vadd.f32 0.0, %v2683
      %v2685 = vpop.f32.mrf.mxu0
      %2686 = vdwg.mxu0
      %v2687 = vadd.f32 %v2525, %v2641
      %v2688 = vadd.f32 %v2526, %v2669
      %v2689 = vadd.f32 %v2527, %v2643
      %v2690 = vadd.f32 %v2528, %v2671
      %v2691 = vadd.f32 %v2529, %v2646
      %v2692 = vadd.f32 %v2530, %v2674
      %v2693 = vadd.f32 %v2531, %v2648
      %v2694 = vadd.f32 %v2532, %v2676
      %v2695 = vadd.f32 %v2533, %v2651
      %v2696 = vadd.f32 %v2534, %v2679
      %v2697 = vadd.f32 %v2535, %v2653
      %v2698 = vadd.f32 %v2536, %v2681
      %v2699 = vadd.f32 %v2537, %v2656
      %v2700 = vadd.f32 %v2538, %v2684
      %s2701 = scalar_lea.vmem %s5, 264
      %v2702 = vld [vmem:[%s2701] sm:$0xff]
      %v2703 = vld [vmem:[%s2701 + $0x8] sm:$0xff]
      %v2704 = vld [vmem:[%s2701 + $0x10] sm:$0xff]
      %v2705 = vld [vmem:[%s2701 + $0x18] sm:$0xff]
      %v2706 = vld [vmem:[%s2701 + $0x20] sm:$0xff]
      %v2707 = vld [vmem:[%s2701 + $0x28] sm:$0xff]
      %v2708 = vld [vmem:[%s2701 + $0x30] sm:$0xff]
      %v2709 = vld [vmem:[%s2701 + $0x38] sm:$0xff]
      %v2710 = vld [vmem:[%s2701 + $0x40] sm:$0xff]
      %v2711 = vld [vmem:[%s2701 + $0x48] sm:$0xff]
      %v2712 = vld [vmem:[%s2701 + $0x50] sm:$0x33]
      %v2713 = vrot.slane %v2369, 1
      %v2714 = vrot.slane %v2371, 2
      %v2715 = vor.u32 %v2713, %v2714
      %v2716 = vrot.slane %v2379, 1
      %v2717 = vrot.slane %v2375, 2
      %v2718 = vor.u32 %v2716, %v2717
      %v2719 = vsel %vm1367, %v2715, %v2718
      %v2720 = vrot.slane %v2386, 1
      %v2721 = vrot.slane %v2382, 2
      %v2722 = vor.u32 %v2720, %v2721
      %v2723 = vsel %vm1367, %v2718, %v2722
      %v2724 = vrot.slane %v2393, 1
      %v2725 = vrot.slane %v2389, 2
      %v2726 = vor.u32 %v2724, %v2725
      %v2727 = vsel %vm1367, %v2722, %v2726
      %v2739 = vunpack.c.l.b16 %v2702
      %v2740 = vunpack.c.h.b16 %v2702
      %v2741 = vunpack.c.l.b16 %v2703
      %v2742 = vunpack.c.h.b16 %v2703
      %v2743 = vunpack.c.l.b16 %v2704
      %v2744 = vunpack.c.h.b16 %v2704
      %v2745 = vunpack.c.l.b16 %v2705
      %v2746 = vunpack.c.h.b16 %v2705
      %v2747 = vunpack.c.l.b16 %v2706
      %v2748 = vunpack.c.h.b16 %v2706
      %v2749 = vunpack.c.l.b16 %v2707
      %v2750 = vunpack.c.h.b16 %v2707
      %v2751 = vunpack.c.l.b16 %v2708
      %v2752 = vunpack.c.h.b16 %v2708
      %v2753 = vunpack.c.l.b16 %v2709
      %v2754 = vunpack.c.h.b16 %v2709
      %v2755 = vunpack.c.l.b16 %v2710
      %v2756 = vunpack.c.h.b16 %v2710
      %v2757 = vunpack.c.l.b16 %v2711
      %v2758 = vunpack.c.h.b16 %v2711
      %v2759 = vunpack.c.l.b16 %v2712
      %v2760 = vunpack.c.h.b16 %v2712
      %v2761 = vpack.c.b16 %v2741, %v2739
      %v2762 = vpack.c.b16 %v2742, %v2740
      %v2763 = vpack.c.b16 %v2745, %v2743
      %v2764 = vpack.c.b16 %v2746, %v2744
      %v2765 = vpack.c.b16 %v2749, %v2747
      %v2766 = vpack.c.b16 %v2750, %v2748
      %v2767 = vpack.c.b16 %v2753, %v2751
      %v2768 = vpack.c.b16 %v2754, %v2752
      %v2769 = vpack.c.b16 %v2757, %v2755
      %v2770 = vpack.c.b16 %v2758, %v2756
      %v2771 = vpack.c.b16 %v2759, %v2759
      %v2772 = vpack.c.b16 %v2760, %v2760
      %v2784 = vsel %vm2262, %v2719, 0
      %v2787 = vsel %vm2262, %v2723, 0
      %v2790 = vsel %vm2262, %v2727, 0
      %v2793 = vsel %vm2262, %v2726, 0
      %v2796 = vsel %vm2275, %v2771, 0
      %v2799 = vsel %vm2275, %v2772, 0
      %2801 = vmatpush.bf16.msra.mxu0 0
      %2802 = vmatpush.bf16.msra.mxu0 0
      %2803 = vmatpush.bf16.msra.mxu0 %v2796
      %2804 = vmatpush.bf16.msra.mxu0 %v2769
      %2805 = vmatpush.bf16.msra.mxu0 %v2767
      %2806 = vmatpush.bf16.msra.mxu0 %v2765
      %2807 = vmatpush.bf16.msra.mxu0 %v2763
      %2808 = vmatpush.bf16.msra.mxu0 %v2761
      %2809 = vmatmul.bf16.gmra.mxu0 %v2784
      %v2810 = vpop.f32.mrf.mxu0
      %v2811 = vadd.f32 0.0, %v2810
      %v2812 = vpop.f32.mrf.mxu0
      %v2813 = vadd.f32 0.0, %v2812
      %2814 = vmatmul.bf16.gmra.mxu0 %v2787
      %v2815 = vpop.f32.mrf.mxu0
      %v2816 = vadd.f32 0.0, %v2815
      %v2817 = vpop.f32.mrf.mxu0
      %v2818 = vadd.f32 0.0, %v2817
      %2819 = vmatmul.bf16.gmra.mxu0 %v2790
      %v2820 = vpop.f32.mrf.mxu0
      %v2821 = vadd.f32 0.0, %v2820
      %v2822 = vpop.f32.mrf.mxu0
      %v2823 = vadd.f32 0.0, %v2822
      %2824 = vmatmul.bf16.gmra.mxu0 %v2793
      %v2825 = vpop.f32.mrf.mxu0
      %v2826 = vadd.f32 0.0, %v2825
      %v2827 = vpop.f32.mrf.mxu0
      %2828 = vdwg.mxu0
      %2829 = vmatpush.bf16.msra.mxu0 0
      %2830 = vmatpush.bf16.msra.mxu0 0
      %2831 = vmatpush.bf16.msra.mxu0 %v2799
      %2832 = vmatpush.bf16.msra.mxu0 %v2770
      %2833 = vmatpush.bf16.msra.mxu0 %v2768
      %2834 = vmatpush.bf16.msra.mxu0 %v2766
      %2835 = vmatpush.bf16.msra.mxu0 %v2764
      %2836 = vmatpush.bf16.msra.mxu0 %v2762
      %2837 = vmatmul.bf16.gmra.mxu0 %v2784
      %v2838 = vpop.f32.mrf.mxu0
      %v2839 = vadd.f32 0.0, %v2838
      %v2840 = vpop.f32.mrf.mxu0
      %v2841 = vadd.f32 0.0, %v2840
      %2842 = vmatmul.bf16.gmra.mxu0 %v2787
      %v2843 = vpop.f32.mrf.mxu0
      %v2844 = vadd.f32 0.0, %v2843
      %v2845 = vpop.f32.mrf.mxu0
      %v2846 = vadd.f32 0.0, %v2845
      %2847 = vmatmul.bf16.gmra.mxu0 %v2790
      %v2848 = vpop.f32.mrf.mxu0
      %v2849 = vadd.f32 0.0, %v2848
      %v2850 = vpop.f32.mrf.mxu0
      %v2851 = vadd.f32 0.0, %v2850
      %2852 = vmatmul.bf16.gmra.mxu0 %v2793
      %v2853 = vpop.f32.mrf.mxu0
      %v2854 = vadd.f32 0.0, %v2853
      %v2855 = vpop.f32.mrf.mxu0
      %2856 = vdwg.mxu0
      %v2857 = vadd.f32 %v2687, %v2811
      %v2858 = vadd.f32 %v2688, %v2839
      %v2859 = vadd.f32 %v2689, %v2813
      %v2860 = vadd.f32 %v2690, %v2841
      %v2861 = vadd.f32 %v2691, %v2816
      %v2862 = vadd.f32 %v2692, %v2844
      %v2863 = vadd.f32 %v2693, %v2818
      %v2864 = vadd.f32 %v2694, %v2846
      %v2865 = vadd.f32 %v2695, %v2821
      %v2866 = vadd.f32 %v2696, %v2849
      %v2867 = vadd.f32 %v2697, %v2823
      %v2868 = vadd.f32 %v2698, %v2851
      %v2869 = vadd.f32 %v2699, %v2826
      %v2870 = vadd.f32 %v2700, %v2854
      %s2871 = scalar_lea.vmem %s5, 352
      %v2872 = vld [vmem:[%s2871] sm:$0xff]
      %v2873 = vld [vmem:[%s2871 + $0x8] sm:$0xff]
      %v2874 = vld [vmem:[%s2871 + $0x10] sm:$0xff]
      %v2875 = vld [vmem:[%s2871 + $0x18] sm:$0xff]
      %v2876 = vld [vmem:[%s2871 + $0x20] sm:$0xff]
      %v2877 = vld [vmem:[%s2871 + $0x28] sm:$0xff]
      %v2878 = vld [vmem:[%s2871 + $0x30] sm:$0xff]
      %v2879 = vld [vmem:[%s2871 + $0x38] sm:$0xff]
      %v2880 = vld [vmem:[%s2871 + $0x40] sm:$0xff]
      %v2881 = vld [vmem:[%s2871 + $0x48] sm:$0xff]
      %v2882 = vld [vmem:[%s2871 + $0x50] sm:$0x33]
      %v2883 = vrot.slane %v2203, 2
      %v2884 = vrot.slane %v2204, 2
      %v2885 = vsel %vm1626, %v2883, %v2884
      %v2886 = vrot.slane %v2205, 2
      %v2887 = vsel %vm1626, %v2884, %v2886
      %v2888 = vrot.slane %v2206, 2
      %v2889 = vsel %vm1626, %v2886, %v2888
      %v2901 = vunpack.c.l.b16 %v2872
      %v2902 = vunpack.c.h.b16 %v2872
      %v2903 = vunpack.c.l.b16 %v2873
      %v2904 = vunpack.c.h.b16 %v2873
      %v2905 = vunpack.c.l.b16 %v2874
      %v2906 = vunpack.c.h.b16 %v2874
      %v2907 = vunpack.c.l.b16 %v2875
      %v2908 = vunpack.c.h.b16 %v2875
      %v2909 = vunpack.c.l.b16 %v2876
      %v2910 = vunpack.c.h.b16 %v2876
      %v2911 = vunpack.c.l.b16 %v2877
      %v2912 = vunpack.c.h.b16 %v2877
      %v2913 = vunpack.c.l.b16 %v2878
      %v2914 = vunpack.c.h.b16 %v2878
      %v2915 = vunpack.c.l.b16 %v2879
      %v2916 = vunpack.c.h.b16 %v2879
      %v2917 = vunpack.c.l.b16 %v2880
      %v2918 = vunpack.c.h.b16 %v2880
      %v2919 = vunpack.c.l.b16 %v2881
      %v2920 = vunpack.c.h.b16 %v2881
      %v2921 = vunpack.c.l.b16 %v2882
      %v2922 = vunpack.c.h.b16 %v2882
      %v2923 = vpack.c.b16 %v2903, %v2901
      %v2924 = vpack.c.b16 %v2904, %v2902
      %v2925 = vpack.c.b16 %v2907, %v2905
      %v2926 = vpack.c.b16 %v2908, %v2906
      %v2927 = vpack.c.b16 %v2911, %v2909
      %v2928 = vpack.c.b16 %v2912, %v2910
      %v2929 = vpack.c.b16 %v2915, %v2913
      %v2930 = vpack.c.b16 %v2916, %v2914
      %v2931 = vpack.c.b16 %v2919, %v2917
      %v2932 = vpack.c.b16 %v2920, %v2918
      %v2933 = vpack.c.b16 %v2921, %v2921
      %v2934 = vpack.c.b16 %v2922, %v2922
      %v2946 = vsel %vm2262, %v2885, 0
      %v2949 = vsel %vm2262, %v2887, 0
      %v2952 = vsel %vm2262, %v2889, 0
      %v2955 = vsel %vm2262, %v2888, 0
      %v2958 = vsel %vm2275, %v2933, 0
      %v2961 = vsel %vm2275, %v2934, 0
      %2963 = vmatpush.bf16.msra.mxu0 0
      %2964 = vmatpush.bf16.msra.mxu0 0
      %2965 = vmatpush.bf16.msra.mxu0 %v2958
      %2966 = vmatpush.bf16.msra.mxu0 %v2931
      %2967 = vmatpush.bf16.msra.mxu0 %v2929
      %2968 = vmatpush.bf16.msra.mxu0 %v2927
      %2969 = vmatpush.bf16.msra.mxu0 %v2925
      %2970 = vmatpush.bf16.msra.mxu0 %v2923
      %2971 = vmatmul.bf16.gmra.mxu0 %v2946
      %v2972 = vpop.f32.mrf.mxu0
      %v2973 = vadd.f32 0.0, %v2972
      %v2974 = vpop.f32.mrf.mxu0
      %v2975 = vadd.f32 0.0, %v2974
      %2976 = vmatmul.bf16.gmra.mxu0 %v2949
      %v2977 = vpop.f32.mrf.mxu0
      %v2978 = vadd.f32 0.0, %v2977
      %v2979 = vpop.f32.mrf.mxu0
      %v2980 = vadd.f32 0.0, %v2979
      %2981 = vmatmul.bf16.gmra.mxu0 %v2952
      %v2982 = vpop.f32.mrf.mxu0
      %v2983 = vadd.f32 0.0, %v2982
      %v2984 = vpop.f32.mrf.mxu0
      %v2985 = vadd.f32 0.0, %v2984
      %2986 = vmatmul.bf16.gmra.mxu0 %v2955
      %v2987 = vpop.f32.mrf.mxu0
      %v2988 = vadd.f32 0.0, %v2987
      %v2989 = vpop.f32.mrf.mxu0
      %2990 = vdwg.mxu0
      %2991 = vmatpush.bf16.msra.mxu0 0
      %2992 = vmatpush.bf16.msra.mxu0 0
      %2993 = vmatpush.bf16.msra.mxu0 %v2961
      %2994 = vmatpush.bf16.msra.mxu0 %v2932
      %2995 = vmatpush.bf16.msra.mxu0 %v2930
      %2996 = vmatpush.bf16.msra.mxu0 %v2928
      %2997 = vmatpush.bf16.msra.mxu0 %v2926
      %2998 = vmatpush.bf16.msra.mxu0 %v2924
      %2999 = vmatmul.bf16.gmra.mxu0 %v2946
      %v3000 = vpop.f32.mrf.mxu0
      %v3001 = vadd.f32 0.0, %v3000
      %v3002 = vpop.f32.mrf.mxu0
      %v3003 = vadd.f32 0.0, %v3002
      %3004 = vmatmul.bf16.gmra.mxu0 %v2949
      %v3005 = vpop.f32.mrf.mxu0
      %v3006 = vadd.f32 0.0, %v3005
      %v3007 = vpop.f32.mrf.mxu0
      %v3008 = vadd.f32 0.0, %v3007
      %3009 = vmatmul.bf16.gmra.mxu0 %v2952
      %v3010 = vpop.f32.mrf.mxu0
      %v3011 = vadd.f32 0.0, %v3010
      %v3012 = vpop.f32.mrf.mxu0
      %v3013 = vadd.f32 0.0, %v3012
      %3014 = vmatmul.bf16.gmra.mxu0 %v2955
      %v3015 = vpop.f32.mrf.mxu0
      %v3016 = vadd.f32 0.0, %v3015
      %v3017 = vpop.f32.mrf.mxu0
      %3018 = vdwg.mxu0
      %v3019 = vadd.f32 %v2857, %v2973
      %v3020 = vadd.f32 %v2858, %v3001
      %v3021 = vadd.f32 %v2859, %v2975
      %v3022 = vadd.f32 %v2860, %v3003
      %v3023 = vadd.f32 %v2861, %v2978
      %v3024 = vadd.f32 %v2862, %v3006
      %v3025 = vadd.f32 %v2863, %v2980
      %v3026 = vadd.f32 %v2864, %v3008
      %v3027 = vadd.f32 %v2865, %v2983
      %v3028 = vadd.f32 %v2866, %v3011
      %v3029 = vadd.f32 %v2867, %v2985
      %v3030 = vadd.f32 %v2868, %v3013
      %v3031 = vadd.f32 %v2869, %v2988
      %v3032 = vadd.f32 %v2870, %v3016
      %v3033 = vtanh.pop %v3019
      %v3034 = vtanh.pop %v3020
      %v3035 = vtanh.pop %v3021
      %v3036 = vtanh.pop %v3022
      %v3037 = vtanh.pop %v3023
      %v3038 = vtanh.pop %v3024
      %v3039 = vtanh.pop %v3025
      %v3040 = vtanh.pop %v3026
      %v3041 = vtanh.pop %v3027
      %v3042 = vtanh.pop %v3028
      %v3043 = vtanh.pop %v3029
      %v3044 = vtanh.pop %v3030
      %v3045 = vtanh.pop %v3031
      %v3046 = vtanh.pop %v3032
      %v3047 = vld [vmem:[%s7] sm:$0xf]
      %v3048 = vld [vmem:[%s7 + $0x4] sm:$0xf]
      %v3049 = vld [vmem:[%s7 + $0x8] sm:$0x3]
      %v3050 = vpack.c.bf16 %v3035, %v3033
      %v3051 = vpack.c.bf16 %v3036, %v3034
      %v3052 = vpack.c.bf16 %v3039, %v3037
      %v3053 = vpack.c.bf16 %v3040, %v3038
      %v3054 = vpack.c.bf16 %v3043, %v3041
      %v3055 = vpack.c.bf16 %v3044, %v3042
      %v3056 = vpack.c.bf16 %v3045, %v3045
      %v3057 = vpack.c.bf16 %v3046, %v3046
      %v3061 = vunpack.c.l.b16 %v3047
      %v3062 = vunpack.c.l.b16 %v3048
      %v3063 = vunpack.c.l.b16 %v3049
      %v3064 = vpack.c.b16 %v3062, %v3061
      %v3065 = vpack.c.b16 %v3063, %v3063
      %vm3066 = vcmask 424960
      %v3068 = vsel %vm3066, %v3064, 0
      %v3071 = vsel %vm3066, %v3065, 0
      %v3074 = vsel %vm2275, %v3056, 0
      %v3077 = vsel %vm2275, %v3057, 0
      %3079 = vmatpush.bf16.msra.mxu0 0
      %3080 = vmatpush.bf16.msra.mxu0 0
      %3081 = vmatpush.bf16.msra.mxu0 0
      %3082 = vmatpush.bf16.msra.mxu0 0
      %3083 = vmatpush.bf16.msra.mxu0 %v3074
      %3084 = vmatpush.bf16.msra.mxu0 %v3054
      %3085 = vmatpush.bf16.msra.mxu0 %v3052
      %3086 = vmatpush.bf16.msra.mxu0 %v3050
      %3087 = vmatmul.bf16.gmra.mxu0 %v3068
      %v3088 = vpop.f32.mrf.mxu0
      %v3089 = vadd.f32 0.0, %v3088
      %v3090 = vpop.f32.mrf.mxu0
      %v3091 = vadd.f32 0.0, %v3090
      %3092 = vmatmul.bf16.gmra.mxu0 %v3071
      %v3093 = vpop.f32.mrf.mxu0
      %v3094 = vadd.f32 0.0, %v3093
      %v3095 = vpop.f32.mrf.mxu0
      %3096 = vdwg.mxu0
      %3097 = vmatpush.bf16.msra.mxu0 0
      %3098 = vmatpush.bf16.msra.mxu0 0
      %3099 = vmatpush.bf16.msra.mxu0 0
      %3100 = vmatpush.bf16.msra.mxu0 0
      %3101 = vmatpush.bf16.msra.mxu0 %v3077
      %3102 = vmatpush.bf16.msra.mxu0 %v3055
      %3103 = vmatpush.bf16.msra.mxu0 %v3053
      %3104 = vmatpush.bf16.msra.mxu0 %v3051
      %3105 = vmatmul.bf16.gmra.mxu0 %v3068
      %v3106 = vpop.f32.mrf.mxu0
      %v3107 = vadd.f32 0.0, %v3106
      %v3108 = vpop.f32.mrf.mxu0
      %v3109 = vadd.f32 0.0, %v3108
      %3110 = vmatmul.bf16.gmra.mxu0 %v3071
      %v3111 = vpop.f32.mrf.mxu0
      %v3112 = vadd.f32 0.0, %v3111
      %v3113 = vpop.f32.mrf.mxu0
      %3114 = vdwg.mxu0
      %v3115 = vpack.c.bf16 %v3091, %v3089
      %v3116 = vpack.c.bf16 %v3109, %v3107
      %v3117 = vpack.c.bf16 %v3094, %v3094
      %v3118 = vpack.c.bf16 %v3112, %v3112
      %v3119 = vld [vmem:[%s8] sm:$0xf]
      %v3120 = vld [vmem:[%s8 + $0x4] sm:$0xf]
      %v3121 = vld [vmem:[%s8 + $0x8] sm:$0xf]
      %v3122 = vld [vmem:[%s8 + $0xc] sm:$0xf]
      %v3123 = vld [vmem:[%s8 + $0x10] sm:$0xf]
      %v3124 = vld [vmem:[%s8 + $0x14] sm:$0xf]
      %v3125 = vld [vmem:[%s8 + $0x18] sm:$0xf]
      %v3126 = vld [vmem:[%s8 + $0x1c] sm:$0xf]
      %v3127 = vld [vmem:[%s8 + $0x20] sm:$0xf]
      %v3128 = vld [vmem:[%s8 + $0x24] sm:$0xf]
      %v3129 = vld [vmem:[%s8 + $0x28] sm:$0xf]
      %v3130 = vld [vmem:[%s8 + $0x2c] sm:$0xf]
      %v3131 = vld [vmem:[%s8 + $0x30] sm:$0xf]
      %v3132 = vld [vmem:[%s8 + $0x34] sm:$0xf]
      %v3133 = vld [vmem:[%s8 + $0x38] sm:$0xf]
      %v3134 = vld [vmem:[%s8 + $0x3c] sm:$0xf]
      %v3135 = vld [vmem:[%s8 + $0x40] sm:$0xf]
      %v3136 = vld [vmem:[%s8 + $0x44] sm:$0xf]
      %v3137 = vld [vmem:[%s8 + $0x48] sm:$0xf]
      %v3138 = vld [vmem:[%s8 + $0x4c] sm:$0xf]
      %v3159 = vunpack.c.l.b16 %v3119
      %v3160 = vunpack.c.l.b16 %v3120
      %v3161 = vunpack.c.l.b16 %v3121
      %v3162 = vunpack.c.l.b16 %v3122
      %v3163 = vunpack.c.l.b16 %v3123
      %v3164 = vunpack.c.l.b16 %v3124
      %v3165 = vunpack.c.l.b16 %v3125
      %v3166 = vunpack.c.l.b16 %v3126
      %v3167 = vunpack.c.l.b16 %v3127
      %v3168 = vunpack.c.l.b16 %v3128
      %v3169 = vunpack.c.l.b16 %v3129
      %v3170 = vunpack.c.l.b16 %v3130
      %v3171 = vunpack.c.l.b16 %v3131
      %v3172 = vunpack.c.l.b16 %v3132
      %v3173 = vunpack.c.l.b16 %v3133
      %v3174 = vunpack.c.l.b16 %v3134
      %v3175 = vunpack.c.l.b16 %v3135
      %v3176 = vunpack.c.l.b16 %v3136
      %v3177 = vunpack.c.l.b16 %v3137
      %v3178 = vunpack.c.l.b16 %v3138
      %v3179 = vpack.c.b16 %v3160, %v3159
      %v3180 = vpack.c.b16 %v3162, %v3161
      %v3181 = vpack.c.b16 %v3164, %v3163
      %v3182 = vpack.c.b16 %v3166, %v3165
      %v3183 = vpack.c.b16 %v3168, %v3167
      %v3184 = vpack.c.b16 %v3170, %v3169
      %v3185 = vpack.c.b16 %v3172, %v3171
      %v3186 = vpack.c.b16 %v3174, %v3173
      %v3187 = vpack.c.b16 %v3176, %v3175
      %v3188 = vpack.c.b16 %v3178, %v3177
      %vm3199 = vcmask 261120
      %v3201 = vsel %vm3199, %v3116, 0
      %v3204 = vsel %vm3199, %v3118, 0
      %3206 = vmatpush.bf16.msra.mxu0 %v3186
      %3207 = vmatpush.bf16.msra.mxu0 %v3185
      %3208 = vmatpush.bf16.msra.mxu0 %v3184
      %3209 = vmatpush.bf16.msra.mxu0 %v3183
      %3210 = vmatpush.bf16.msra.mxu0 %v3182
      %3211 = vmatpush.bf16.msra.mxu0 %v3181
      %3212 = vmatpush.bf16.msra.mxu0 %v3180
      %3213 = vmatpush.bf16.msra.mxu0 %v3179
      %3214 = vmatmul.bf16.gmra.mxu0 %v3115
      %v3215 = vpop.f32.mrf.mxu0
      %v3216 = vadd.f32 0.0, %v3215
      %v3217 = vpop.f32.mrf.mxu0
      %v3218 = vadd.f32 0.0, %v3217
      %3219 = vmatmul.bf16.gmra.mxu0 %v3117
      %v3220 = vpop.f32.mrf.mxu0
      %v3221 = vadd.f32 0.0, %v3220
      %v3222 = vpop.f32.mrf.mxu0
      %3223 = vdwg.mxu0
      %3224 = vmatpush.bf16.msra.mxu0 0
      %3225 = vmatpush.bf16.msra.mxu0 0
      %3226 = vmatpush.bf16.msra.mxu0 0
      %3227 = vmatpush.bf16.msra.mxu0 0
      %3228 = vmatpush.bf16.msra.mxu0 0
      %3229 = vmatpush.bf16.msra.mxu0 0
      %3230 = vmatpush.bf16.msra.mxu0 %v3188
      %3231 = vmatpush.bf16.msra.mxu0 %v3187
      %3232 = vmatmul.bf16.gmra.mxu0 %v3201
      %v3233 = vpop.f32.mrf.mxu0
      %v3234 = vadd.f32 %v3216, %v3233
      %v3235 = vpop.f32.mrf.mxu0
      %v3236 = vadd.f32 %v3218, %v3235
      %3237 = vmatmul.bf16.gmra.mxu0 %v3204
      %v3238 = vpop.f32.mrf.mxu0
      %v3239 = vadd.f32 %v3221, %v3238
      %v3240 = vpop.f32.mrf.mxu0
      %3241 = vdwg.mxu0
      %v3242 = vpack.c.bf16 %v3234, %v3234
      %v3243 = vpack.c.bf16 %v3236, %v3236
      %v3244 = vpack.c.bf16 %v3239, %v3239
      %v3245 = vld [vmem:[%s10] sm:$0x1]
      %v3246 = vld [vmem:[%s9] sm:$0xf]
      %v3247 = vld [vmem:[%s9 + $0x4] sm:$0xf]
      %v3248 = vld [vmem:[%s9 + $0x8] sm:$0xf]
      %v3249 = vld [vmem:[%s9 + $0xc] sm:$0xf]
      %v3250 = vld [vmem:[%s9 + $0x10] sm:$0xf]
      %v3251 = vld [vmem:[%s9 + $0x14] sm:$0xf]
      %v3252 = vld [vmem:[%s9 + $0x18] sm:$0xf]
      %v3253 = vld [vmem:[%s9 + $0x1c] sm:$0xf]
      %v3254 = vld [vmem:[%s9 + $0x20] sm:$0xf]
      %v3255 = vld [vmem:[%s9 + $0x24] sm:$0xf]
      %v3258 = vunpack.c.l.b16 %v3242
      %v3259 = vunpack.c.l.b16 %v3243
      %v3260 = vpack.c.b16 %v3259, %v3258
      %v3271 = vunpack.c.l.b16 %v3246
      %v3272 = vunpack.c.l.b16 %v3247
      %v3273 = vunpack.c.l.b16 %v3248
      %v3274 = vunpack.c.l.b16 %v3249
      %v3275 = vunpack.c.l.b16 %v3250
      %v3276 = vunpack.c.l.b16 %v3251
      %v3277 = vunpack.c.l.b16 %v3252
      %v3278 = vunpack.c.l.b16 %v3253
      %v3279 = vunpack.c.l.b16 %v3254
      %v3280 = vunpack.c.l.b16 %v3255
      %v3281 = vpack.c.b16 %v3272, %v3271
      %v3282 = vpack.c.b16 %v3274, %v3273
      %v3283 = vpack.c.b16 %v3276, %v3275
      %v3284 = vpack.c.b16 %v3278, %v3277
      %v3285 = vpack.c.b16 %v3280, %v3279
      %vm3291 = vcmask 654336
      %v3293 = vsel %vm3291, %v3260, 0
      %3295 = vmatpush.bf16.msra.mxu0 0
      %3296 = vmatpush.bf16.msra.mxu0 0
      %3297 = vmatpush.bf16.msra.mxu0 0
      %3298 = vmatpush.bf16.msra.mxu0 %v3285
      %3299 = vmatpush.bf16.msra.mxu0 %v3284
      %3300 = vmatpush.bf16.msra.mxu0 %v3283
      %3301 = vmatpush.bf16.msra.mxu0 %v3282
      %3302 = vmatpush.bf16.msra.mxu0 %v3281
      %3303 = vmatmul.bf16.gmra.mxu0 %v3293
      %v3304 = vpop.f32.mrf.mxu0
      %v3305 = vadd.f32 0.0, %v3304
      %v3306 = vpop.f32.mrf.mxu0
      %v3307 = vadd.f32 0.0, %v3306
      %3308 = vdwg.mxu0
      %v3310 = vperm.slane %v3245, 0
      %v3312 = vadd.f32 %v3310, %v3305
      %v3313 = vadd.f32 %v3310, %v3307
      %s3314 = scalar_lea.vmem %s9, 40
      %v3315 = vld [vmem:[%s3314] sm:$0xf]
      %v3316 = vld [vmem:[%s3314 + $0x4] sm:$0xf]
      %v3317 = vld [vmem:[%s3314 + $0x8] sm:$0xf]
      %v3318 = vld [vmem:[%s3314 + $0xc] sm:$0xf]
      %v3319 = vld [vmem:[%s3314 + $0x10] sm:$0xf]
      %v3320 = vld [vmem:[%s3314 + $0x14] sm:$0xf]
      %v3321 = vld [vmem:[%s3314 + $0x18] sm:$0xf]
      %v3322 = vld [vmem:[%s3314 + $0x1c] sm:$0xf]
      %v3323 = vld [vmem:[%s3314 + $0x20] sm:$0xf]
      %v3324 = vld [vmem:[%s3314 + $0x24] sm:$0xf]
      %v3326 = vunpack.c.l.b16 %v3244
      %v3327 = vpack.c.b16 %v3326, %v3326
      %v3328 = vshrl.u32 %v3260, 16
      %v3330 = vshll.u32 %v3260, 16
      %v3332 = vrot.slane %v3330, 1
      %v3333 = vor.u32 %v3328, %v3332
      %v3335 = vshll.u32 %v3327, 16
      %v3337 = vrot.slane %v3335, 1
      %v3338 = vsel %vm841, %v3333, %v3337
      %v3349 = vunpack.c.l.b16 %v3315
      %v3350 = vunpack.c.l.b16 %v3316
      %v3351 = vunpack.c.l.b16 %v3317
      %v3352 = vunpack.c.l.b16 %v3318
      %v3353 = vunpack.c.l.b16 %v3319
      %v3354 = vunpack.c.l.b16 %v3320
      %v3355 = vunpack.c.l.b16 %v3321
      %v3356 = vunpack.c.l.b16 %v3322
      %v3357 = vunpack.c.l.b16 %v3323
      %v3358 = vunpack.c.l.b16 %v3324
      %v3359 = vpack.c.b16 %v3350, %v3349
      %v3360 = vpack.c.b16 %v3352, %v3351
      %v3361 = vpack.c.b16 %v3354, %v3353
      %v3362 = vpack.c.b16 %v3356, %v3355
      %v3363 = vpack.c.b16 %v3358, %v3357
      %v3370 = vsel %vm3291, %v3338, 0
      %3372 = vmatpush.bf16.msra.mxu0 0
      %3373 = vmatpush.bf16.msra.mxu0 0
      %3374 = vmatpush.bf16.msra.mxu0 0
      %3375 = vmatpush.bf16.msra.mxu0 %v3363
      %3376 = vmatpush.bf16.msra.mxu0 %v3362
      %3377 = vmatpush.bf16.msra.mxu0 %v3361
      %3378 = vmatpush.bf16.msra.mxu0 %v3360
      %3379 = vmatpush.bf16.msra.mxu0 %v3359
      %3380 = vmatmul.bf16.gmra.mxu0 %v3370
      %v3381 = vpop.f32.mrf.mxu0
      %v3382 = vadd.f32 0.0, %v3381
      %v3383 = vpop.f32.mrf.mxu0
      %v3384 = vadd.f32 0.0, %v3383
      %3385 = vdwg.mxu0
      %v3386 = vadd.f32 %v3312, %v3382
      %v3387 = vadd.f32 %v3313, %v3384
      %s3388 = scalar_lea.vmem %s9, 80
      %v3389 = vld [vmem:[%s3388] sm:$0xf]
      %v3390 = vld [vmem:[%s3388 + $0x4] sm:$0xf]
      %v3391 = vld [vmem:[%s3388 + $0x8] sm:$0xf]
      %v3392 = vld [vmem:[%s3388 + $0xc] sm:$0xf]
      %v3393 = vld [vmem:[%s3388 + $0x10] sm:$0xf]
      %v3394 = vld [vmem:[%s3388 + $0x14] sm:$0xf]
      %v3395 = vld [vmem:[%s3388 + $0x18] sm:$0xf]
      %v3396 = vld [vmem:[%s3388 + $0x1c] sm:$0xf]
      %v3397 = vld [vmem:[%s3388 + $0x20] sm:$0xf]
      %v3398 = vld [vmem:[%s3388 + $0x24] sm:$0xf]
      %v3399 = vrot.slane %v3260, 1
      %v3400 = vrot.slane %v3327, 1
      %v3401 = vsel %vm1124, %v3399, %v3400
      %v3412 = vunpack.c.l.b16 %v3389
      %v3413 = vunpack.c.l.b16 %v3390
      %v3414 = vunpack.c.l.b16 %v3391
      %v3415 = vunpack.c.l.b16 %v3392
      %v3416 = vunpack.c.l.b16 %v3393
      %v3417 = vunpack.c.l.b16 %v3394
      %v3418 = vunpack.c.l.b16 %v3395
      %v3419 = vunpack.c.l.b16 %v3396
      %v3420 = vunpack.c.l.b16 %v3397
      %v3421 = vunpack.c.l.b16 %v3398
      %v3422 = vpack.c.b16 %v3413, %v3412
      %v3423 = vpack.c.b16 %v3415, %v3414
      %v3424 = vpack.c.b16 %v3417, %v3416
      %v3425 = vpack.c.b16 %v3419, %v3418
      %v3426 = vpack.c.b16 %v3421, %v3420
      %v3433 = vsel %vm3291, %v3401, 0
      %3435 = vmatpush.bf16.msra.mxu0 0
      %3436 = vmatpush.bf16.msra.mxu0 0
      %3437 = vmatpush.bf16.msra.mxu0 0
      %3438 = vmatpush.bf16.msra.mxu0 %v3426
      %3439 = vmatpush.bf16.msra.mxu0 %v3425
      %3440 = vmatpush.bf16.msra.mxu0 %v3424
      %3441 = vmatpush.bf16.msra.mxu0 %v3423
      %3442 = vmatpush.bf16.msra.mxu0 %v3422
      %3443 = vmatmul.bf16.gmra.mxu0 %v3433
      %v3444 = vpop.f32.mrf.mxu0
      %v3445 = vadd.f32 0.0, %v3444
      %v3446 = vpop.f32.mrf.mxu0
      %v3447 = vadd.f32 0.0, %v3446
      %3448 = vdwg.mxu0
      %v3449 = vadd.f32 %v3386, %v3445
      %v3450 = vadd.f32 %v3387, %v3447
      %s3451 = scalar_lea.vmem %s9, 120
      %v3452 = vld [vmem:[%s3451] sm:$0xf]
      %v3453 = vld [vmem:[%s3451 + $0x4] sm:$0xf]
      %v3454 = vld [vmem:[%s3451 + $0x8] sm:$0xf]
      %v3455 = vld [vmem:[%s3451 + $0xc] sm:$0xf]
      %v3456 = vld [vmem:[%s3451 + $0x10] sm:$0xf]
      %v3457 = vld [vmem:[%s3451 + $0x14] sm:$0xf]
      %v3458 = vld [vmem:[%s3451 + $0x18] sm:$0xf]
      %v3459 = vld [vmem:[%s3451 + $0x1c] sm:$0xf]
      %v3460 = vld [vmem:[%s3451 + $0x20] sm:$0xf]
      %v3461 = vld [vmem:[%s3451 + $0x24] sm:$0xf]
      %v3462 = vrot.slane %v3328, 1
      %v3463 = vrot.slane %v3330, 2
      %v3464 = vor.u32 %v3462, %v3463
      %v3465 = vshrl.u32 %v3327, 16
      %v3467 = vrot.slane %v3465, 1
      %v3468 = vrot.slane %v3335, 2
      %v3469 = vor.u32 %v3467, %v3468
      %v3470 = vsel %vm1367, %v3464, %v3469
      %v3481 = vunpack.c.l.b16 %v3452
      %v3482 = vunpack.c.l.b16 %v3453
      %v3483 = vunpack.c.l.b16 %v3454
      %v3484 = vunpack.c.l.b16 %v3455
      %v3485 = vunpack.c.l.b16 %v3456
      %v3486 = vunpack.c.l.b16 %v3457
      %v3487 = vunpack.c.l.b16 %v3458
      %v3488 = vunpack.c.l.b16 %v3459
      %v3489 = vunpack.c.l.b16 %v3460
      %v3490 = vunpack.c.l.b16 %v3461
      %v3491 = vpack.c.b16 %v3482, %v3481
      %v3492 = vpack.c.b16 %v3484, %v3483
      %v3493 = vpack.c.b16 %v3486, %v3485
      %v3494 = vpack.c.b16 %v3488, %v3487
      %v3495 = vpack.c.b16 %v3490, %v3489
      %v3502 = vsel %vm3291, %v3470, 0
      %3504 = vmatpush.bf16.msra.mxu0 0
      %3505 = vmatpush.bf16.msra.mxu0 0
      %3506 = vmatpush.bf16.msra.mxu0 0
      %3507 = vmatpush.bf16.msra.mxu0 %v3495
      %3508 = vmatpush.bf16.msra.mxu0 %v3494
      %3509 = vmatpush.bf16.msra.mxu0 %v3493
      %3510 = vmatpush.bf16.msra.mxu0 %v3492
      %3511 = vmatpush.bf16.msra.mxu0 %v3491
      %3512 = vmatmul.bf16.gmra.mxu0 %v3502
      %v3513 = vpop.f32.mrf.mxu0
      %v3514 = vadd.f32 0.0, %v3513
      %v3515 = vpop.f32.mrf.mxu0
      %v3516 = vadd.f32 0.0, %v3515
      %3517 = vdwg.mxu0
      %v3518 = vadd.f32 %v3449, %v3514
      %v3519 = vadd.f32 %v3450, %v3516
      %s3520 = scalar_lea.vmem %s9, 160
      %v3521 = vld [vmem:[%s3520] sm:$0xf]
      %v3522 = vld [vmem:[%s3520 + $0x4] sm:$0xf]
      %v3523 = vld [vmem:[%s3520 + $0x8] sm:$0xf]
      %v3524 = vld [vmem:[%s3520 + $0xc] sm:$0xf]
      %v3525 = vld [vmem:[%s3520 + $0x10] sm:$0xf]
      %v3526 = vld [vmem:[%s3520 + $0x14] sm:$0xf]
      %v3527 = vld [vmem:[%s3520 + $0x18] sm:$0xf]
      %v3528 = vld [vmem:[%s3520 + $0x1c] sm:$0xf]
      %v3529 = vld [vmem:[%s3520 + $0x20] sm:$0xf]
      %v3530 = vld [vmem:[%s3520 + $0x24] sm:$0xf]
      %v3531 = vrot.slane %v3260, 2
      %v3532 = vrot.slane %v3327, 2
      %v3533 = vsel %vm1626, %v3531, %v3532
      %v3544 = vunpack.c.l.b16 %v3521
      %v3545 = vunpack.c.l.b16 %v3522
      %v3546 = vunpack.c.l.b16 %v3523
      %v3547 = vunpack.c.l.b16 %v3524
      %v3548 = vunpack.c.l.b16 %v3525
      %v3549 = vunpack.c.l.b16 %v3526
      %v3550 = vunpack.c.l.b16 %v3527
      %v3551 = vunpack.c.l.b16 %v3528
      %v3552 = vunpack.c.l.b16 %v3529
      %v3553 = vunpack.c.l.b16 %v3530
      %v3554 = vpack.c.b16 %v3545, %v3544
      %v3555 = vpack.c.b16 %v3547, %v3546
      %v3556 = vpack.c.b16 %v3549, %v3548
      %v3557 = vpack.c.b16 %v3551, %v3550
      %v3558 = vpack.c.b16 %v3553, %v3552
      %v3565 = vsel %vm3291, %v3533, 0
      %3567 = vmatpush.bf16.msra.mxu0 0
      %3568 = vmatpush.bf16.msra.mxu0 0
      %3569 = vmatpush.bf16.msra.mxu0 0
      %3570 = vmatpush.bf16.msra.mxu0 %v3558
      %3571 = vmatpush.bf16.msra.mxu0 %v3557
      %3572 = vmatpush.bf16.msra.mxu0 %v3556
      %3573 = vmatpush.bf16.msra.mxu0 %v3555
      %3574 = vmatpush.bf16.msra.mxu0 %v3554
      %3575 = vmatmul.bf16.gmra.mxu0 %v3565
      %v3576 = vpop.f32.mrf.mxu0
      %v3577 = vadd.f32 0.0, %v3576
      %v3578 = vpop.f32.mrf.mxu0
      %v3579 = vadd.f32 0.0, %v3578
      %3580 = vdwg.mxu0
      %v3581 = vadd.f32 %v3518, %v3577
      %v3582 = vadd.f32 %v3519, %v3579
      %v3583 = vtanh.pop %v3581
      %v3584 = vtanh.pop %v3582
      %v3585 = vld [vmem:[%s11] sm:$0x3]
      %v3586 = vpack.c.bf16 %v3584, %v3583
      %vm3587 = vcmask 130048
      %v3589 = vsel %vm3587, %v3585, 0
      %3591 = vmatpush.bf16.msra.mxu0 0
      %3592 = vmatpush.bf16.msra.mxu0 0
      %3593 = vmatpush.bf16.msra.mxu0 0
      %3594 = vmatpush.bf16.msra.mxu0 0
      %3595 = vmatpush.bf16.msra.mxu0 0
      %3596 = vmatpush.bf16.msra.mxu0 0
      %3597 = vmatpush.bf16.msra.mxu0 0
      %3598 = vmatpush.bf16.msra.mxu0 %v3586
      %3599 = vmatmul.bf16.gmra.mxu0 %v3589
      %v3600 = vpop.f32.mrf.mxu0
      %v3601 = vadd.f32 0.0, %v3600
      %v3602 = vpop.f32.mrf.mxu0
      %3603 = vdwg.mxu0
      %v3604 = vpack.c.bf16 %v3601, %v3601
      %v3605 = vld [vmem:[%s12] sm:$0xf]
      %v3606 = vld [vmem:[%s12 + $0x4] sm:$0xf]
      %v3607 = vld [vmem:[%s12 + $0x8] sm:$0xf]
      %v3608 = vld [vmem:[%s12 + $0xc] sm:$0xf]
      %v3609 = vld [vmem:[%s12 + $0x10] sm:$0xf]
      %v3610 = vld [vmem:[%s12 + $0x14] sm:$0xf]
      %v3611 = vld [vmem:[%s12 + $0x18] sm:$0xf]
      %v3612 = vld [vmem:[%s12 + $0x1c] sm:$0xf]
      %v3613 = vld [vmem:[%s12 + $0x20] sm:$0xf]
      %v3614 = vld [vmem:[%s12 + $0x24] sm:$0xf]
      %v3615 = vld [vmem:[%s12 + $0x28] sm:$0xf]
      %v3616 = vld [vmem:[%s12 + $0x2c] sm:$0xf]
      %v3617 = vld [vmem:[%s12 + $0x30] sm:$0xf]
      %v3618 = vld [vmem:[%s12 + $0x34] sm:$0xf]
      %v3619 = vld [vmem:[%s12 + $0x38] sm:$0xf]
      %v3620 = vld [vmem:[%s13] sm:$0x1]
      %v3622 = vperm.slane %v3620, 0
      %v3639 = vunpack.c.l.b16 %v3605
      %v3640 = vunpack.c.l.b16 %v3606
      %v3641 = vunpack.c.l.b16 %v3607
      %v3642 = vunpack.c.l.b16 %v3608
      %v3643 = vunpack.c.l.b16 %v3609
      %v3644 = vunpack.c.l.b16 %v3610
      %v3645 = vunpack.c.l.b16 %v3611
      %v3646 = vunpack.c.l.b16 %v3612
      %v3647 = vunpack.c.l.b16 %v3613
      %v3648 = vunpack.c.l.b16 %v3614
      %v3649 = vunpack.c.l.b16 %v3615
      %v3650 = vunpack.c.l.b16 %v3616
      %v3651 = vunpack.c.l.b16 %v3617
      %v3652 = vunpack.c.l.b16 %v3618
      %v3653 = vunpack.c.l.b16 %v3619
      %v3654 = vpack.c.b16 %v3640, %v3639
      %v3655 = vpack.c.b16 %v3642, %v3641
      %v3656 = vpack.c.b16 %v3644, %v3643
      %v3657 = vpack.c.b16 %v3646, %v3645
      %v3658 = vpack.c.b16 %v3648, %v3647
      %v3659 = vpack.c.b16 %v3650, %v3649
      %v3660 = vpack.c.b16 %v3652, %v3651
      %v3661 = vpack.c.b16 %v3653, %v3653
      %vm3669 = vcmask 982016
      %v3671 = vsel %vm3669, %v3604, 0
      %v3674 = vsel %vm2110, %v3661, 0
      %3676 = vmatpush.bf16.msra.mxu0 %v3674
      %3677 = vmatpush.bf16.msra.mxu0 %v3660
      %3678 = vmatpush.bf16.msra.mxu0 %v3659
      %3679 = vmatpush.bf16.msra.mxu0 %v3658
      %3680 = vmatpush.bf16.msra.mxu0 %v3657
      %3681 = vmatpush.bf16.msra.mxu0 %v3656
      %3682 = vmatpush.bf16.msra.mxu0 %v3655
      %3683 = vmatpush.bf16.msra.mxu0 %v3654
      %3684 = vmatmul.bf16.gmra.mxu0 %v3671
      %v3685 = vpop.f32.mrf.mxu0
      %v3686 = vadd.f32 %v3622, %v3685
      %v3687 = vpop.f32.mrf.mxu0
      %3688 = vdwg.mxu0
      %v3689 = vtanh.pop %v3686
      %v3690 = vpack.c.bf16 %v3689, %v3689
      %v3691 = vld [vmem:[%s14] sm:$0xf]
      %v3692 = vld [vmem:[%s14 + $0x4] sm:$0xf]
      %v3693 = vld [vmem:[%s14 + $0x8] sm:$0xf]
      %v3694 = vld [vmem:[%s14 + $0xc] sm:$0xf]
      %v3695 = vld [vmem:[%s14 + $0x10] sm:$0xf]
      %v3696 = vld [vmem:[%s14 + $0x14] sm:$0xf]
      %v3697 = vld [vmem:[%s14 + $0x18] sm:$0xf]
      %v3698 = vld [vmem:[%s14 + $0x1c] sm:$0xf]
      %v3699 = vld [vmem:[%s15] sm:$0x1]
      %v3701 = vperm.slane %v3699, 0
      %v3711 = vunpack.c.l.b16 %v3691
      %v3712 = vunpack.c.l.b16 %v3692
      %v3713 = vunpack.c.l.b16 %v3693
      %v3714 = vunpack.c.l.b16 %v3694
      %v3715 = vunpack.c.l.b16 %v3695
      %v3716 = vunpack.c.l.b16 %v3696
      %v3717 = vunpack.c.l.b16 %v3697
      %v3718 = vunpack.c.l.b16 %v3698
      %v3719 = vpack.c.b16 %v3712, %v3711
      %v3720 = vpack.c.b16 %v3714, %v3713
      %v3721 = vpack.c.b16 %v3716, %v3715
      %v3722 = vpack.c.b16 %v3718, %v3717
      %vm3727 = vcmask 523264
      %v3729 = vsel %vm3727, %v3690, 0
      %3731 = vmatpush.bf16.msra.mxu0 0
      %3732 = vmatpush.bf16.msra.mxu0 0
      %3733 = vmatpush.bf16.msra.mxu0 0
      %3734 = vmatpush.bf16.msra.mxu0 0
      %3735 = vmatpush.bf16.msra.mxu0 %v3722
      %3736 = vmatpush.bf16.msra.mxu0 %v3721
      %3737 = vmatpush.bf16.msra.mxu0 %v3720
      %3738 = vmatpush.bf16.msra.mxu0 %v3719
      %3739 = vmatmul.bf16.gmra.mxu0 %v3729
      %v3740 = vpop.f32.mrf.mxu0
      %v3741 = vadd.f32 %v3701, %v3740
      %v3742 = vpop.f32.mrf.mxu0
      %3743 = vdwg.mxu0
      %v3744 = vtanh.pop %v3741
      %vm3745 = vcmask 11264
      %3746 = vst.msk [vmem:[%s521] sm:$0xf] %vm3745, %v3744
      %p3747 = scmp.lt.s32.totalorder %s27, 1
      %s3748 = scalar_select %p3747, %s27, 1
      %s3749 = smul.addr %s3748, 4
      %s3750 = scalar_lea.vmem %s16, %s3749
      // Predicated region
      $region85: #{god_model_forward.1} parent=83 // pred_check
        %p3751 = pneg %p386
      $region86: #{god_model_forward.1} parent=83 // pred_check_branch
        %3753 = sbr.rel (%p3751) target = $region88
      $region87: #{god_model_forward.1} parent=83 // pred_region
        _
      $region88: #{god_model_forward.1} parent=83 // pred_fallthru
        _
    $region84: #{god_model_forward.1} parent=5 // pred_fallthru
      _
    %p3754 = scmp.le.s32.totalorder 2, %s22
    // Predicated region
    $region89: #{god_model_forward.1} parent=5 // pred_check
      %p3755 = pneg %p3754
    $region90: #{god_model_forward.1} parent=5 // pred_check_branch
      %3757 = sbr.rel (%p3755) target = $region92
    $region91: #{god_model_forward.1} parent=5 // pred_region
      %s3758 = ssub.s32 %s22, 2
      // Predicated region
      $region93: #{god_model_forward.1} parent=91 // pred_check
        %p3759 = pneg %p392
      $region94: #{god_model_forward.1} parent=91 // pred_check_branch
        %3761 = sbr.rel (%p3759) target = $region96
      $region95: #{god_model_forward.1} parent=91 // pred_region
        %p3762 = scmp.lt.s32.totalorder %s28, 1
        %s3763 = scalar_select %p3762, %s28, 1
        %s3764 = smul.addr %s3763, 4
        %s3765 = scalar_lea.vmem %s16, %s3764
      $region96: #{god_model_forward.1} parent=91 // pred_fallthru
        _
    $region92: #{god_model_forward.1} parent=5 // pred_fallthru
      _
  $region6: #{god_model_forward.1} parent=0 // loop_footer
    %s26 = sadd.s32 1, %s22
  $region7: #{god_model_forward.1} parent=0 // loop_footer_branch
    %21 = sbr.rel target = $region3
  $region8: #{god_model_forward.1} parent=0 // loop_exit
    _

</llo_original>
